<compile_context>
chip_gen: v5e
topology: v5e:2x2
jax: 0.10.0
libtpu: 0.0.40
codegen_flags: <defaults>
</compile_context>

<pallas_src>
import math

import jax
import jax.numpy as jnp
from jax import lax
from jax.experimental import pallas as pl
from jax.experimental.pallas import tpu as pltpu


# --------------------------------- kernel body --------------------------------- #
def _cnn_encoder_impl(x_ref, conv_refs, wl_ref, bl_ref, out_ref, pad_refs, fin_ref):
    n_layers = len(pad_refs)
    Bt = x_ref.shape[0]
    L = x_ref.shape[1]

    h = x_ref[...]                                           # (Bt, L, 1) f32, channel-last

    for i in range(n_layers):
        w_ref, b_ref, sc_ref, sh_ref = conv_refs[4 * i: 4 * i + 4]
        K, Cin, Cout = w_ref.shape
        p = K // 2
        pad_ref = pad_refs[i]                                # (Bt, L + 2p, Cin)

        # "same" padding: refresh only the halo rows (cheap); the interior is fully
        # overwritten below. (Zeroing only on step 0 would be wrong with megacore
        # "parallel" sharding, since each core starts at its own grid step.)
        zeros_halo = jnp.zeros((Bt, p, Cin), jnp.float32)
        pad_ref[:, :p, :] = zeros_halo
        pad_ref[:, p + L:, :] = zeros_halo
        pad_ref[:, p:p + L, :] = h

        # Conv1d as K tap matmuls: (Bt*L, Cin) @ (Cin, Cout), bf16 MXU inputs, f32 acc.
        acc = jnp.zeros((Bt * L, Cout), jnp.float32)
        for k in range(K):
            xs = pad_ref[:, k:k + L, :].reshape(Bt * L, Cin)
            if Cin == 1:
                acc = acc + xs * w_ref[k]                    # layer 0: VPU broadcast (Cin=1)
            else:
                acc = acc + jnp.dot(xs.astype(jnp.bfloat16), w_ref[k],
                                    preferred_element_type=jnp.float32)

        y = jnp.maximum(acc + b_ref[...], 0.0)               # conv bias + ReLU
        y = y * sc_ref[...] + sh_ref[...]                    # BatchNorm1d (eval), pre-folded
        y3 = y.reshape(Bt, L, Cout)                          # leading-dim split (layout no-op)

        # MaxPool1d(kernel=2, stride=2) entirely in registers: two one-hot selection
        # matmuls on the MXU pick the even / odd positions (no scratch store + stride-2
        # reload). Dropout is identity at inference.
        Lh = L // 2
        r_id = lax.broadcasted_iota(jnp.int32, (Bt, Lh, L), 1)
        l_id = lax.broadcasted_iota(jnp.int32, (Bt, Lh, L), 2)
        sel_even = jnp.where(l_id == 2 * r_id, 1.0, 0.0)
        sel_odd = jnp.where(l_id == 2 * r_id + 1, 1.0, 0.0)
        dnums = (((2,), (1,)), ((0,), (0,)))                 # batched (b, r, l) @ (b, l, c)
        even = lax.dot_general(sel_even, y3, dnums, preferred_element_type=jnp.float32)
        odd = lax.dot_general(sel_odd, y3, dnums, preferred_element_type=jnp.float32)
        h = jnp.maximum(even, odd)                           # (Bt, L//2, Cout)
        L = Lh

    # Flatten (PyTorch flattens the (B, C, L) layout; wl is pre-permuted to (L, C, O_pad))
    # followed by the Linear layer. O is padded to 128 lanes so the final store is a full,
    # unmasked vst; the wrapper slices the padding off.
    fin_ref[...] = h                                         # (Bt, L_fin, C_fin)
    L_fin = fin_ref.shape[1]
    out = jnp.zeros((Bt, out_ref.shape[1]), jnp.float32) + bl_ref[...]
    for l in range(L_fin):
        xl = fin_ref[:, l, :].astype(jnp.bfloat16)           # (Bt, C_fin), contiguous read
        out = out + jnp.dot(xl, wl_ref[l], preferred_element_type=jnp.float32)
    out_ref[...] = out.astype(out_ref.dtype)


# ----------------------------------- wrapper ----------------------------------- #
def cnn_encoder_forward(x, params, num_channels=(64, 64, 128, 256), kernel_size=5,
                        batch_tile=None):
    """x: (B, ts_dim) float array. Returns (B, output_dim). Inference semantics."""
    x = jnp.asarray(x, jnp.float32)
    B, ts_dim = x.shape
    n_layers = len(num_channels)
    # Keep every intermediate length a multiple of 8 (f32 sublane) and even for the pools.
    assert ts_dim % (8 * 2 ** (n_layers - 1)) == 0, \
        "ts_dim must stay 8-aligned through the MaxPool1d(2) stack"
    # TODO(synk): odd intermediate lengths (PyTorch floor-mode pooling) are not handled.
    eps = 1e-5
    K = kernel_size
    pad_halo = K // 2

    # Fold eval-mode BatchNorm into per-channel scale/shift; cast matmul weights to bf16.
    weight_args = []
    flops = 0
    in_ch, L = 1, ts_dim
    for i, out_ch in enumerate(num_channels):
        scale = params[f"bn_g{i}"] / jnp.sqrt(params[f"bn_v{i}"] + eps)
        shift = params[f"bn_b{i}"] - params[f"bn_m{i}"] * scale
        weight_args += [
            params[f"conv_w{i}"].astype(jnp.bfloat16),                   # (K, Cin, Cout)
            params[f"conv_b{i}"].reshape(1, out_ch).astype(jnp.float32),
            scale.reshape(1, out_ch).astype(jnp.float32),
            shift.reshape(1, out_ch).astype(jnp.float32),
        ]
        flops += 2 * B * L * K * in_ch * out_ch                          # conv taps
        flops += 2 * B * L * (L // 2) * out_ch * 2                       # pooling selections
        in_ch, L = out_ch, L // 2
    C_fin, L_fin = in_ch, L

    O = params["lin_w"].shape[1]
    O_pad = ((O + 127) // 128) * 128                                     # lane-dense output
    # PyTorch Flatten runs over (C, L); permute the linear weight to the kernel's (L, C) order.
    wl = params["lin_w"].reshape(C_fin, L_fin, O).transpose(1, 0, 2)
    wl = jnp.pad(wl, ((0, 0), (0, 0), (0, O_pad - O))).astype(jnp.bfloat16)
    bl = jnp.pad(params["lin_b"].reshape(1, O), ((0, 0), (0, O_pad - O))).astype(jnp.float32)
    weight_args += [wl, bl]
    flops += 2 * B * C_fin * L_fin * O_pad

    def vmem_bytes(bt):
        """Rough per-grid-step VMEM footprint (blocks + scratch + live temporaries)."""
        est = 2 * bt * ts_dim * 128 * 4            # x block (trailing dim of 1 pads to 128 lanes)
        est += 2 * bt * O_pad * 4                  # out block
        est += 2 * sum(int(a.size) * a.dtype.itemsize for a in weight_args)
        cin, l = 1, ts_dim
        peak_tmp = 0
        for cout in num_channels:
            lanes_in = 128 if cin == 1 else cin
            est += bt * (l + 2 * pad_halo) * lanes_in * 4                # halo scratch
            tmp = 4 * bt * l * cout * 4            # acc / post-BN / even / odd values
            tmp += 2 * bt * l * (l // 2) * 4       # pooling selection matrices
            tmp += bt * l * max(cin, 8) * 4        # tap slice
            peak_tmp = max(peak_tmp, tmp)
            cin, l = cout, l // 2
        est += bt * L_fin * C_fin * 4              # flatten scratch
        return est + peak_tmp

    if batch_tile is None:
        # Largest 8-aligned divisor of B (or B itself) that fits the VMEM budget; prefer at
        # least 2 grid steps so the "parallel" grid axis can shard across v7x's 2 TensorCores.
        valid = sorted({d for d in range(1, B + 1)
                        if B % d == 0 and (d % 8 == 0 or d == B)}, reverse=True)
        budget = 40 * 1024 * 1024
        batch_tile = valid[-1]
        for d in valid:
            if d <= 128 and vmem_bytes(d) <= budget:
                batch_tile = d
                break
        if B // batch_tile < 2:
            for d in valid:
                if d % 8 == 0 and B // d >= 2 and vmem_bytes(d) <= budget:
                    batch_tile = d
                    break
    assert B % batch_tile == 0, "batch must be divisible by the batch tile"
    bt = batch_tile
    grid = (B // bt,)

    x3 = x.reshape(B, ts_dim, 1)                   # channel-last (free in XLA)

    def full_spec(a):
        return pl.BlockSpec(a.shape, lambda i, _nd=a.ndim: (0,) * _nd)

    in_specs = [pl.BlockSpec((bt, ts_dim, 1), lambda i: (i, 0, 0))]
    in_specs += [full_spec(a) for a in weight_args]
    out_specs = pl.BlockSpec((bt, O_pad), lambda i: (i, 0))

    # Scratch: one small zero-halo buffer per layer + one tiny flatten buffer.
    pad_shapes = []
    in_ch, L = 1, ts_dim
    for out_ch in num_channels:
        pad_shapes.append(pltpu.VMEM((bt, L + 2 * pad_halo, in_ch), jnp.float32))
        in_ch, L = out_ch, L // 2
    fin_shape = pltpu.VMEM((bt, L_fin, C_fin), jnp.float32)
    scratch_shapes = pad_shapes + [fin_shape]

    def kernel(x_ref, *refs):
        conv_refs = refs[:4 * n_layers]
        wl_ref = refs[4 * n_layers]
        bl_ref = refs[4 * n_layers + 1]
        out_ref = refs[4 * n_layers + 2]
        pad_refs = refs[4 * n_layers + 3: 4 * n_layers + 3 + n_layers]
        fin_ref = refs[4 * n_layers + 3 + n_layers]
        _cnn_encoder_impl(x_ref, conv_refs, wl_ref, bl_ref, out_ref, pad_refs, fin_ref)

    bytes_accessed = (4 * int(x3.size)
                      + sum(int(a.size) * a.dtype.itemsize for a in weight_args)
                      + 4 * B * O_pad)
    vmem_limit = int(min(56 * 2 ** 20, max(32 * 2 ** 20, vmem_bytes(bt) + 8 * 2 ** 20)))

    out = pl.pallas_call(
        kernel,
        out_shape=jax.ShapeDtypeStruct((B, O_pad), jnp.float32),
        grid=grid,
        in_specs=in_specs,
        out_specs=out_specs,
        scratch_shapes=scratch_shapes,
        compiler_params=pltpu.CompilerParams(
            dimension_semantics=("parallel",),
            vmem_limit_bytes=vmem_limit,
        ),
        cost_estimate=pl.CostEstimate(flops=flops, transcendentals=0,
                                      bytes_accessed=bytes_accessed),
    )(x3, *weight_args)
    return out[:, :O]


# -------------------------- deterministic parameter init ------------------------ #
def init_params(key, ts_dim, output_dim, num_channels=(64, 64, 128, 256), kernel_size=5):
    n_layers = len(num_channels)
    keys = jax.random.split(key, 6 * n_layers + 2)
    p = {}
    in_ch, L = 1, ts_dim
    ki = 0
    for i, out_ch in enumerate(num_channels):
        bound = 1.0 / math.sqrt(in_ch * kernel_size)
        p[f"conv_w{i}"] = jax.random.uniform(keys[ki], (kernel_size, in_ch, out_ch),
                                             jnp.float32, -bound, bound); ki += 1
        p[f"conv_b{i}"] = jax.random.uniform(keys[ki], (out_ch,), jnp.float32,
                                             -bound, bound); ki += 1
        p[f"bn_g{i}"] = 1.0 + 0.1 * jax.random.normal(keys[ki], (out_ch,), jnp.float32); ki += 1
        p[f"bn_b{i}"] = 0.1 * jax.random.normal(keys[ki], (out_ch,), jnp.float32); ki += 1
        p[f"bn_m{i}"] = 0.1 * jax.random.normal(keys[ki], (out_ch,), jnp.float32); ki += 1
        p[f"bn_v{i}"] = 0.5 + jnp.abs(jax.random.normal(keys[ki], (out_ch,), jnp.float32)); ki += 1
        in_ch, L = out_ch, L // 2
    conv_out = in_ch * L
    bound = 1.0 / math.sqrt(conv_out)
    p["lin_w"] = jax.random.uniform(keys[ki], (conv_out, output_dim), jnp.float32,
                                    -bound, bound); ki += 1
    p["lin_b"] = jax.random.uniform(keys[ki], (output_dim,), jnp.float32, -bound, bound)
    return p


# ------------------------------ pure-JAX reference ------------------------------ #
def reference_forward(x, p, num_channels=(64, 64, 128, 256)):
    eps = 1e-5
    h = jnp.asarray(x, jnp.float32)[:, :, None]              # (B, L, 1) NWC
    for i in range(len(num_channels)):
        w = p[f"conv_w{i}"]                                   # (K, Cin, Cout) WIO
        K = w.shape[0]
        h = lax.conv_general_dilated(
            h, w, window_strides=(1,), padding=[(K // 2, K // 2)],
            dimension_numbers=("NWC", "WIO", "NWC"),
            precision=lax.Precision.HIGHEST)
        h = h + p[f"conv_b{i}"][None, None, :]
        h = jnp.maximum(h, 0.0)
        inv = p[f"bn_g{i}"] / jnp.sqrt(p[f"bn_v{i}"] + eps)
        h = (h - p[f"bn_m{i}"][None, None, :]) * inv[None, None, :] + p[f"bn_b{i}"][None, None, :]
        B, L, C = h.shape
        h = h[:, : (L // 2) * 2, :].reshape(B, L // 2, 2, C).max(axis=2)
    # nn.Flatten over the PyTorch (B, C, L) layout
    h = jnp.transpose(h, (0, 2, 1)).reshape(h.shape[0], -1)
    return jnp.dot(h, p["lin_w"], precision=lax.Precision.HIGHEST) + p["lin_b"][None, :]


if __name__ == "__main__":
    B, TS_DIM, OUT = 4, 64, 32
    NUM_CHANNELS = (64, 64, 128, 256)

    key = jax.random.PRNGKey(0)
    k_x, k_p = jax.random.split(key)
    x = jax.random.normal(k_x, (B, TS_DIM), jnp.float32)
    params = init_params(k_p, TS_DIM, OUT, NUM_CHANNELS, kernel_size=5)

    out = jax.block_until_ready(cnn_encoder_forward(x, params, NUM_CHANNELS, kernel_size=5))
    ref = jax.block_until_ready(reference_forward(x, params, NUM_CHANNELS))

    assert out.shape == (B, OUT), out.shape
    max_diff = float(jnp.max(jnp.abs(out - ref)))
    # Tolerance accounts for bf16 MXU inputs in the kernel vs. the f32 HIGHEST reference.
    assert jnp.allclose(out, ref, rtol=5e-2, atol=5e-2), f"max abs diff {max_diff}"
    print("KERNEL_OK")
</pallas_src>

<mosaic_0001>
module attributes {stable_mosaic.version = 11 : i64} {
  func.func @kernel(%arg0: i32, %arg1: memref<4x64x1xf32, #tpu.memory_space<vmem>>, %arg2: memref<5x1x64xbf16, #tpu.memory_space<vmem>>, %arg3: memref<1x64xf32, #tpu.memory_space<vmem>>, %arg4: memref<1x64xf32, #tpu.memory_space<vmem>>, %arg5: memref<1x64xf32, #tpu.memory_space<vmem>>, %arg6: memref<5x64x64xbf16, #tpu.memory_space<vmem>>, %arg7: memref<1x64xf32, #tpu.memory_space<vmem>>, %arg8: memref<1x64xf32, #tpu.memory_space<vmem>>, %arg9: memref<1x64xf32, #tpu.memory_space<vmem>>, %arg10: memref<5x64x128xbf16, #tpu.memory_space<vmem>>, %arg11: memref<1x128xf32, #tpu.memory_space<vmem>>, %arg12: memref<1x128xf32, #tpu.memory_space<vmem>>, %arg13: memref<1x128xf32, #tpu.memory_space<vmem>>, %arg14: memref<5x128x256xbf16, #tpu.memory_space<vmem>>, %arg15: memref<1x256xf32, #tpu.memory_space<vmem>>, %arg16: memref<1x256xf32, #tpu.memory_space<vmem>>, %arg17: memref<1x256xf32, #tpu.memory_space<vmem>>, %arg18: memref<4x256x128xbf16, #tpu.memory_space<vmem>>, %arg19: memref<1x128xf32, #tpu.memory_space<vmem>>, %arg20: memref<4x128xf32, #tpu.memory_space<vmem>>, %arg21: memref<4x68x1xf32, #tpu.memory_space<vmem>>, %arg22: memref<4x36x64xf32, #tpu.memory_space<vmem>>, %arg23: memref<4x20x64xf32, #tpu.memory_space<vmem>>, %arg24: memref<4x12x128xf32, #tpu.memory_space<vmem>>, %arg25: memref<4x4x256xf32, #tpu.memory_space<vmem>>) attributes {dimension_semantics = [#tpu.dimension_semantics<parallel>], iteration_bounds = array<i64: 1>, scalar_prefetch = 0 : i64, scratch_operands = 5 : i64, tpu.core_type = #tpu.core_type<tc>, window_params = [{transform_indices = @transform_0, window_bounds = array<i64: 4, 64, 1>}, {pipeline_mode = #tpu.pipeline_mode<synchronous>, transform_indices = @transform_1, window_bounds = array<i64: 5, 1, 64>}, {pipeline_mode = #tpu.pipeline_mode<synchronous>, transform_indices = @transform_2, window_bounds = array<i64: 1, 64>}, {pipeline_mode = #tpu.pipeline_mode<synchronous>, transform_indices = @transform_3, window_bounds = array<i64: 1, 64>}, {pipeline_mode = #tpu.pipeline_mode<synchronous>, transform_indices = @transform_4, window_bounds = array<i64: 1, 64>}, {pipeline_mode = #tpu.pipeline_mode<synchronous>, transform_indices = @transform_5, window_bounds = array<i64: 5, 64, 64>}, {pipeline_mode = #tpu.pipeline_mode<synchronous>, transform_indices = @transform_6, window_bounds = array<i64: 1, 64>}, {pipeline_mode = #tpu.pipeline_mode<synchronous>, transform_indices = @transform_7, window_bounds = array<i64: 1, 64>}, {pipeline_mode = #tpu.pipeline_mode<synchronous>, transform_indices = @transform_8, window_bounds = array<i64: 1, 64>}, {pipeline_mode = #tpu.pipeline_mode<synchronous>, transform_indices = @transform_9, window_bounds = array<i64: 5, 64, 128>}, {pipeline_mode = #tpu.pipeline_mode<synchronous>, transform_indices = @transform_10, window_bounds = array<i64: 1, 128>}, {pipeline_mode = #tpu.pipeline_mode<synchronous>, transform_indices = @transform_11, window_bounds = array<i64: 1, 128>}, {pipeline_mode = #tpu.pipeline_mode<synchronous>, transform_indices = @transform_12, window_bounds = array<i64: 1, 128>}, {pipeline_mode = #tpu.pipeline_mode<synchronous>, transform_indices = @transform_13, window_bounds = array<i64: 5, 128, 256>}, {pipeline_mode = #tpu.pipeline_mode<synchronous>, transform_indices = @transform_14, window_bounds = array<i64: 1, 256>}, {pipeline_mode = #tpu.pipeline_mode<synchronous>, transform_indices = @transform_15, window_bounds = array<i64: 1, 256>}, {pipeline_mode = #tpu.pipeline_mode<synchronous>, transform_indices = @transform_16, window_bounds = array<i64: 1, 256>}, {pipeline_mode = #tpu.pipeline_mode<synchronous>, transform_indices = @transform_17, window_bounds = array<i64: 4, 256, 128>}, {pipeline_mode = #tpu.pipeline_mode<synchronous>, transform_indices = @transform_18, window_bounds = array<i64: 1, 128>}, {transform_indices = @transform_19, window_bounds = array<i64: 4, 128>}]} {
    %c0 = arith.constant 0 : index
    %c0_0 = arith.constant 0 : index
    %c0_1 = arith.constant 0 : index
    %0 = vector.load %arg1[%c0, %c0_0, %c0_1] : memref<4x64x1xf32, #tpu.memory_space<vmem>>, vector<4x64x1xf32>
    %cst = arith.constant 0.000000e+00 : f32
    %1 = vector.broadcast %cst : f32 to vector<4x2x1xf32>
    %c0_2 = arith.constant 0 : index
    %c0_3 = arith.constant 0 : index
    %c0_4 = arith.constant 0 : index
    %2 = vector.load %arg21[%c0_2, %c0_3, %c0_4] : memref<4x68x1xf32, #tpu.memory_space<vmem>>, vector<4x2x1xf32>
    tpu.vector_store %arg21[%c0_2, %c0_3, %c0_4], %1 {strides = array<i32>} : memref<4x68x1xf32, #tpu.memory_space<vmem>>, vector<4x2x1xf32>,
    %c0_5 = arith.constant 0 : index
    %c66 = arith.constant 66 : index
    %c0_6 = arith.constant 0 : index
    %3 = vector.load %arg21[%c0_5, %c66, %c0_6] : memref<4x68x1xf32, #tpu.memory_space<vmem>>, vector<4x2x1xf32>
    tpu.vector_store %arg21[%c0_5, %c66, %c0_6], %1 {strides = array<i32>} : memref<4x68x1xf32, #tpu.memory_space<vmem>>, vector<4x2x1xf32>,
    %c0_7 = arith.constant 0 : index
    %c2 = arith.constant 2 : index
    %c0_8 = arith.constant 0 : index
    %4 = vector.load %arg21[%c0_7, %c2, %c0_8] : memref<4x68x1xf32, #tpu.memory_space<vmem>>, vector<4x64x1xf32>
    tpu.vector_store %arg21[%c0_7, %c2, %c0_8], %0 {strides = array<i32>} : memref<4x68x1xf32, #tpu.memory_space<vmem>>, vector<4x64x1xf32>,
    %cst_9 = arith.constant 0.000000e+00 : f32
    %5 = vector.broadcast %cst_9 : f32 to vector<256x64xf32>
    %c0_10 = arith.constant 0 : index
    %c0_11 = arith.constant 0 : index
    %c0_12 = arith.constant 0 : index
    %6 = vector.load %arg21[%c0_10, %c0_11, %c0_12] : memref<4x68x1xf32, #tpu.memory_space<vmem>>, vector<4x64x1xf32>
    %7 = vector.shape_cast %6 : vector<4x64x1xf32> to vector<256x1xf32>
    %c0_13 = arith.constant 0 : index
    %c0_14 = arith.constant 0 : index
    %c0_15 = arith.constant 0 : index
    %8 = vector.load %arg2[%c0_13, %c0_14, %c0_15] : memref<5x1x64xbf16, #tpu.memory_space<vmem>>, vector<1x1x64xbf16>
    %9 = vector.shape_cast %8 : vector<1x1x64xbf16> to vector<1x64xbf16>
    %10 = arith.extf %9 : vector<1x64xbf16> to vector<1x64xf32>
    %11 = vector.broadcast %7 : vector<256x1xf32> to vector<256x64xf32>
    %12 = vector.broadcast %10 : vector<1x64xf32> to vector<256x64xf32>
    %13 = arith.mulf %11, %12 : vector<256x64xf32>
    %14 = arith.addf %5, %13 : vector<256x64xf32>
    %c0_16 = arith.constant 0 : index
    %c1 = arith.constant 1 : index
    %c0_17 = arith.constant 0 : index
    %15 = vector.load %arg21[%c0_16, %c1, %c0_17] : memref<4x68x1xf32, #tpu.memory_space<vmem>>, vector<4x64x1xf32>
    %16 = vector.shape_cast %15 : vector<4x64x1xf32> to vector<256x1xf32>
    %c1_18 = arith.constant 1 : index
    %c0_19 = arith.constant 0 : index
    %c0_20 = arith.constant 0 : index
    %17 = vector.load %arg2[%c1_18, %c0_19, %c0_20] : memref<5x1x64xbf16, #tpu.memory_space<vmem>>, vector<1x1x64xbf16>
    %18 = vector.shape_cast %17 : vector<1x1x64xbf16> to vector<1x64xbf16>
    %19 = arith.extf %18 : vector<1x64xbf16> to vector<1x64xf32>
    %20 = vector.broadcast %16 : vector<256x1xf32> to vector<256x64xf32>
    %21 = vector.broadcast %19 : vector<1x64xf32> to vector<256x64xf32>
    %22 = arith.mulf %20, %21 : vector<256x64xf32>
    %23 = arith.addf %14, %22 : vector<256x64xf32>
    %c0_21 = arith.constant 0 : index
    %c2_22 = arith.constant 2 : index
    %c0_23 = arith.constant 0 : index
    %24 = vector.load %arg21[%c0_21, %c2_22, %c0_23] : memref<4x68x1xf32, #tpu.memory_space<vmem>>, vector<4x64x1xf32>
    %25 = vector.shape_cast %24 : vector<4x64x1xf32> to vector<256x1xf32>
    %c2_24 = arith.constant 2 : index
    %c0_25 = arith.constant 0 : index
    %c0_26 = arith.constant 0 : index
    %26 = vector.load %arg2[%c2_24, %c0_25, %c0_26] : memref<5x1x64xbf16, #tpu.memory_space<vmem>>, vector<1x1x64xbf16>
    %27 = vector.shape_cast %26 : vector<1x1x64xbf16> to vector<1x64xbf16>
    %28 = arith.extf %27 : vector<1x64xbf16> to vector<1x64xf32>
    %29 = vector.broadcast %25 : vector<256x1xf32> to vector<256x64xf32>
    %30 = vector.broadcast %28 : vector<1x64xf32> to vector<256x64xf32>
    %31 = arith.mulf %29, %30 : vector<256x64xf32>
    %32 = arith.addf %23, %31 : vector<256x64xf32>
    %c0_27 = arith.constant 0 : index
    %c3 = arith.constant 3 : index
    %c0_28 = arith.constant 0 : index
    %33 = vector.load %arg21[%c0_27, %c3, %c0_28] : memref<4x68x1xf32, #tpu.memory_space<vmem>>, vector<4x64x1xf32>
    %34 = vector.shape_cast %33 : vector<4x64x1xf32> to vector<256x1xf32>
    %c3_29 = arith.constant 3 : index
    %c0_30 = arith.constant 0 : index
    %c0_31 = arith.constant 0 : index
    %35 = vector.load %arg2[%c3_29, %c0_30, %c0_31] : memref<5x1x64xbf16, #tpu.memory_space<vmem>>, vector<1x1x64xbf16>
    %36 = vector.shape_cast %35 : vector<1x1x64xbf16> to vector<1x64xbf16>
    %37 = arith.extf %36 : vector<1x64xbf16> to vector<1x64xf32>
    %38 = vector.broadcast %34 : vector<256x1xf32> to vector<256x64xf32>
    %39 = vector.broadcast %37 : vector<1x64xf32> to vector<256x64xf32>
    %40 = arith.mulf %38, %39 : vector<256x64xf32>
    %41 = arith.addf %32, %40 : vector<256x64xf32>
    %c0_32 = arith.constant 0 : index
    %c4 = arith.constant 4 : index
    %c0_33 = arith.constant 0 : index
    %42 = vector.load %arg21[%c0_32, %c4, %c0_33] : memref<4x68x1xf32, #tpu.memory_space<vmem>>, vector<4x64x1xf32>
    %43 = vector.shape_cast %42 : vector<4x64x1xf32> to vector<256x1xf32>
    %c4_34 = arith.constant 4 : index
    %c0_35 = arith.constant 0 : index
    %c0_36 = arith.constant 0 : index
    %44 = vector.load %arg2[%c4_34, %c0_35, %c0_36] : memref<5x1x64xbf16, #tpu.memory_space<vmem>>, vector<1x1x64xbf16>
    %45 = vector.shape_cast %44 : vector<1x1x64xbf16> to vector<1x64xbf16>
    %46 = arith.extf %45 : vector<1x64xbf16> to vector<1x64xf32>
    %47 = vector.broadcast %43 : vector<256x1xf32> to vector<256x64xf32>
    %48 = vector.broadcast %46 : vector<1x64xf32> to vector<256x64xf32>
    %49 = arith.mulf %47, %48 : vector<256x64xf32>
    %50 = arith.addf %41, %49 : vector<256x64xf32>
    %c0_37 = arith.constant 0 : index
    %c0_38 = arith.constant 0 : index
    %51 = vector.load %arg3[%c0_37, %c0_38] : memref<1x64xf32, #tpu.memory_space<vmem>>, vector<1x64xf32>
    %52 = vector.broadcast %51 : vector<1x64xf32> to vector<256x64xf32>
    %53 = arith.addf %50, %52 : vector<256x64xf32>
    %cst_39 = arith.constant 0.000000e+00 : f32
    %54 = vector.broadcast %cst_39 : f32 to vector<256x64xf32>
    %55 = arith.maximumf %53, %54 : vector<256x64xf32>
    %c0_40 = arith.constant 0 : index
    %c0_41 = arith.constant 0 : index
    %56 = vector.load %arg4[%c0_40, %c0_41] : memref<1x64xf32, #tpu.memory_space<vmem>>, vector<1x64xf32>
    %57 = vector.broadcast %56 : vector<1x64xf32> to vector<256x64xf32>
    %58 = arith.mulf %55, %57 : vector<256x64xf32>
    %c0_42 = arith.constant 0 : index
    %c0_43 = arith.constant 0 : index
    %59 = vector.load %arg5[%c0_42, %c0_43] : memref<1x64xf32, #tpu.memory_space<vmem>>, vector<1x64xf32>
    %60 = vector.broadcast %59 : vector<1x64xf32> to vector<256x64xf32>
    %61 = arith.addf %58, %60 : vector<256x64xf32>
    %62 = vector.shape_cast %61 : vector<256x64xf32> to vector<4x64x64xf32>
    %63 = tpu.iota {dimensions = array<i32: 1>} : vector<4x32x64xi32>
    %64 = tpu.iota {dimensions = array<i32: 2>} : vector<4x32x64xi32>
    %c2_i32 = arith.constant 2 : i32
    %65 = vector.broadcast %c2_i32 : i32 to vector<4x32x64xi32>
    %66 = arith.muli %65, %63 : vector<4x32x64xi32>
    %67 = arith.cmpi eq, %64, %66 : vector<4x32x64xi32>
    %cst_44 = arith.constant 1.000000e+00 : f32
    %cst_45 = arith.constant 0.000000e+00 : f32
    %68 = vector.broadcast %cst_44 : f32 to vector<4x32x64xf32>
    %69 = vector.broadcast %cst_45 : f32 to vector<4x32x64xf32>
    %70 = arith.select %67, %68, %69 : vector<4x32x64xi1>, vector<4x32x64xf32>
    %c2_i32_46 = arith.constant 2 : i32
    %71 = vector.broadcast %c2_i32_46 : i32 to vector<4x32x64xi32>
    %72 = arith.muli %71, %63 : vector<4x32x64xi32>
    %c1_i32 = arith.constant 1 : i32
    %73 = vector.broadcast %c1_i32 : i32 to vector<4x32x64xi32>
    %74 = arith.addi %72, %73 : vector<4x32x64xi32>
    %75 = arith.cmpi eq, %64, %74 : vector<4x32x64xi32>
    %cst_47 = arith.constant 1.000000e+00 : f32
    %cst_48 = arith.constant 0.000000e+00 : f32
    %76 = vector.broadcast %cst_47 : f32 to vector<4x32x64xf32>
    %77 = vector.broadcast %cst_48 : f32 to vector<4x32x64xf32>
    %78 = arith.select %75, %76, %77 : vector<4x32x64xi1>, vector<4x32x64xf32>
    %cst_49 = arith.constant dense<0.000000e+00> : vector<4x32x64xf32>
    %79 = tpu.matmul %70, %62, %cst_49 {dimension_numbers = #tpu.dot_dimension_numbers<[2], [1], [1], [2], [0, 0, 0, 1, 1, 2], [0], [0]>} : vector<4x32x64xf32>, vector<4x64x64xf32>, vector<4x32x64xf32> -> vector<4x32x64xf32>
    %cst_50 = arith.constant dense<0.000000e+00> : vector<4x32x64xf32>
    %80 = tpu.matmul %78, %62, %cst_50 {dimension_numbers = #tpu.dot_dimension_numbers<[2], [1], [1], [2], [0, 0, 0, 1, 1, 2], [0], [0]>} : vector<4x32x64xf32>, vector<4x64x64xf32>, vector<4x32x64xf32> -> vector<4x32x64xf32>
    %81 = arith.maximumf %79, %80 : vector<4x32x64xf32>
    %cst_51 = arith.constant 0.000000e+00 : f32
    %82 = vector.broadcast %cst_51 : f32 to vector<4x2x64xf32>
    %c0_52 = arith.constant 0 : index
    %c0_53 = arith.constant 0 : index
    %c0_54 = arith.constant 0 : index
    %83 = vector.load %arg22[%c0_52, %c0_53, %c0_54] : memref<4x36x64xf32, #tpu.memory_space<vmem>>, vector<4x2x64xf32>
    tpu.vector_store %arg22[%c0_52, %c0_53, %c0_54], %82 {strides = array<i32>} : memref<4x36x64xf32, #tpu.memory_space<vmem>>, vector<4x2x64xf32>,
    %c0_55 = arith.constant 0 : index
    %c34 = arith.constant 34 : index
    %c0_56 = arith.constant 0 : index
    %84 = vector.load %arg22[%c0_55, %c34, %c0_56] : memref<4x36x64xf32, #tpu.memory_space<vmem>>, vector<4x2x64xf32>
    tpu.vector_store %arg22[%c0_55, %c34, %c0_56], %82 {strides = array<i32>} : memref<4x36x64xf32, #tpu.memory_space<vmem>>, vector<4x2x64xf32>,
    %c0_57 = arith.constant 0 : index
    %c2_58 = arith.constant 2 : index
    %c0_59 = arith.constant 0 : index
    %85 = vector.load %arg22[%c0_57, %c2_58, %c0_59] : memref<4x36x64xf32, #tpu.memory_space<vmem>>, vector<4x32x64xf32>
    tpu.vector_store %arg22[%c0_57, %c2_58, %c0_59], %81 {strides = array<i32>} : memref<4x36x64xf32, #tpu.memory_space<vmem>>, vector<4x32x64xf32>,
    %cst_60 = arith.constant 0.000000e+00 : f32
    %86 = vector.broadcast %cst_60 : f32 to vector<128x64xf32>
    %c0_61 = arith.constant 0 : index
    %c0_62 = arith.constant 0 : index
    %c0_63 = arith.constant 0 : index
    %87 = vector.load %arg22[%c0_61, %c0_62, %c0_63] : memref<4x36x64xf32, #tpu.memory_space<vmem>>, vector<4x32x64xf32>
    %88 = vector.shape_cast %87 : vector<4x32x64xf32> to vector<128x64xf32>
    %89 = arith.truncf %88 : vector<128x64xf32> to vector<128x64xbf16>
    %c0_64 = arith.constant 0 : index
    %c0_65 = arith.constant 0 : index
    %c0_66 = arith.constant 0 : index
    %90 = vector.load %arg6[%c0_64, %c0_65, %c0_66] : memref<5x64x64xbf16, #tpu.memory_space<vmem>>, vector<1x64x64xbf16>
    %91 = vector.shape_cast %90 : vector<1x64x64xbf16> to vector<64x64xbf16>
    %cst_67 = arith.constant dense<0.000000e+00> : vector<128x64xf32>
    %92 = tpu.matmul %89, %91, %cst_67 {dimension_numbers = #tpu.dot_dimension_numbers<[1], [0], [0], [1], [0, 0, 1, 1], [], []>} : vector<128x64xbf16>, vector<64x64xbf16>, vector<128x64xf32> -> vector<128x64xf32>
    %93 = arith.addf %86, %92 : vector<128x64xf32>
    %c0_68 = arith.constant 0 : index
    %c1_69 = arith.constant 1 : index
    %c0_70 = arith.constant 0 : index
    %94 = vector.load %arg22[%c0_68, %c1_69, %c0_70] : memref<4x36x64xf32, #tpu.memory_space<vmem>>, vector<4x32x64xf32>
    %95 = vector.shape_cast %94 : vector<4x32x64xf32> to vector<128x64xf32>
    %96 = arith.truncf %95 : vector<128x64xf32> to vector<128x64xbf16>
    %c1_71 = arith.constant 1 : index
    %c0_72 = arith.constant 0 : index
    %c0_73 = arith.constant 0 : index
    %97 = vector.load %arg6[%c1_71, %c0_72, %c0_73] : memref<5x64x64xbf16, #tpu.memory_space<vmem>>, vector<1x64x64xbf16>
    %98 = vector.shape_cast %97 : vector<1x64x64xbf16> to vector<64x64xbf16>
    %cst_74 = arith.constant dense<0.000000e+00> : vector<128x64xf32>
    %99 = tpu.matmul %96, %98, %cst_74 {dimension_numbers = #tpu.dot_dimension_numbers<[1], [0], [0], [1], [0, 0, 1, 1], [], []>} : vector<128x64xbf16>, vector<64x64xbf16>, vector<128x64xf32> -> vector<128x64xf32>
    %100 = arith.addf %93, %99 : vector<128x64xf32>
    %c0_75 = arith.constant 0 : index
    %c2_76 = arith.constant 2 : index
    %c0_77 = arith.constant 0 : index
    %101 = vector.load %arg22[%c0_75, %c2_76, %c0_77] : memref<4x36x64xf32, #tpu.memory_space<vmem>>, vector<4x32x64xf32>
    %102 = vector.shape_cast %101 : vector<4x32x64xf32> to vector<128x64xf32>
    %103 = arith.truncf %102 : vector<128x64xf32> to vector<128x64xbf16>
    %c2_78 = arith.constant 2 : index
    %c0_79 = arith.constant 0 : index
    %c0_80 = arith.constant 0 : index
    %104 = vector.load %arg6[%c2_78, %c0_79, %c0_80] : memref<5x64x64xbf16, #tpu.memory_space<vmem>>, vector<1x64x64xbf16>
    %105 = vector.shape_cast %104 : vector<1x64x64xbf16> to vector<64x64xbf16>
    %cst_81 = arith.constant dense<0.000000e+00> : vector<128x64xf32>
    %106 = tpu.matmul %103, %105, %cst_81 {dimension_numbers = #tpu.dot_dimension_numbers<[1], [0], [0], [1], [0, 0, 1, 1], [], []>} : vector<128x64xbf16>, vector<64x64xbf16>, vector<128x64xf32> -> vector<128x64xf32>
    %107 = arith.addf %100, %106 : vector<128x64xf32>
    %c0_82 = arith.constant 0 : index
    %c3_83 = arith.constant 3 : index
    %c0_84 = arith.constant 0 : index
    %108 = vector.load %arg22[%c0_82, %c3_83, %c0_84] : memref<4x36x64xf32, #tpu.memory_space<vmem>>, vector<4x32x64xf32>
    %109 = vector.shape_cast %108 : vector<4x32x64xf32> to vector<128x64xf32>
    %110 = arith.truncf %109 : vector<128x64xf32> to vector<128x64xbf16>
    %c3_85 = arith.constant 3 : index
    %c0_86 = arith.constant 0 : index
    %c0_87 = arith.constant 0 : index
    %111 = vector.load %arg6[%c3_85, %c0_86, %c0_87] : memref<5x64x64xbf16, #tpu.memory_space<vmem>>, vector<1x64x64xbf16>
    %112 = vector.shape_cast %111 : vector<1x64x64xbf16> to vector<64x64xbf16>
    %cst_88 = arith.constant dense<0.000000e+00> : vector<128x64xf32>
    %113 = tpu.matmul %110, %112, %cst_88 {dimension_numbers = #tpu.dot_dimension_numbers<[1], [0], [0], [1], [0, 0, 1, 1], [], []>} : vector<128x64xbf16>, vector<64x64xbf16>, vector<128x64xf32> -> vector<128x64xf32>
    %114 = arith.addf %107, %113 : vector<128x64xf32>
    %c0_89 = arith.constant 0 : index
    %c4_90 = arith.constant 4 : index
    %c0_91 = arith.constant 0 : index
    %115 = vector.load %arg22[%c0_89, %c4_90, %c0_91] : memref<4x36x64xf32, #tpu.memory_space<vmem>>, vector<4x32x64xf32>
    %116 = vector.shape_cast %115 : vector<4x32x64xf32> to vector<128x64xf32>
    %117 = arith.truncf %116 : vector<128x64xf32> to vector<128x64xbf16>
    %c4_92 = arith.constant 4 : index
    %c0_93 = arith.constant 0 : index
    %c0_94 = arith.constant 0 : index
    %118 = vector.load %arg6[%c4_92, %c0_93, %c0_94] : memref<5x64x64xbf16, #tpu.memory_space<vmem>>, vector<1x64x64xbf16>
    %119 = vector.shape_cast %118 : vector<1x64x64xbf16> to vector<64x64xbf16>
    %cst_95 = arith.constant dense<0.000000e+00> : vector<128x64xf32>
    %120 = tpu.matmul %117, %119, %cst_95 {dimension_numbers = #tpu.dot_dimension_numbers<[1], [0], [0], [1], [0, 0, 1, 1], [], []>} : vector<128x64xbf16>, vector<64x64xbf16>, vector<128x64xf32> -> vector<128x64xf32>
    %121 = arith.addf %114, %120 : vector<128x64xf32>
    %c0_96 = arith.constant 0 : index
    %c0_97 = arith.constant 0 : index
    %122 = vector.load %arg7[%c0_96, %c0_97] : memref<1x64xf32, #tpu.memory_space<vmem>>, vector<1x64xf32>
    %123 = vector.broadcast %122 : vector<1x64xf32> to vector<128x64xf32>
    %124 = arith.addf %121, %123 : vector<128x64xf32>
    %cst_98 = arith.constant 0.000000e+00 : f32
    %125 = vector.broadcast %cst_98 : f32 to vector<128x64xf32>
    %126 = arith.maximumf %124, %125 : vector<128x64xf32>
    %c0_99 = arith.constant 0 : index
    %c0_100 = arith.constant 0 : index
    %127 = vector.load %arg8[%c0_99, %c0_100] : memref<1x64xf32, #tpu.memory_space<vmem>>, vector<1x64xf32>
    %128 = vector.broadcast %127 : vector<1x64xf32> to vector<128x64xf32>
    %129 = arith.mulf %126, %128 : vector<128x64xf32>
    %c0_101 = arith.constant 0 : index
    %c0_102 = arith.constant 0 : index
    %130 = vector.load %arg9[%c0_101, %c0_102] : memref<1x64xf32, #tpu.memory_space<vmem>>, vector<1x64xf32>
    %131 = vector.broadcast %130 : vector<1x64xf32> to vector<128x64xf32>
    %132 = arith.addf %129, %131 : vector<128x64xf32>
    %133 = vector.shape_cast %132 : vector<128x64xf32> to vector<4x32x64xf32>
    %134 = tpu.iota {dimensions = array<i32: 1>} : vector<4x16x32xi32>
    %135 = tpu.iota {dimensions = array<i32: 2>} : vector<4x16x32xi32>
    %c2_i32_103 = arith.constant 2 : i32
    %136 = vector.broadcast %c2_i32_103 : i32 to vector<4x16x32xi32>
    %137 = arith.muli %136, %134 : vector<4x16x32xi32>
    %138 = arith.cmpi eq, %135, %137 : vector<4x16x32xi32>
    %cst_104 = arith.constant 1.000000e+00 : f32
    %cst_105 = arith.constant 0.000000e+00 : f32
    %139 = vector.broadcast %cst_104 : f32 to vector<4x16x32xf32>
    %140 = vector.broadcast %cst_105 : f32 to vector<4x16x32xf32>
    %141 = arith.select %138, %139, %140 : vector<4x16x32xi1>, vector<4x16x32xf32>
    %c2_i32_106 = arith.constant 2 : i32
    %142 = vector.broadcast %c2_i32_106 : i32 to vector<4x16x32xi32>
    %143 = arith.muli %142, %134 : vector<4x16x32xi32>
    %c1_i32_107 = arith.constant 1 : i32
    %144 = vector.broadcast %c1_i32_107 : i32 to vector<4x16x32xi32>
    %145 = arith.addi %143, %144 : vector<4x16x32xi32>
    %146 = arith.cmpi eq, %135, %145 : vector<4x16x32xi32>
    %cst_108 = arith.constant 1.000000e+00 : f32
    %cst_109 = arith.constant 0.000000e+00 : f32
    %147 = vector.broadcast %cst_108 : f32 to vector<4x16x32xf32>
    %148 = vector.broadcast %cst_109 : f32 to vector<4x16x32xf32>
    %149 = arith.select %146, %147, %148 : vector<4x16x32xi1>, vector<4x16x32xf32>
    %cst_110 = arith.constant dense<0.000000e+00> : vector<4x16x64xf32>
    %150 = tpu.matmul %141, %133, %cst_110 {dimension_numbers = #tpu.dot_dimension_numbers<[2], [1], [1], [2], [0, 0, 0, 1, 1, 2], [0], [0]>} : vector<4x16x32xf32>, vector<4x32x64xf32>, vector<4x16x64xf32> -> vector<4x16x64xf32>
    %cst_111 = arith.constant dense<0.000000e+00> : vector<4x16x64xf32>
    %151 = tpu.matmul %149, %133, %cst_111 {dimension_numbers = #tpu.dot_dimension_numbers<[2], [1], [1], [2], [0, 0, 0, 1, 1, 2], [0], [0]>} : vector<4x16x32xf32>, vector<4x32x64xf32>, vector<4x16x64xf32> -> vector<4x16x64xf32>
    %152 = arith.maximumf %150, %151 : vector<4x16x64xf32>
    %cst_112 = arith.constant 0.000000e+00 : f32
    %153 = vector.broadcast %cst_112 : f32 to vector<4x2x64xf32>
    %c0_113 = arith.constant 0 : index
    %c0_114 = arith.constant 0 : index
    %c0_115 = arith.constant 0 : index
    %154 = vector.load %arg23[%c0_113, %c0_114, %c0_115] : memref<4x20x64xf32, #tpu.memory_space<vmem>>, vector<4x2x64xf32>
    tpu.vector_store %arg23[%c0_113, %c0_114, %c0_115], %153 {strides = array<i32>} : memref<4x20x64xf32, #tpu.memory_space<vmem>>, vector<4x2x64xf32>,
    %c0_116 = arith.constant 0 : index
    %c18 = arith.constant 18 : index
    %c0_117 = arith.constant 0 : index
    %155 = vector.load %arg23[%c0_116, %c18, %c0_117] : memref<4x20x64xf32, #tpu.memory_space<vmem>>, vector<4x2x64xf32>
    tpu.vector_store %arg23[%c0_116, %c18, %c0_117], %153 {strides = array<i32>} : memref<4x20x64xf32, #tpu.memory_space<vmem>>, vector<4x2x64xf32>,
    %c0_118 = arith.constant 0 : index
    %c2_119 = arith.constant 2 : index
    %c0_120 = arith.constant 0 : index
    %156 = vector.load %arg23[%c0_118, %c2_119, %c0_120] : memref<4x20x64xf32, #tpu.memory_space<vmem>>, vector<4x16x64xf32>
    tpu.vector_store %arg23[%c0_118, %c2_119, %c0_120], %152 {strides = array<i32>} : memref<4x20x64xf32, #tpu.memory_space<vmem>>, vector<4x16x64xf32>,
    %cst_121 = arith.constant 0.000000e+00 : f32
    %157 = vector.broadcast %cst_121 : f32 to vector<64x128xf32>
    %c0_122 = arith.constant 0 : index
    %c0_123 = arith.constant 0 : index
    %c0_124 = arith.constant 0 : index
    %158 = vector.load %arg23[%c0_122, %c0_123, %c0_124] : memref<4x20x64xf32, #tpu.memory_space<vmem>>, vector<4x16x64xf32>
    %159 = vector.shape_cast %158 : vector<4x16x64xf32> to vector<64x64xf32>
    %160 = arith.truncf %159 : vector<64x64xf32> to vector<64x64xbf16>
    %c0_125 = arith.constant 0 : index
    %c0_126 = arith.constant 0 : index
    %c0_127 = arith.constant 0 : index
    %161 = vector.load %arg10[%c0_125, %c0_126, %c0_127] : memref<5x64x128xbf16, #tpu.memory_space<vmem>>, vector<1x64x128xbf16>
    %162 = vector.shape_cast %161 : vector<1x64x128xbf16> to vector<64x128xbf16>
    %cst_128 = arith.constant dense<0.000000e+00> : vector<64x128xf32>
    %163 = tpu.matmul %160, %162, %cst_128 {dimension_numbers = #tpu.dot_dimension_numbers<[1], [0], [0], [1], [0, 0, 1, 1], [], []>} : vector<64x64xbf16>, vector<64x128xbf16>, vector<64x128xf32> -> vector<64x128xf32>
    %164 = arith.addf %157, %163 : vector<64x128xf32>
    %c0_129 = arith.constant 0 : index
    %c1_130 = arith.constant 1 : index
    %c0_131 = arith.constant 0 : index
    %165 = vector.load %arg23[%c0_129, %c1_130, %c0_131] : memref<4x20x64xf32, #tpu.memory_space<vmem>>, vector<4x16x64xf32>
    %166 = vector.shape_cast %165 : vector<4x16x64xf32> to vector<64x64xf32>
    %167 = arith.truncf %166 : vector<64x64xf32> to vector<64x64xbf16>
    %c1_132 = arith.constant 1 : index
    %c0_133 = arith.constant 0 : index
    %c0_134 = arith.constant 0 : index
    %168 = vector.load %arg10[%c1_132, %c0_133, %c0_134] : memref<5x64x128xbf16, #tpu.memory_space<vmem>>, vector<1x64x128xbf16>
    %169 = vector.shape_cast %168 : vector<1x64x128xbf16> to vector<64x128xbf16>
    %cst_135 = arith.constant dense<0.000000e+00> : vector<64x128xf32>
    %170 = tpu.matmul %167, %169, %cst_135 {dimension_numbers = #tpu.dot_dimension_numbers<[1], [0], [0], [1], [0, 0, 1, 1], [], []>} : vector<64x64xbf16>, vector<64x128xbf16>, vector<64x128xf32> -> vector<64x128xf32>
    %171 = arith.addf %164, %170 : vector<64x128xf32>
    %c0_136 = arith.constant 0 : index
    %c2_137 = arith.constant 2 : index
    %c0_138 = arith.constant 0 : index
    %172 = vector.load %arg23[%c0_136, %c2_137, %c0_138] : memref<4x20x64xf32, #tpu.memory_space<vmem>>, vector<4x16x64xf32>
    %173 = vector.shape_cast %172 : vector<4x16x64xf32> to vector<64x64xf32>
    %174 = arith.truncf %173 : vector<64x64xf32> to vector<64x64xbf16>
    %c2_139 = arith.constant 2 : index
    %c0_140 = arith.constant 0 : index
    %c0_141 = arith.constant 0 : index
    %175 = vector.load %arg10[%c2_139, %c0_140, %c0_141] : memref<5x64x128xbf16, #tpu.memory_space<vmem>>, vector<1x64x128xbf16>
    %176 = vector.shape_cast %175 : vector<1x64x128xbf16> to vector<64x128xbf16>
    %cst_142 = arith.constant dense<0.000000e+00> : vector<64x128xf32>
    %177 = tpu.matmul %174, %176, %cst_142 {dimension_numbers = #tpu.dot_dimension_numbers<[1], [0], [0], [1], [0, 0, 1, 1], [], []>} : vector<64x64xbf16>, vector<64x128xbf16>, vector<64x128xf32> -> vector<64x128xf32>
    %178 = arith.addf %171, %177 : vector<64x128xf32>
    %c0_143 = arith.constant 0 : index
    %c3_144 = arith.constant 3 : index
    %c0_145 = arith.constant 0 : index
    %179 = vector.load %arg23[%c0_143, %c3_144, %c0_145] : memref<4x20x64xf32, #tpu.memory_space<vmem>>, vector<4x16x64xf32>
    %180 = vector.shape_cast %179 : vector<4x16x64xf32> to vector<64x64xf32>
    %181 = arith.truncf %180 : vector<64x64xf32> to vector<64x64xbf16>
    %c3_146 = arith.constant 3 : index
    %c0_147 = arith.constant 0 : index
    %c0_148 = arith.constant 0 : index
    %182 = vector.load %arg10[%c3_146, %c0_147, %c0_148] : memref<5x64x128xbf16, #tpu.memory_space<vmem>>, vector<1x64x128xbf16>
    %183 = vector.shape_cast %182 : vector<1x64x128xbf16> to vector<64x128xbf16>
    %cst_149 = arith.constant dense<0.000000e+00> : vector<64x128xf32>
    %184 = tpu.matmul %181, %183, %cst_149 {dimension_numbers = #tpu.dot_dimension_numbers<[1], [0], [0], [1], [0, 0, 1, 1], [], []>} : vector<64x64xbf16>, vector<64x128xbf16>, vector<64x128xf32> -> vector<64x128xf32>
    %185 = arith.addf %178, %184 : vector<64x128xf32>
    %c0_150 = arith.constant 0 : index
    %c4_151 = arith.constant 4 : index
    %c0_152 = arith.constant 0 : index
    %186 = vector.load %arg23[%c0_150, %c4_151, %c0_152] : memref<4x20x64xf32, #tpu.memory_space<vmem>>, vector<4x16x64xf32>
    %187 = vector.shape_cast %186 : vector<4x16x64xf32> to vector<64x64xf32>
    %188 = arith.truncf %187 : vector<64x64xf32> to vector<64x64xbf16>
    %c4_153 = arith.constant 4 : index
    %c0_154 = arith.constant 0 : index
    %c0_155 = arith.constant 0 : index
    %189 = vector.load %arg10[%c4_153, %c0_154, %c0_155] : memref<5x64x128xbf16, #tpu.memory_space<vmem>>, vector<1x64x128xbf16>
    %190 = vector.shape_cast %189 : vector<1x64x128xbf16> to vector<64x128xbf16>
    %cst_156 = arith.constant dense<0.000000e+00> : vector<64x128xf32>
    %191 = tpu.matmul %188, %190, %cst_156 {dimension_numbers = #tpu.dot_dimension_numbers<[1], [0], [0], [1], [0, 0, 1, 1], [], []>} : vector<64x64xbf16>, vector<64x128xbf16>, vector<64x128xf32> -> vector<64x128xf32>
    %192 = arith.addf %185, %191 : vector<64x128xf32>
    %c0_157 = arith.constant 0 : index
    %c0_158 = arith.constant 0 : index
    %193 = vector.load %arg11[%c0_157, %c0_158] : memref<1x128xf32, #tpu.memory_space<vmem>>, vector<1x128xf32>
    %194 = vector.broadcast %193 : vector<1x128xf32> to vector<64x128xf32>
    %195 = arith.addf %192, %194 : vector<64x128xf32>
    %cst_159 = arith.constant 0.000000e+00 : f32
    %196 = vector.broadcast %cst_159 : f32 to vector<64x128xf32>
    %197 = arith.maximumf %195, %196 : vector<64x128xf32>
    %c0_160 = arith.constant 0 : index
    %c0_161 = arith.constant 0 : index
    %198 = vector.load %arg12[%c0_160, %c0_161] : memref<1x128xf32, #tpu.memory_space<vmem>>, vector<1x128xf32>
    %199 = vector.broadcast %198 : vector<1x128xf32> to vector<64x128xf32>
    %200 = arith.mulf %197, %199 : vector<64x128xf32>
    %c0_162 = arith.constant 0 : index
    %c0_163 = arith.constant 0 : index
    %201 = vector.load %arg13[%c0_162, %c0_163] : memref<1x128xf32, #tpu.memory_space<vmem>>, vector<1x128xf32>
    %202 = vector.broadcast %201 : vector<1x128xf32> to vector<64x128xf32>
    %203 = arith.addf %200, %202 : vector<64x128xf32>
    %204 = vector.shape_cast %203 : vector<64x128xf32> to vector<4x16x128xf32>
    %205 = tpu.iota {dimensions = array<i32: 1>} : vector<4x8x16xi32>
    %206 = tpu.iota {dimensions = array<i32: 2>} : vector<4x8x16xi32>
    %c2_i32_164 = arith.constant 2 : i32
    %207 = vector.broadcast %c2_i32_164 : i32 to vector<4x8x16xi32>
    %208 = arith.muli %207, %205 : vector<4x8x16xi32>
    %209 = arith.cmpi eq, %206, %208 : vector<4x8x16xi32>
    %cst_165 = arith.constant 1.000000e+00 : f32
    %cst_166 = arith.constant 0.000000e+00 : f32
    %210 = vector.broadcast %cst_165 : f32 to vector<4x8x16xf32>
    %211 = vector.broadcast %cst_166 : f32 to vector<4x8x16xf32>
    %212 = arith.select %209, %210, %211 : vector<4x8x16xi1>, vector<4x8x16xf32>
    %c2_i32_167 = arith.constant 2 : i32
    %213 = vector.broadcast %c2_i32_167 : i32 to vector<4x8x16xi32>
    %214 = arith.muli %213, %205 : vector<4x8x16xi32>
    %c1_i32_168 = arith.constant 1 : i32
    %215 = vector.broadcast %c1_i32_168 : i32 to vector<4x8x16xi32>
    %216 = arith.addi %214, %215 : vector<4x8x16xi32>
    %217 = arith.cmpi eq, %206, %216 : vector<4x8x16xi32>
    %cst_169 = arith.constant 1.000000e+00 : f32
    %cst_170 = arith.constant 0.000000e+00 : f32
    %218 = vector.broadcast %cst_169 : f32 to vector<4x8x16xf32>
    %219 = vector.broadcast %cst_170 : f32 to vector<4x8x16xf32>
    %220 = arith.select %217, %218, %219 : vector<4x8x16xi1>, vector<4x8x16xf32>
    %cst_171 = arith.constant dense<0.000000e+00> : vector<4x8x128xf32>
    %221 = tpu.matmul %212, %204, %cst_171 {dimension_numbers = #tpu.dot_dimension_numbers<[2], [1], [1], [2], [0, 0, 0, 1, 1, 2], [0], [0]>} : vector<4x8x16xf32>, vector<4x16x128xf32>, vector<4x8x128xf32> -> vector<4x8x128xf32>
    %cst_172 = arith.constant dense<0.000000e+00> : vector<4x8x128xf32>
    %222 = tpu.matmul %220, %204, %cst_172 {dimension_numbers = #tpu.dot_dimension_numbers<[2], [1], [1], [2], [0, 0, 0, 1, 1, 2], [0], [0]>} : vector<4x8x16xf32>, vector<4x16x128xf32>, vector<4x8x128xf32> -> vector<4x8x128xf32>
    %223 = arith.maximumf %221, %222 : vector<4x8x128xf32>
    %cst_173 = arith.constant 0.000000e+00 : f32
    %224 = vector.broadcast %cst_173 : f32 to vector<4x2x128xf32>
    %c0_174 = arith.constant 0 : index
    %c0_175 = arith.constant 0 : index
    %c0_176 = arith.constant 0 : index
    %225 = vector.load %arg24[%c0_174, %c0_175, %c0_176] : memref<4x12x128xf32, #tpu.memory_space<vmem>>, vector<4x2x128xf32>
    tpu.vector_store %arg24[%c0_174, %c0_175, %c0_176], %224 {strides = array<i32>} : memref<4x12x128xf32, #tpu.memory_space<vmem>>, vector<4x2x128xf32>,
    %c0_177 = arith.constant 0 : index
    %c10 = arith.constant 10 : index
    %c0_178 = arith.constant 0 : index
    %226 = vector.load %arg24[%c0_177, %c10, %c0_178] : memref<4x12x128xf32, #tpu.memory_space<vmem>>, vector<4x2x128xf32>
    tpu.vector_store %arg24[%c0_177, %c10, %c0_178], %224 {strides = array<i32>} : memref<4x12x128xf32, #tpu.memory_space<vmem>>, vector<4x2x128xf32>,
    %c0_179 = arith.constant 0 : index
    %c2_180 = arith.constant 2 : index
    %c0_181 = arith.constant 0 : index
    %227 = vector.load %arg24[%c0_179, %c2_180, %c0_181] : memref<4x12x128xf32, #tpu.memory_space<vmem>>, vector<4x8x128xf32>
    tpu.vector_store %arg24[%c0_179, %c2_180, %c0_181], %223 {strides = array<i32>} : memref<4x12x128xf32, #tpu.memory_space<vmem>>, vector<4x8x128xf32>,
    %cst_182 = arith.constant 0.000000e+00 : f32
    %228 = vector.broadcast %cst_182 : f32 to vector<32x256xf32>
    %c0_183 = arith.constant 0 : index
    %c0_184 = arith.constant 0 : index
    %c0_185 = arith.constant 0 : index
    %229 = vector.load %arg24[%c0_183, %c0_184, %c0_185] : memref<4x12x128xf32, #tpu.memory_space<vmem>>, vector<4x8x128xf32>
    %230 = vector.shape_cast %229 : vector<4x8x128xf32> to vector<32x128xf32>
    %231 = arith.truncf %230 : vector<32x128xf32> to vector<32x128xbf16>
    %c0_186 = arith.constant 0 : index
    %c0_187 = arith.constant 0 : index
    %c0_188 = arith.constant 0 : index
    %232 = vector.load %arg14[%c0_186, %c0_187, %c0_188] : memref<5x128x256xbf16, #tpu.memory_space<vmem>>, vector<1x128x256xbf16>
    %233 = vector.shape_cast %232 : vector<1x128x256xbf16> to vector<128x256xbf16>
    %cst_189 = arith.constant dense<0.000000e+00> : vector<32x256xf32>
    %234 = tpu.matmul %231, %233, %cst_189 {dimension_numbers = #tpu.dot_dimension_numbers<[1], [0], [0], [1], [0, 0, 1, 1], [], []>} : vector<32x128xbf16>, vector<128x256xbf16>, vector<32x256xf32> -> vector<32x256xf32>
    %235 = arith.addf %228, %234 : vector<32x256xf32>
    %c0_190 = arith.constant 0 : index
    %c1_191 = arith.constant 1 : index
    %c0_192 = arith.constant 0 : index
    %236 = vector.load %arg24[%c0_190, %c1_191, %c0_192] : memref<4x12x128xf32, #tpu.memory_space<vmem>>, vector<4x8x128xf32>
    %237 = vector.shape_cast %236 : vector<4x8x128xf32> to vector<32x128xf32>
    %238 = arith.truncf %237 : vector<32x128xf32> to vector<32x128xbf16>
    %c1_193 = arith.constant 1 : index
    %c0_194 = arith.constant 0 : index
    %c0_195 = arith.constant 0 : index
    %239 = vector.load %arg14[%c1_193, %c0_194, %c0_195] : memref<5x128x256xbf16, #tpu.memory_space<vmem>>, vector<1x128x256xbf16>
    %240 = vector.shape_cast %239 : vector<1x128x256xbf16> to vector<128x256xbf16>
    %cst_196 = arith.constant dense<0.000000e+00> : vector<32x256xf32>
    %241 = tpu.matmul %238, %240, %cst_196 {dimension_numbers = #tpu.dot_dimension_numbers<[1], [0], [0], [1], [0, 0, 1, 1], [], []>} : vector<32x128xbf16>, vector<128x256xbf16>, vector<32x256xf32> -> vector<32x256xf32>
    %242 = arith.addf %235, %241 : vector<32x256xf32>
    %c0_197 = arith.constant 0 : index
    %c2_198 = arith.constant 2 : index
    %c0_199 = arith.constant 0 : index
    %243 = vector.load %arg24[%c0_197, %c2_198, %c0_199] : memref<4x12x128xf32, #tpu.memory_space<vmem>>, vector<4x8x128xf32>
    %244 = vector.shape_cast %243 : vector<4x8x128xf32> to vector<32x128xf32>
    %245 = arith.truncf %244 : vector<32x128xf32> to vector<32x128xbf16>
    %c2_200 = arith.constant 2 : index
    %c0_201 = arith.constant 0 : index
    %c0_202 = arith.constant 0 : index
    %246 = vector.load %arg14[%c2_200, %c0_201, %c0_202] : memref<5x128x256xbf16, #tpu.memory_space<vmem>>, vector<1x128x256xbf16>
    %247 = vector.shape_cast %246 : vector<1x128x256xbf16> to vector<128x256xbf16>
    %cst_203 = arith.constant dense<0.000000e+00> : vector<32x256xf32>
    %248 = tpu.matmul %245, %247, %cst_203 {dimension_numbers = #tpu.dot_dimension_numbers<[1], [0], [0], [1], [0, 0, 1, 1], [], []>} : vector<32x128xbf16>, vector<128x256xbf16>, vector<32x256xf32> -> vector<32x256xf32>
    %249 = arith.addf %242, %248 : vector<32x256xf32>
    %c0_204 = arith.constant 0 : index
    %c3_205 = arith.constant 3 : index
    %c0_206 = arith.constant 0 : index
    %250 = vector.load %arg24[%c0_204, %c3_205, %c0_206] : memref<4x12x128xf32, #tpu.memory_space<vmem>>, vector<4x8x128xf32>
    %251 = vector.shape_cast %250 : vector<4x8x128xf32> to vector<32x128xf32>
    %252 = arith.truncf %251 : vector<32x128xf32> to vector<32x128xbf16>
    %c3_207 = arith.constant 3 : index
    %c0_208 = arith.constant 0 : index
    %c0_209 = arith.constant 0 : index
    %253 = vector.load %arg14[%c3_207, %c0_208, %c0_209] : memref<5x128x256xbf16, #tpu.memory_space<vmem>>, vector<1x128x256xbf16>
    %254 = vector.shape_cast %253 : vector<1x128x256xbf16> to vector<128x256xbf16>
    %cst_210 = arith.constant dense<0.000000e+00> : vector<32x256xf32>
    %255 = tpu.matmul %252, %254, %cst_210 {dimension_numbers = #tpu.dot_dimension_numbers<[1], [0], [0], [1], [0, 0, 1, 1], [], []>} : vector<32x128xbf16>, vector<128x256xbf16>, vector<32x256xf32> -> vector<32x256xf32>
    %256 = arith.addf %249, %255 : vector<32x256xf32>
    %c0_211 = arith.constant 0 : index
    %c4_212 = arith.constant 4 : index
    %c0_213 = arith.constant 0 : index
    %257 = vector.load %arg24[%c0_211, %c4_212, %c0_213] : memref<4x12x128xf32, #tpu.memory_space<vmem>>, vector<4x8x128xf32>
    %258 = vector.shape_cast %257 : vector<4x8x128xf32> to vector<32x128xf32>
    %259 = arith.truncf %258 : vector<32x128xf32> to vector<32x128xbf16>
    %c4_214 = arith.constant 4 : index
    %c0_215 = arith.constant 0 : index
    %c0_216 = arith.constant 0 : index
    %260 = vector.load %arg14[%c4_214, %c0_215, %c0_216] : memref<5x128x256xbf16, #tpu.memory_space<vmem>>, vector<1x128x256xbf16>
    %261 = vector.shape_cast %260 : vector<1x128x256xbf16> to vector<128x256xbf16>
    %cst_217 = arith.constant dense<0.000000e+00> : vector<32x256xf32>
    %262 = tpu.matmul %259, %261, %cst_217 {dimension_numbers = #tpu.dot_dimension_numbers<[1], [0], [0], [1], [0, 0, 1, 1], [], []>} : vector<32x128xbf16>, vector<128x256xbf16>, vector<32x256xf32> -> vector<32x256xf32>
    %263 = arith.addf %256, %262 : vector<32x256xf32>
    %c0_218 = arith.constant 0 : index
    %c0_219 = arith.constant 0 : index
    %264 = vector.load %arg15[%c0_218, %c0_219] : memref<1x256xf32, #tpu.memory_space<vmem>>, vector<1x256xf32>
    %265 = vector.broadcast %264 : vector<1x256xf32> to vector<32x256xf32>
    %266 = arith.addf %263, %265 : vector<32x256xf32>
    %cst_220 = arith.constant 0.000000e+00 : f32
    %267 = vector.broadcast %cst_220 : f32 to vector<32x256xf32>
    %268 = arith.maximumf %266, %267 : vector<32x256xf32>
    %c0_221 = arith.constant 0 : index
    %c0_222 = arith.constant 0 : index
    %269 = vector.load %arg16[%c0_221, %c0_222] : memref<1x256xf32, #tpu.memory_space<vmem>>, vector<1x256xf32>
    %270 = vector.broadcast %269 : vector<1x256xf32> to vector<32x256xf32>
    %271 = arith.mulf %268, %270 : vector<32x256xf32>
    %c0_223 = arith.constant 0 : index
    %c0_224 = arith.constant 0 : index
    %272 = vector.load %arg17[%c0_223, %c0_224] : memref<1x256xf32, #tpu.memory_space<vmem>>, vector<1x256xf32>
    %273 = vector.broadcast %272 : vector<1x256xf32> to vector<32x256xf32>
    %274 = arith.addf %271, %273 : vector<32x256xf32>
    %275 = vector.shape_cast %274 : vector<32x256xf32> to vector<4x8x256xf32>
    %276 = tpu.iota {dimensions = array<i32: 1>} : vector<4x4x8xi32>
    %277 = tpu.iota {dimensions = array<i32: 2>} : vector<4x4x8xi32>
    %c2_i32_225 = arith.constant 2 : i32
    %278 = vector.broadcast %c2_i32_225 : i32 to vector<4x4x8xi32>
    %279 = arith.muli %278, %276 : vector<4x4x8xi32>
    %280 = arith.cmpi eq, %277, %279 : vector<4x4x8xi32>
    %cst_226 = arith.constant 1.000000e+00 : f32
    %cst_227 = arith.constant 0.000000e+00 : f32
    %281 = vector.broadcast %cst_226 : f32 to vector<4x4x8xf32>
    %282 = vector.broadcast %cst_227 : f32 to vector<4x4x8xf32>
    %283 = arith.select %280, %281, %282 : vector<4x4x8xi1>, vector<4x4x8xf32>
    %c2_i32_228 = arith.constant 2 : i32
    %284 = vector.broadcast %c2_i32_228 : i32 to vector<4x4x8xi32>
    %285 = arith.muli %284, %276 : vector<4x4x8xi32>
    %c1_i32_229 = arith.constant 1 : i32
    %286 = vector.broadcast %c1_i32_229 : i32 to vector<4x4x8xi32>
    %287 = arith.addi %285, %286 : vector<4x4x8xi32>
    %288 = arith.cmpi eq, %277, %287 : vector<4x4x8xi32>
    %cst_230 = arith.constant 1.000000e+00 : f32
    %cst_231 = arith.constant 0.000000e+00 : f32
    %289 = vector.broadcast %cst_230 : f32 to vector<4x4x8xf32>
    %290 = vector.broadcast %cst_231 : f32 to vector<4x4x8xf32>
    %291 = arith.select %288, %289, %290 : vector<4x4x8xi1>, vector<4x4x8xf32>
    %cst_232 = arith.constant dense<0.000000e+00> : vector<4x4x256xf32>
    %292 = tpu.matmul %283, %275, %cst_232 {dimension_numbers = #tpu.dot_dimension_numbers<[2], [1], [1], [2], [0, 0, 0, 1, 1, 2], [0], [0]>} : vector<4x4x8xf32>, vector<4x8x256xf32>, vector<4x4x256xf32> -> vector<4x4x256xf32>
    %cst_233 = arith.constant dense<0.000000e+00> : vector<4x4x256xf32>
    %293 = tpu.matmul %291, %275, %cst_233 {dimension_numbers = #tpu.dot_dimension_numbers<[2], [1], [1], [2], [0, 0, 0, 1, 1, 2], [0], [0]>} : vector<4x4x8xf32>, vector<4x8x256xf32>, vector<4x4x256xf32> -> vector<4x4x256xf32>
    %294 = arith.maximumf %292, %293 : vector<4x4x256xf32>
    %c0_234 = arith.constant 0 : index
    %c0_235 = arith.constant 0 : index
    %c0_236 = arith.constant 0 : index
    %295 = vector.load %arg25[%c0_234, %c0_235, %c0_236] : memref<4x4x256xf32, #tpu.memory_space<vmem>>, vector<4x4x256xf32>
    tpu.vector_store %arg25[%c0_234, %c0_235, %c0_236], %294 {strides = array<i32>} : memref<4x4x256xf32, #tpu.memory_space<vmem>>, vector<4x4x256xf32>,
    %cst_237 = arith.constant 0.000000e+00 : f32
    %296 = vector.broadcast %cst_237 : f32 to vector<4x128xf32>
    %c0_238 = arith.constant 0 : index
    %c0_239 = arith.constant 0 : index
    %297 = vector.load %arg19[%c0_238, %c0_239] : memref<1x128xf32, #tpu.memory_space<vmem>>, vector<1x128xf32>
    %298 = vector.broadcast %297 : vector<1x128xf32> to vector<4x128xf32>
    %299 = arith.addf %296, %298 : vector<4x128xf32>
    %c0_240 = arith.constant 0 : index
    %c0_241 = arith.constant 0 : index
    %c0_242 = arith.constant 0 : index
    %300 = vector.load %arg25[%c0_240, %c0_241, %c0_242] : memref<4x4x256xf32, #tpu.memory_space<vmem>>, vector<4x1x256xf32>
    %301 = vector.shape_cast %300 : vector<4x1x256xf32> to vector<4x256xf32>
    %302 = arith.truncf %301 : vector<4x256xf32> to vector<4x256xbf16>
    %c0_243 = arith.constant 0 : index
    %c0_244 = arith.constant 0 : index
    %c0_245 = arith.constant 0 : index
    %303 = vector.load %arg18[%c0_243, %c0_244, %c0_245] : memref<4x256x128xbf16, #tpu.memory_space<vmem>>, vector<1x256x128xbf16>
    %304 = vector.shape_cast %303 : vector<1x256x128xbf16> to vector<256x128xbf16>
    %cst_246 = arith.constant dense<0.000000e+00> : vector<4x128xf32>
    %305 = tpu.matmul %302, %304, %cst_246 {dimension_numbers = #tpu.dot_dimension_numbers<[1], [0], [0], [1], [0, 0, 1, 1], [], []>} : vector<4x256xbf16>, vector<256x128xbf16>, vector<4x128xf32> -> vector<4x128xf32>
    %306 = arith.addf %299, %305 : vector<4x128xf32>
    %c0_247 = arith.constant 0 : index
    %c1_248 = arith.constant 1 : index
    %c0_249 = arith.constant 0 : index
    %307 = vector.load %arg25[%c0_247, %c1_248, %c0_249] : memref<4x4x256xf32, #tpu.memory_space<vmem>>, vector<4x1x256xf32>
    %308 = vector.shape_cast %307 : vector<4x1x256xf32> to vector<4x256xf32>
    %309 = arith.truncf %308 : vector<4x256xf32> to vector<4x256xbf16>
    %c1_250 = arith.constant 1 : index
    %c0_251 = arith.constant 0 : index
    %c0_252 = arith.constant 0 : index
    %310 = vector.load %arg18[%c1_250, %c0_251, %c0_252] : memref<4x256x128xbf16, #tpu.memory_space<vmem>>, vector<1x256x128xbf16>
    %311 = vector.shape_cast %310 : vector<1x256x128xbf16> to vector<256x128xbf16>
    %cst_253 = arith.constant dense<0.000000e+00> : vector<4x128xf32>
    %312 = tpu.matmul %309, %311, %cst_253 {dimension_numbers = #tpu.dot_dimension_numbers<[1], [0], [0], [1], [0, 0, 1, 1], [], []>} : vector<4x256xbf16>, vector<256x128xbf16>, vector<4x128xf32> -> vector<4x128xf32>
    %313 = arith.addf %306, %312 : vector<4x128xf32>
    %c0_254 = arith.constant 0 : index
    %c2_255 = arith.constant 2 : index
    %c0_256 = arith.constant 0 : index
    %314 = vector.load %arg25[%c0_254, %c2_255, %c0_256] : memref<4x4x256xf32, #tpu.memory_space<vmem>>, vector<4x1x256xf32>
    %315 = vector.shape_cast %314 : vector<4x1x256xf32> to vector<4x256xf32>
    %316 = arith.truncf %315 : vector<4x256xf32> to vector<4x256xbf16>
    %c2_257 = arith.constant 2 : index
    %c0_258 = arith.constant 0 : index
    %c0_259 = arith.constant 0 : index
    %317 = vector.load %arg18[%c2_257, %c0_258, %c0_259] : memref<4x256x128xbf16, #tpu.memory_space<vmem>>, vector<1x256x128xbf16>
    %318 = vector.shape_cast %317 : vector<1x256x128xbf16> to vector<256x128xbf16>
    %cst_260 = arith.constant dense<0.000000e+00> : vector<4x128xf32>
    %319 = tpu.matmul %316, %318, %cst_260 {dimension_numbers = #tpu.dot_dimension_numbers<[1], [0], [0], [1], [0, 0, 1, 1], [], []>} : vector<4x256xbf16>, vector<256x128xbf16>, vector<4x128xf32> -> vector<4x128xf32>
    %320 = arith.addf %313, %319 : vector<4x128xf32>
    %c0_261 = arith.constant 0 : index
    %c3_262 = arith.constant 3 : index
    %c0_263 = arith.constant 0 : index
    %321 = vector.load %arg25[%c0_261, %c3_262, %c0_263] : memref<4x4x256xf32, #tpu.memory_space<vmem>>, vector<4x1x256xf32>
    %322 = vector.shape_cast %321 : vector<4x1x256xf32> to vector<4x256xf32>
    %323 = arith.truncf %322 : vector<4x256xf32> to vector<4x256xbf16>
    %c3_264 = arith.constant 3 : index
    %c0_265 = arith.constant 0 : index
    %c0_266 = arith.constant 0 : index
    %324 = vector.load %arg18[%c3_264, %c0_265, %c0_266] : memref<4x256x128xbf16, #tpu.memory_space<vmem>>, vector<1x256x128xbf16>
    %325 = vector.shape_cast %324 : vector<1x256x128xbf16> to vector<256x128xbf16>
    %cst_267 = arith.constant dense<0.000000e+00> : vector<4x128xf32>
    %326 = tpu.matmul %323, %325, %cst_267 {dimension_numbers = #tpu.dot_dimension_numbers<[1], [0], [0], [1], [0, 0, 1, 1], [], []>} : vector<4x256xbf16>, vector<256x128xbf16>, vector<4x128xf32> -> vector<4x128xf32>
    %327 = arith.addf %320, %326 : vector<4x128xf32>
    %c0_268 = arith.constant 0 : index
    %c0_269 = arith.constant 0 : index
    %328 = vector.load %arg20[%c0_268, %c0_269] : memref<4x128xf32, #tpu.memory_space<vmem>>, vector<4x128xf32>
    tpu.vector_store %arg20[%c0_268, %c0_269], %327 {strides = array<i32>} : memref<4x128xf32, #tpu.memory_space<vmem>>, vector<4x128xf32>,
    return
  }
  func.func @transform_0(%arg0: i32) -> (i32, i32, i32) {
    %c0_i32 = arith.constant 0 : i32
    %c0_i32_0 = arith.constant 0 : i32
    %c0_i32_1 = arith.constant 0 : i32
    return %arg0, %c0_i32, %c0_i32_0 : i32, i32, i32
  }
  func.func @transform_1(%arg0: i32) -> (i32, i32, i32) {
    %c0_i32 = arith.constant 0 : i32
    %c0_i32_0 = arith.constant 0 : i32
    %c0_i32_1 = arith.constant 0 : i32
    %c0_i32_2 = arith.constant 0 : i32
    return %c0_i32, %c0_i32_0, %c0_i32_1 : i32, i32, i32
  }
  func.func @transform_2(%arg0: i32) -> (i32, i32) {
    %c0_i32 = arith.constant 0 : i32
    %c0_i32_0 = arith.constant 0 : i32
    %c0_i32_1 = arith.constant 0 : i32
    return %c0_i32, %c0_i32_0 : i32, i32
  }
  func.func @transform_3(%arg0: i32) -> (i32, i32) {
    %c0_i32 = arith.constant 0 : i32
    %c0_i32_0 = arith.constant 0 : i32
    %c0_i32_1 = arith.constant 0 : i32
    return %c0_i32, %c0_i32_0 : i32, i32
  }
  func.func @transform_4(%arg0: i32) -> (i32, i32) {
    %c0_i32 = arith.constant 0 : i32
    %c0_i32_0 = arith.constant 0 : i32
    %c0_i32_1 = arith.constant 0 : i32
    return %c0_i32, %c0_i32_0 : i32, i32
  }
  func.func @transform_5(%arg0: i32) -> (i32, i32, i32) {
    %c0_i32 = arith.constant 0 : i32
    %c0_i32_0 = arith.constant 0 : i32
    %c0_i32_1 = arith.constant 0 : i32
    %c0_i32_2 = arith.constant 0 : i32
    return %c0_i32, %c0_i32_0, %c0_i32_1 : i32, i32, i32
  }
  func.func @transform_6(%arg0: i32) -> (i32, i32) {
    %c0_i32 = arith.constant 0 : i32
    %c0_i32_0 = arith.constant 0 : i32
    %c0_i32_1 = arith.constant 0 : i32
    return %c0_i32, %c0_i32_0 : i32, i32
  }
  func.func @transform_7(%arg0: i32) -> (i32, i32) {
    %c0_i32 = arith.constant 0 : i32
    %c0_i32_0 = arith.constant 0 : i32
    %c0_i32_1 = arith.constant 0 : i32
    return %c0_i32, %c0_i32_0 : i32, i32
  }
  func.func @transform_8(%arg0: i32) -> (i32, i32) {
    %c0_i32 = arith.constant 0 : i32
    %c0_i32_0 = arith.constant 0 : i32
    %c0_i32_1 = arith.constant 0 : i32
    return %c0_i32, %c0_i32_0 : i32, i32
  }
  func.func @transform_9(%arg0: i32) -> (i32, i32, i32) {
    %c0_i32 = arith.constant 0 : i32
    %c0_i32_0 = arith.constant 0 : i32
    %c0_i32_1 = arith.constant 0 : i32
    %c0_i32_2 = arith.constant 0 : i32
    return %c0_i32, %c0_i32_0, %c0_i32_1 : i32, i32, i32
  }
  func.func @transform_10(%arg0: i32) -> (i32, i32) {
    %c0_i32 = arith.constant 0 : i32
    %c0_i32_0 = arith.constant 0 : i32
    %c0_i32_1 = arith.constant 0 : i32
    return %c0_i32, %c0_i32_0 : i32, i32
  }
  func.func @transform_11(%arg0: i32) -> (i32, i32) {
    %c0_i32 = arith.constant 0 : i32
    %c0_i32_0 = arith.constant 0 : i32
    %c0_i32_1 = arith.constant 0 : i32
    return %c0_i32, %c0_i32_0 : i32, i32
  }
  func.func @transform_12(%arg0: i32) -> (i32, i32) {
    %c0_i32 = arith.constant 0 : i32
    %c0_i32_0 = arith.constant 0 : i32
    %c0_i32_1 = arith.constant 0 : i32
    return %c0_i32, %c0_i32_0 : i32, i32
  }
  func.func @transform_13(%arg0: i32) -> (i32, i32, i32) {
    %c0_i32 = arith.constant 0 : i32
    %c0_i32_0 = arith.constant 0 : i32
    %c0_i32_1 = arith.constant 0 : i32
    %c0_i32_2 = arith.constant 0 : i32
    return %c0_i32, %c0_i32_0, %c0_i32_1 : i32, i32, i32
  }
  func.func @transform_14(%arg0: i32) -> (i32, i32) {
    %c0_i32 = arith.constant 0 : i32
    %c0_i32_0 = arith.constant 0 : i32
    %c0_i32_1 = arith.constant 0 : i32
    return %c0_i32, %c0_i32_0 : i32, i32
  }
  func.func @transform_15(%arg0: i32) -> (i32, i32) {
    %c0_i32 = arith.constant 0 : i32
    %c0_i32_0 = arith.constant 0 : i32
    %c0_i32_1 = arith.constant 0 : i32
    return %c0_i32, %c0_i32_0 : i32, i32
  }
  func.func @transform_16(%arg0: i32) -> (i32, i32) {
    %c0_i32 = arith.constant 0 : i32
    %c0_i32_0 = arith.constant 0 : i32
    %c0_i32_1 = arith.constant 0 : i32
    return %c0_i32, %c0_i32_0 : i32, i32
  }
  func.func @transform_17(%arg0: i32) -> (i32, i32, i32) {
    %c0_i32 = arith.constant 0 : i32
    %c0_i32_0 = arith.constant 0 : i32
    %c0_i32_1 = arith.constant 0 : i32
    %c0_i32_2 = arith.constant 0 : i32
    return %c0_i32, %c0_i32_0, %c0_i32_1 : i32, i32, i32
  }
  func.func @transform_18(%arg0: i32) -> (i32, i32) {
    %c0_i32 = arith.constant 0 : i32
    %c0_i32_0 = arith.constant 0 : i32
    %c0_i32_1 = arith.constant 0 : i32
    return %c0_i32, %c0_i32_0 : i32, i32
  }
  func.func @transform_19(%arg0: i32) -> (i32, i32) {
    %c0_i32 = arith.constant 0 : i32
    %c0_i32_0 = arith.constant 0 : i32
    return %arg0, %c0_i32 : i32, i32
  }
}

</mosaic_0001>

<llo_original>
// kernel: tpu_custom_call.1
$region0: #{tpu_custom_call.1}
  #allocation0 [shape = 'u32[]', space=smem, size = 0x4, offset = 0x4, fixed_abs, tag = 'smem constant byte address 0x4 - core index']
  #allocation1 [shape = 'u32[72,128]{1,0:T(1,128)}', space=vmem, size = 0x9000, scoped, tag = 'internal scratch']
  #allocation2 [shape = 'f32[4,68,1]{2,1,0:T(8,128)}', space=vmem, size = 0x24000, scoped, tag = 'scratch operand']
  #allocation3 [shape = 'f32[4,36,64]{2,1,0:T(8,128)}', space=vmem, size = 0x14000, scoped, tag = 'scratch operand']
  #allocation4 [shape = 'f32[4,20,64]{2,1,0:T(8,128)}', space=vmem, size = 0xc000, scoped, tag = 'scratch operand']
  #allocation5 [shape = 'f32[4,12,128]{2,1,0:T(8,128)}', space=vmem, size = 0x8000, scoped, tag = 'scratch operand']
  #allocation6 [shape = 'f32[4,4,256]{2,1,0:T(4,128)}', space=vmem, size = 0x4000, scoped, tag = 'scratch operand']
  %s0 = inlined_call_operand.vmem [shape: f32[4,64,1], index: 0, kind: input, shape index: {}]
  %s1 = inlined_call_operand.vmem [shape: bf16[5,1,64], index: 1, kind: input, shape index: {}]
  %s2 = inlined_call_operand.vmem [shape: f32[1,64], index: 2, kind: input, shape index: {}]
  %s3 = inlined_call_operand.vmem [shape: f32[1,64], index: 3, kind: input, shape index: {}]
  %s4 = inlined_call_operand.vmem [shape: f32[1,64], index: 4, kind: input, shape index: {}]
  %s5 = inlined_call_operand.vmem [shape: bf16[5,64,64], index: 5, kind: input, shape index: {}]
  %s6 = inlined_call_operand.vmem [shape: f32[1,64], index: 6, kind: input, shape index: {}]
  %s7 = inlined_call_operand.vmem [shape: f32[1,64], index: 7, kind: input, shape index: {}]
  %s8 = inlined_call_operand.vmem [shape: f32[1,64], index: 8, kind: input, shape index: {}]
  %s9 = inlined_call_operand.hbm [shape: bf16[5,64,128], index: 9, kind: input, shape index: {}]
  %s10 = inlined_call_operand.vmem [shape: f32[1,128], index: 10, kind: input, shape index: {}]
  %s11 = inlined_call_operand.vmem [shape: f32[1,128], index: 11, kind: input, shape index: {}]
  %s12 = inlined_call_operand.vmem [shape: f32[1,128], index: 12, kind: input, shape index: {}]
  %s13 = inlined_call_operand.hbm [shape: bf16[5,128,256], index: 13, kind: input, shape index: {}]
  %s14 = inlined_call_operand.vmem [shape: f32[1,256], index: 14, kind: input, shape index: {}]
  %s15 = inlined_call_operand.vmem [shape: f32[1,256], index: 15, kind: input, shape index: {}]
  %s16 = inlined_call_operand.vmem [shape: f32[1,256], index: 16, kind: input, shape index: {}]
  %s17 = inlined_call_operand.hbm [shape: bf16[4,256,128], index: 17, kind: input, shape index: {}]
  %s18 = inlined_call_operand.vmem [shape: f32[1,128], index: 18, kind: input, shape index: {}]
  %s19 = inlined_call_operand.hbm [shape: f32[4,128], index: 19, kind: output, shape index: {}]
  %s20 = sld [smem:[#allocation0]]
  $region98: #{tpu_custom_call.1} parent=0
    _
  %s22 = ssub.s32 1, %s20
  %s23 = scalar_select 0, %s22, %s20
  $region1: #{tpu_custom_call.1} parent=0
    #allocation7 [shape = 'u8[81920]{0}', space=vmem, size = 0x14000, scoped, tag = 'input window, operand 9, single buffered']
    #allocation8 [shape = 's32[1]{0}', space=sflag, size = 0x4, scoped, tag = 'scoped memory for tpu_custom_call.1']
    #allocation9 [shape = 's32[1]{0}', space=sflag, size = 0x4, scoped, tag = 'scoped memory for tpu_custom_call.1']
    #allocation10 [shape = 'u8[327680]{0}', space=vmem, size = 0x50000, scoped, tag = 'input window, operand 13, single buffered']
    #allocation11 [shape = 's32[1]{0}', space=sflag, size = 0x4, scoped, tag = 'scoped memory for tpu_custom_call.1']
    #allocation12 [shape = 'u8[262144]{0}', space=vmem, size = 0x40000, scoped, tag = 'input window, operand 17, single buffered']
    #allocation13 [shape = 'u8[2048]{0}', space=vmem, size = 0x800, scoped, tag = 'output window, operand 0, single buffered']
    %24 = vsyncpa [#allocation8], 0
    %25 = vsyncpa [#allocation11], 0
    %26 = vsyncpa [#allocation9], 0
    // Predicated region
    $region2: #{tpu_custom_call.1} parent=1 // pred_check
      _
    $region3: #{tpu_custom_call.1} parent=1 // pred_check_branch
      %28 = sbr.rel (0) target = $region5
    $region4: #{tpu_custom_call.1} parent=1 // pred_region
      _
    $region5: #{tpu_custom_call.1} parent=1 // pred_fallthru
      _
    // Predicated region
    $region6: #{tpu_custom_call.1} parent=1 // pred_check
      _
    $region7: #{tpu_custom_call.1} parent=1 // pred_check_branch
      %30 = sbr.rel (0) target = $region9
    $region8: #{tpu_custom_call.1} parent=1 // pred_region
      _
    $region9: #{tpu_custom_call.1} parent=1 // pred_fallthru
      _
    // Predicated region
    $region10: #{tpu_custom_call.1} parent=1 // pred_check
      _
    $region11: #{tpu_custom_call.1} parent=1 // pred_check_branch
      %32 = sbr.rel (0) target = $region13
    $region12: #{tpu_custom_call.1} parent=1 // pred_region
      _
    $region13: #{tpu_custom_call.1} parent=1 // pred_fallthru
      _
    // Predicated region
    $region14: #{tpu_custom_call.1} parent=1 // pred_check
      _
    $region15: #{tpu_custom_call.1} parent=1 // pred_check_branch
      %34 = sbr.rel (0) target = $region17
    $region16: #{tpu_custom_call.1} parent=1 // pred_region
      _
    $region17: #{tpu_custom_call.1} parent=1 // pred_fallthru
      _
    // Predicated region
    $region18: #{tpu_custom_call.1} parent=1 // pred_check
      _
    $region19: #{tpu_custom_call.1} parent=1 // pred_check_branch
      %36 = sbr.rel (0) target = $region21
    $region20: #{tpu_custom_call.1} parent=1 // pred_region
      _
    $region21: #{tpu_custom_call.1} parent=1 // pred_fallthru
      _
    // Predicated region
    $region22: #{tpu_custom_call.1} parent=1 // pred_check
      _
    $region23: #{tpu_custom_call.1} parent=1 // pred_check_branch
      %38 = sbr.rel (0) target = $region25
    $region24: #{tpu_custom_call.1} parent=1 // pred_region
      _
    $region25: #{tpu_custom_call.1} parent=1 // pred_fallthru
      _
    // Predicated region
    $region26: #{tpu_custom_call.1} parent=1 // pred_check
      _
    $region27: #{tpu_custom_call.1} parent=1 // pred_check_branch
      %40 = sbr.rel (0) target = $region29
    $region28: #{tpu_custom_call.1} parent=1 // pred_region
      _
    $region29: #{tpu_custom_call.1} parent=1 // pred_fallthru
      _
    // Predicated region
    $region30: #{tpu_custom_call.1} parent=1 // pred_check
      _
    $region31: #{tpu_custom_call.1} parent=1 // pred_check_branch
      %42 = sbr.rel (0) target = $region33
    $region32: #{tpu_custom_call.1} parent=1 // pred_region
      _
    $region33: #{tpu_custom_call.1} parent=1 // pred_fallthru
      _
    // Predicated region
    $region34: #{tpu_custom_call.1} parent=1 // pred_check
      _
    $region35: #{tpu_custom_call.1} parent=1 // pred_check_branch
      %44 = sbr.rel (0) target = $region37
    $region36: #{tpu_custom_call.1} parent=1 // pred_region
      _
    $region37: #{tpu_custom_call.1} parent=1 // pred_fallthru
      _
    // Predicated region
    $region38: #{tpu_custom_call.1} parent=1 // pred_check
      _
    $region39: #{tpu_custom_call.1} parent=1 // pred_check_branch
      %46 = sbr.rel (0) target = $region41
    $region40: #{tpu_custom_call.1} parent=1 // pred_region
      %48 = vsyncadd [#allocation8], 0
      %s49 = sshll.u32 %s9, 4
      %s50 = int_to_ptr.hbm [resolvable:$true] %s49
      %s51 = sshll.u32 [#allocation7], 4
      %s52 = int_to_ptr.vmem [resolvable:$true] %s51
      %57 = dma.hbm_to_vmem [thread:$0]  %s50, 2560, %s52, [#allocation8], 64, 64, 4
    $region41: #{tpu_custom_call.1} parent=1 // pred_fallthru
      _
    // Predicated region
    $region42: #{tpu_custom_call.1} parent=1 // pred_check
      _
    $region43: #{tpu_custom_call.1} parent=1 // pred_check_branch
      %59 = sbr.rel (0) target = $region45
    $region44: #{tpu_custom_call.1} parent=1 // pred_region
      _
    $region45: #{tpu_custom_call.1} parent=1 // pred_fallthru
      _
    // Predicated region
    $region46: #{tpu_custom_call.1} parent=1 // pred_check
      _
    $region47: #{tpu_custom_call.1} parent=1 // pred_check_branch
      %61 = sbr.rel (0) target = $region49
    $region48: #{tpu_custom_call.1} parent=1 // pred_region
      _
    $region49: #{tpu_custom_call.1} parent=1 // pred_fallthru
      _
    // Predicated region
    $region50: #{tpu_custom_call.1} parent=1 // pred_check
      _
    $region51: #{tpu_custom_call.1} parent=1 // pred_check_branch
      %63 = sbr.rel (0) target = $region53
    $region52: #{tpu_custom_call.1} parent=1 // pred_region
      _
    $region53: #{tpu_custom_call.1} parent=1 // pred_fallthru
      _
    // Predicated region
    $region54: #{tpu_custom_call.1} parent=1 // pred_check
      _
    $region55: #{tpu_custom_call.1} parent=1 // pred_check_branch
      %65 = sbr.rel (0) target = $region57
    $region56: #{tpu_custom_call.1} parent=1 // pred_region
      %67 = vsyncadd [#allocation11], 0
      %s68 = sshll.u32 %s13, 4
      %s69 = int_to_ptr.hbm [resolvable:$true] %s68
      %s70 = sshll.u32 [#allocation10], 4
      %s71 = int_to_ptr.vmem [resolvable:$true] %s70
      %76 = dma.hbm_to_vmem [thread:$0]  %s69, 10240, %s71, [#allocation11], 128, 128, 8
    $region57: #{tpu_custom_call.1} parent=1 // pred_fallthru
      _
    // Predicated region
    $region58: #{tpu_custom_call.1} parent=1 // pred_check
      _
    $region59: #{tpu_custom_call.1} parent=1 // pred_check_branch
      %78 = sbr.rel (0) target = $region61
    $region60: #{tpu_custom_call.1} parent=1 // pred_region
      _
    $region61: #{tpu_custom_call.1} parent=1 // pred_fallthru
      _
    // Predicated region
    $region62: #{tpu_custom_call.1} parent=1 // pred_check
      _
    $region63: #{tpu_custom_call.1} parent=1 // pred_check_branch
      %80 = sbr.rel (0) target = $region65
    $region64: #{tpu_custom_call.1} parent=1 // pred_region
      _
    $region65: #{tpu_custom_call.1} parent=1 // pred_fallthru
      _
    // Predicated region
    $region66: #{tpu_custom_call.1} parent=1 // pred_check
      _
    $region67: #{tpu_custom_call.1} parent=1 // pred_check_branch
      %82 = sbr.rel (0) target = $region69
    $region68: #{tpu_custom_call.1} parent=1 // pred_region
      _
    $region69: #{tpu_custom_call.1} parent=1 // pred_fallthru
      _
    // Predicated region
    $region70: #{tpu_custom_call.1} parent=1 // pred_check
      _
    $region71: #{tpu_custom_call.1} parent=1 // pred_check_branch
      %84 = sbr.rel (0) target = $region73
    $region72: #{tpu_custom_call.1} parent=1 // pred_region
      %86 = vsyncadd [#allocation11], 0
      %s87 = sshll.u32 %s17, 4
      %s88 = int_to_ptr.hbm [resolvable:$true] %s87
      %s89 = sshll.u32 [#allocation12], 4
      %s90 = int_to_ptr.vmem [resolvable:$true] %s89
      %95 = dma.hbm_to_vmem [thread:$0]  %s88, 8192, %s90, [#allocation11], 64, 64, 4
    $region73: #{tpu_custom_call.1} parent=1 // pred_fallthru
      _
    // Predicated region
    $region74: #{tpu_custom_call.1} parent=1 // pred_check
      _
    $region75: #{tpu_custom_call.1} parent=1 // pred_check_branch
      %97 = sbr.rel (0) target = $region77
    $region76: #{tpu_custom_call.1} parent=1 // pred_region
      _
    $region77: #{tpu_custom_call.1} parent=1 // pred_fallthru
      _
    // Predicated region
    $region78: #{tpu_custom_call.1} parent=1 // pred_check
      _
    $region79: #{tpu_custom_call.1} parent=1 // pred_check_branch
      %99 = sbr.rel (0) target = $region81
    $region80: #{tpu_custom_call.1} parent=1 // pred_region
      %101 = dma.done [#allocation8], 2560
    $region81: #{tpu_custom_call.1} parent=1 // pred_fallthru
      _
    // Predicated region
    $region82: #{tpu_custom_call.1} parent=1 // pred_check
      _
    $region83: #{tpu_custom_call.1} parent=1 // pred_check_branch
      %103 = sbr.rel (0) target = $region85
    $region84: #{tpu_custom_call.1} parent=1 // pred_region
      %105 = dma.done [#allocation11], 10240
    $region85: #{tpu_custom_call.1} parent=1 // pred_fallthru
      _
    // Predicated region
    $region86: #{tpu_custom_call.1} parent=1 // pred_check
      _
    $region87: #{tpu_custom_call.1} parent=1 // pred_check_branch
      %107 = sbr.rel (0) target = $region89
    $region88: #{tpu_custom_call.1} parent=1 // pred_region
      %109 = dma.done [#allocation11], 8192
    $region89: #{tpu_custom_call.1} parent=1 // pred_fallthru
      _
    %v111 = vld [vmem:[%s0] sm:$0xff]
    %v112 = vld [vmem:[%s0 + $0x8] sm:$0xff]
    %v113 = vld [vmem:[%s0 + $0x10] sm:$0xff]
    %v114 = vld [vmem:[%s0 + $0x18] sm:$0xff]
    %v115 = vld [vmem:[%s0 + $0x20] sm:$0xff]
    %v116 = vld [vmem:[%s0 + $0x28] sm:$0xff]
    %v117 = vld [vmem:[%s0 + $0x30] sm:$0xff]
    %v118 = vld [vmem:[%s0 + $0x38] sm:$0xff]
    %v119 = vld [vmem:[%s0 + $0x40] sm:$0xff]
    %v120 = vld [vmem:[%s0 + $0x48] sm:$0xff]
    %v121 = vld [vmem:[%s0 + $0x50] sm:$0xff]
    %v122 = vld [vmem:[%s0 + $0x58] sm:$0xff]
    %v123 = vld [vmem:[%s0 + $0x60] sm:$0xff]
    %v124 = vld [vmem:[%s0 + $0x68] sm:$0xff]
    %v125 = vld [vmem:[%s0 + $0x70] sm:$0xff]
    %v126 = vld [vmem:[%s0 + $0x78] sm:$0xff]
    %v127 = vld [vmem:[%s0 + $0x80] sm:$0xff]
    %v128 = vld [vmem:[%s0 + $0x88] sm:$0xff]
    %v129 = vld [vmem:[%s0 + $0x90] sm:$0xff]
    %v130 = vld [vmem:[%s0 + $0x98] sm:$0xff]
    %v131 = vld [vmem:[%s0 + $0xa0] sm:$0xff]
    %v132 = vld [vmem:[%s0 + $0xa8] sm:$0xff]
    %v133 = vld [vmem:[%s0 + $0xb0] sm:$0xff]
    %v134 = vld [vmem:[%s0 + $0xb8] sm:$0xff]
    %v135 = vld [vmem:[%s0 + $0xc0] sm:$0xff]
    %v136 = vld [vmem:[%s0 + $0xc8] sm:$0xff]
    %v137 = vld [vmem:[%s0 + $0xd0] sm:$0xff]
    %v138 = vld [vmem:[%s0 + $0xd8] sm:$0xff]
    %v139 = vld [vmem:[%s0 + $0xe0] sm:$0xff]
    %v140 = vld [vmem:[%s0 + $0xe8] sm:$0xff]
    %v141 = vld [vmem:[%s0 + $0xf0] sm:$0xff]
    %v142 = vld [vmem:[%s0 + $0xf8] sm:$0xff]
    %vm143 = vcmask 1024
    %144 = vst.msk [vmem:[#allocation2] sm:$0x3] %vm143, 0.0
    %145 = vst.msk [vmem:[#allocation2 + $0x48] sm:$0x3] %vm143, 0.0
    %146 = vst.msk [vmem:[#allocation2 + $0x90] sm:$0x3] %vm143, 0.0
    %147 = vst.msk [vmem:[#allocation2 + $0xd8] sm:$0x3] %vm143, 0.0
    %148 = vst.msk [vmem:[#allocation2 + $0x42] sm:$0x3] %vm143, 0.0
    %149 = vst.msk [vmem:[#allocation2 + $0x8a] sm:$0x3] %vm143, 0.0
    %150 = vst.msk [vmem:[#allocation2 + $0xd2] sm:$0x3] %vm143, 0.0
    %151 = vst.msk [vmem:[#allocation2 + $0x11a] sm:$0x3] %vm143, 0.0
    %vm152 = vcmask 7168
    %153 = vst.msk [vmem:[#allocation2 + $0x2] sm:$0xff] %vm152, %v111
    %154 = vst.msk [vmem:[#allocation2 + $0xa] sm:$0xff] %vm152, %v112
    %155 = vst.msk [vmem:[#allocation2 + $0x12] sm:$0xff] %vm152, %v113
    %156 = vst.msk [vmem:[#allocation2 + $0x1a] sm:$0xff] %vm152, %v114
    %157 = vst.msk [vmem:[#allocation2 + $0x22] sm:$0xff] %vm152, %v115
    %158 = vst.msk [vmem:[#allocation2 + $0x2a] sm:$0xff] %vm152, %v116
    %159 = vst.msk [vmem:[#allocation2 + $0x32] sm:$0xff] %vm152, %v117
    %160 = vst.msk [vmem:[#allocation2 + $0x3a] sm:$0xff] %vm152, %v118
    %161 = vst.msk [vmem:[#allocation2 + $0x4a] sm:$0xff] %vm152, %v119
    %162 = vst.msk [vmem:[#allocation2 + $0x52] sm:$0xff] %vm152, %v120
    %163 = vst.msk [vmem:[#allocation2 + $0x5a] sm:$0xff] %vm152, %v121
    %164 = vst.msk [vmem:[#allocation2 + $0x62] sm:$0xff] %vm152, %v122
    %165 = vst.msk [vmem:[#allocation2 + $0x6a] sm:$0xff] %vm152, %v123
    %166 = vst.msk [vmem:[#allocation2 + $0x72] sm:$0xff] %vm152, %v124
    %167 = vst.msk [vmem:[#allocation2 + $0x7a] sm:$0xff] %vm152, %v125
    %168 = vst.msk [vmem:[#allocation2 + $0x82] sm:$0xff] %vm152, %v126
    %169 = vst.msk [vmem:[#allocation2 + $0x92] sm:$0xff] %vm152, %v127
    %170 = vst.msk [vmem:[#allocation2 + $0x9a] sm:$0xff] %vm152, %v128
    %171 = vst.msk [vmem:[#allocation2 + $0xa2] sm:$0xff] %vm152, %v129
    %172 = vst.msk [vmem:[#allocation2 + $0xaa] sm:$0xff] %vm152, %v130
    %173 = vst.msk [vmem:[#allocation2 + $0xb2] sm:$0xff] %vm152, %v131
    %174 = vst.msk [vmem:[#allocation2 + $0xba] sm:$0xff] %vm152, %v132
    %175 = vst.msk [vmem:[#allocation2 + $0xc2] sm:$0xff] %vm152, %v133
    %176 = vst.msk [vmem:[#allocation2 + $0xca] sm:$0xff] %vm152, %v134
    %177 = vst.msk [vmem:[#allocation2 + $0xda] sm:$0xff] %vm152, %v135
    %178 = vst.msk [vmem:[#allocation2 + $0xe2] sm:$0xff] %vm152, %v136
    %179 = vst.msk [vmem:[#allocation2 + $0xea] sm:$0xff] %vm152, %v137
    %180 = vst.msk [vmem:[#allocation2 + $0xf2] sm:$0xff] %vm152, %v138
    %181 = vst.msk [vmem:[#allocation2 + $0xfa] sm:$0xff] %vm152, %v139
    %182 = vst.msk [vmem:[#allocation2 + $0x102] sm:$0xff] %vm152, %v140
    %183 = vst.msk [vmem:[#allocation2 + $0x10a] sm:$0xff] %vm152, %v141
    %184 = vst.msk [vmem:[#allocation2 + $0x112] sm:$0xff] %vm152, %v142
    %v185 = vld [vmem:[#allocation2] sm:$0xff]
    %v186 = vld [vmem:[#allocation2 + $0x8] sm:$0xff]
    %v187 = vld [vmem:[#allocation2 + $0x10] sm:$0xff]
    %v188 = vld [vmem:[#allocation2 + $0x18] sm:$0xff]
    %v189 = vld [vmem:[#allocation2 + $0x20] sm:$0xff]
    %v190 = vld [vmem:[#allocation2 + $0x28] sm:$0xff]
    %v191 = vld [vmem:[#allocation2 + $0x30] sm:$0xff]
    %v192 = vld [vmem:[#allocation2 + $0x38] sm:$0xff]
    %v193 = vld [vmem:[#allocation2 + $0x48] sm:$0xff]
    %v194 = vld [vmem:[#allocation2 + $0x50] sm:$0xff]
    %v195 = vld [vmem:[#allocation2 + $0x58] sm:$0xff]
    %v196 = vld [vmem:[#allocation2 + $0x60] sm:$0xff]
    %v197 = vld [vmem:[#allocation2 + $0x68] sm:$0xff]
    %v198 = vld [vmem:[#allocation2 + $0x70] sm:$0xff]
    %v199 = vld [vmem:[#allocation2 + $0x78] sm:$0xff]
    %v200 = vld [vmem:[#allocation2 + $0x80] sm:$0xff]
    %v201 = vld [vmem:[#allocation2 + $0x90] sm:$0xff]
    %v202 = vld [vmem:[#allocation2 + $0x98] sm:$0xff]
    %v203 = vld [vmem:[#allocation2 + $0xa0] sm:$0xff]
    %v204 = vld [vmem:[#allocation2 + $0xa8] sm:$0xff]
    %v205 = vld [vmem:[#allocation2 + $0xb0] sm:$0xff]
    %v206 = vld [vmem:[#allocation2 + $0xb8] sm:$0xff]
    %v207 = vld [vmem:[#allocation2 + $0xc0] sm:$0xff]
    %v208 = vld [vmem:[#allocation2 + $0xc8] sm:$0xff]
    %v209 = vld [vmem:[#allocation2 + $0xd8] sm:$0xff]
    %v210 = vld [vmem:[#allocation2 + $0xe0] sm:$0xff]
    %v211 = vld [vmem:[#allocation2 + $0xe8] sm:$0xff]
    %v212 = vld [vmem:[#allocation2 + $0xf0] sm:$0xff]
    %v213 = vld [vmem:[#allocation2 + $0xf8] sm:$0xff]
    %v214 = vld [vmem:[#allocation2 + $0x100] sm:$0xff]
    %v215 = vld [vmem:[#allocation2 + $0x108] sm:$0xff]
    %v216 = vld [vmem:[#allocation2 + $0x110] sm:$0xff]
    %v217 = vld [vmem:[%s1] sm:$0x1]
    %v218 = vunpack.c.l.bf16 %v217
    %220 = vset.pattern.permute.xlu0 0
    %221 = vperm.xlu0 %220, %v185
    %v222 = vpop.permute.xlu0 %221
    %225 = vset.pattern.permute.xlu0 0
    %226 = vperm.xlu0 %225, %v186
    %v227 = vpop.permute.xlu0 %226
    %230 = vset.pattern.permute.xlu0 0
    %231 = vperm.xlu0 %230, %v187
    %v232 = vpop.permute.xlu0 %231
    %235 = vset.pattern.permute.xlu0 0
    %236 = vperm.xlu0 %235, %v188
    %v237 = vpop.permute.xlu0 %236
    %240 = vset.pattern.permute.xlu0 0
    %241 = vperm.xlu0 %240, %v189
    %v242 = vpop.permute.xlu0 %241
    %245 = vset.pattern.permute.xlu0 0
    %246 = vperm.xlu0 %245, %v190
    %v247 = vpop.permute.xlu0 %246
    %250 = vset.pattern.permute.xlu0 0
    %251 = vperm.xlu0 %250, %v191
    %v252 = vpop.permute.xlu0 %251
    %255 = vset.pattern.permute.xlu0 0
    %256 = vperm.xlu0 %255, %v192
    %v257 = vpop.permute.xlu0 %256
    %260 = vset.pattern.permute.xlu0 0
    %261 = vperm.xlu0 %260, %v193
    %v262 = vpop.permute.xlu0 %261
    %265 = vset.pattern.permute.xlu0 0
    %266 = vperm.xlu0 %265, %v194
    %v267 = vpop.permute.xlu0 %266
    %270 = vset.pattern.permute.xlu0 0
    %271 = vperm.xlu0 %270, %v195
    %v272 = vpop.permute.xlu0 %271
    %275 = vset.pattern.permute.xlu0 0
    %276 = vperm.xlu0 %275, %v196
    %v277 = vpop.permute.xlu0 %276
    %280 = vset.pattern.permute.xlu0 0
    %281 = vperm.xlu0 %280, %v197
    %v282 = vpop.permute.xlu0 %281
    %285 = vset.pattern.permute.xlu0 0
    %286 = vperm.xlu0 %285, %v198
    %v287 = vpop.permute.xlu0 %286
    %290 = vset.pattern.permute.xlu0 0
    %291 = vperm.xlu0 %290, %v199
    %v292 = vpop.permute.xlu0 %291
    %295 = vset.pattern.permute.xlu0 0
    %296 = vperm.xlu0 %295, %v200
    %v297 = vpop.permute.xlu0 %296
    %300 = vset.pattern.permute.xlu0 0
    %301 = vperm.xlu0 %300, %v201
    %v302 = vpop.permute.xlu0 %301
    %305 = vset.pattern.permute.xlu0 0
    %306 = vperm.xlu0 %305, %v202
    %v307 = vpop.permute.xlu0 %306
    %310 = vset.pattern.permute.xlu0 0
    %311 = vperm.xlu0 %310, %v203
    %v312 = vpop.permute.xlu0 %311
    %315 = vset.pattern.permute.xlu0 0
    %316 = vperm.xlu0 %315, %v204
    %v317 = vpop.permute.xlu0 %316
    %320 = vset.pattern.permute.xlu0 0
    %321 = vperm.xlu0 %320, %v205
    %v322 = vpop.permute.xlu0 %321
    %325 = vset.pattern.permute.xlu0 0
    %326 = vperm.xlu0 %325, %v206
    %v327 = vpop.permute.xlu0 %326
    %330 = vset.pattern.permute.xlu0 0
    %331 = vperm.xlu0 %330, %v207
    %v332 = vpop.permute.xlu0 %331
    %335 = vset.pattern.permute.xlu0 0
    %336 = vperm.xlu0 %335, %v208
    %v337 = vpop.permute.xlu0 %336
    %340 = vset.pattern.permute.xlu0 0
    %341 = vperm.xlu0 %340, %v209
    %v342 = vpop.permute.xlu0 %341
    %345 = vset.pattern.permute.xlu0 0
    %346 = vperm.xlu0 %345, %v210
    %v347 = vpop.permute.xlu0 %346
    %350 = vset.pattern.permute.xlu0 0
    %351 = vperm.xlu0 %350, %v211
    %v352 = vpop.permute.xlu0 %351
    %355 = vset.pattern.permute.xlu0 0
    %356 = vperm.xlu0 %355, %v212
    %v357 = vpop.permute.xlu0 %356
    %360 = vset.pattern.permute.xlu0 0
    %361 = vperm.xlu0 %360, %v213
    %v362 = vpop.permute.xlu0 %361
    %365 = vset.pattern.permute.xlu0 0
    %366 = vperm.xlu0 %365, %v214
    %v367 = vpop.permute.xlu0 %366
    %370 = vset.pattern.permute.xlu0 0
    %371 = vperm.xlu0 %370, %v215
    %v372 = vpop.permute.xlu0 %371
    %375 = vset.pattern.permute.xlu0 0
    %376 = vperm.xlu0 %375, %v216
    %v377 = vpop.permute.xlu0 %376
    %v379 = vperm.slane %v218, 0
    %v380 = vmul.f32 %v222, %v379
    %v381 = vmul.f32 %v227, %v379
    %v382 = vmul.f32 %v232, %v379
    %v383 = vmul.f32 %v237, %v379
    %v384 = vmul.f32 %v242, %v379
    %v385 = vmul.f32 %v247, %v379
    %v386 = vmul.f32 %v252, %v379
    %v387 = vmul.f32 %v257, %v379
    %v388 = vmul.f32 %v262, %v379
    %v389 = vmul.f32 %v267, %v379
    %v390 = vmul.f32 %v272, %v379
    %v391 = vmul.f32 %v277, %v379
    %v392 = vmul.f32 %v282, %v379
    %v393 = vmul.f32 %v287, %v379
    %v394 = vmul.f32 %v292, %v379
    %v395 = vmul.f32 %v297, %v379
    %v396 = vmul.f32 %v302, %v379
    %v397 = vmul.f32 %v307, %v379
    %v398 = vmul.f32 %v312, %v379
    %v399 = vmul.f32 %v317, %v379
    %v400 = vmul.f32 %v322, %v379
    %v401 = vmul.f32 %v327, %v379
    %v402 = vmul.f32 %v332, %v379
    %v403 = vmul.f32 %v337, %v379
    %v404 = vmul.f32 %v342, %v379
    %v405 = vmul.f32 %v347, %v379
    %v406 = vmul.f32 %v352, %v379
    %v407 = vmul.f32 %v357, %v379
    %v408 = vmul.f32 %v362, %v379
    %v409 = vmul.f32 %v367, %v379
    %v410 = vmul.f32 %v372, %v379
    %v411 = vmul.f32 %v377, %v379
    %v412 = vadd.f32 %v380, 0.0
    %v413 = vadd.f32 %v381, 0.0
    %v414 = vadd.f32 %v382, 0.0
    %v415 = vadd.f32 %v383, 0.0
    %v416 = vadd.f32 %v384, 0.0
    %v417 = vadd.f32 %v385, 0.0
    %v418 = vadd.f32 %v386, 0.0
    %v419 = vadd.f32 %v387, 0.0
    %v420 = vadd.f32 %v388, 0.0
    %v421 = vadd.f32 %v389, 0.0
    %v422 = vadd.f32 %v390, 0.0
    %v423 = vadd.f32 %v391, 0.0
    %v424 = vadd.f32 %v392, 0.0
    %v425 = vadd.f32 %v393, 0.0
    %v426 = vadd.f32 %v394, 0.0
    %v427 = vadd.f32 %v395, 0.0
    %v428 = vadd.f32 %v396, 0.0
    %v429 = vadd.f32 %v397, 0.0
    %v430 = vadd.f32 %v398, 0.0
    %v431 = vadd.f32 %v399, 0.0
    %v432 = vadd.f32 %v400, 0.0
    %v433 = vadd.f32 %v401, 0.0
    %v434 = vadd.f32 %v402, 0.0
    %v435 = vadd.f32 %v403, 0.0
    %v436 = vadd.f32 %v404, 0.0
    %v437 = vadd.f32 %v405, 0.0
    %v438 = vadd.f32 %v406, 0.0
    %v439 = vadd.f32 %v407, 0.0
    %v440 = vadd.f32 %v408, 0.0
    %v441 = vadd.f32 %v409, 0.0
    %v442 = vadd.f32 %v410, 0.0
    %v443 = vadd.f32 %v411, 0.0
    %v444 = vld [vmem:[#allocation2 + $0x1] sm:$0xff]
    %v445 = vld [vmem:[#allocation2 + $0x9] sm:$0xff]
    %v446 = vld [vmem:[#allocation2 + $0x11] sm:$0xff]
    %v447 = vld [vmem:[#allocation2 + $0x19] sm:$0xff]
    %v448 = vld [vmem:[#allocation2 + $0x21] sm:$0xff]
    %v449 = vld [vmem:[#allocation2 + $0x29] sm:$0xff]
    %v450 = vld [vmem:[#allocation2 + $0x31] sm:$0xff]
    %v451 = vld [vmem:[#allocation2 + $0x39] sm:$0xff]
    %v452 = vld [vmem:[#allocation2 + $0x49] sm:$0xff]
    %v453 = vld [vmem:[#allocation2 + $0x51] sm:$0xff]
    %v454 = vld [vmem:[#allocation2 + $0x59] sm:$0xff]
    %v455 = vld [vmem:[#allocation2 + $0x61] sm:$0xff]
    %v456 = vld [vmem:[#allocation2 + $0x69] sm:$0xff]
    %v457 = vld [vmem:[#allocation2 + $0x71] sm:$0xff]
    %v458 = vld [vmem:[#allocation2 + $0x79] sm:$0xff]
    %v459 = vld [vmem:[#allocation2 + $0x81] sm:$0xff]
    %v460 = vld [vmem:[#allocation2 + $0x91] sm:$0xff]
    %v461 = vld [vmem:[#allocation2 + $0x99] sm:$0xff]
    %v462 = vld [vmem:[#allocation2 + $0xa1] sm:$0xff]
    %v463 = vld [vmem:[#allocation2 + $0xa9] sm:$0xff]
    %v464 = vld [vmem:[#allocation2 + $0xb1] sm:$0xff]
    %v465 = vld [vmem:[#allocation2 + $0xb9] sm:$0xff]
    %v466 = vld [vmem:[#allocation2 + $0xc1] sm:$0xff]
    %v467 = vld [vmem:[#allocation2 + $0xc9] sm:$0xff]
    %v468 = vld [vmem:[#allocation2 + $0xd9] sm:$0xff]
    %v469 = vld [vmem:[#allocation2 + $0xe1] sm:$0xff]
    %v470 = vld [vmem:[#allocation2 + $0xe9] sm:$0xff]
    %v471 = vld [vmem:[#allocation2 + $0xf1] sm:$0xff]
    %v472 = vld [vmem:[#allocation2 + $0xf9] sm:$0xff]
    %v473 = vld [vmem:[#allocation2 + $0x101] sm:$0xff]
    %v474 = vld [vmem:[#allocation2 + $0x109] sm:$0xff]
    %v475 = vld [vmem:[#allocation2 + $0x111] sm:$0xff]
    %s476 = scalar_lea.vmem %s1, 1
    %v477 = vld [vmem:[%s476] sm:$0x1]
    %v478 = vunpack.c.l.bf16 %v477
    %480 = vset.pattern.permute.xlu0 0
    %481 = vperm.xlu0 %480, %v444
    %v482 = vpop.permute.xlu0 %481
    %485 = vset.pattern.permute.xlu0 0
    %486 = vperm.xlu0 %485, %v445
    %v487 = vpop.permute.xlu0 %486
    %490 = vset.pattern.permute.xlu0 0
    %491 = vperm.xlu0 %490, %v446
    %v492 = vpop.permute.xlu0 %491
    %495 = vset.pattern.permute.xlu0 0
    %496 = vperm.xlu0 %495, %v447
    %v497 = vpop.permute.xlu0 %496
    %500 = vset.pattern.permute.xlu0 0
    %501 = vperm.xlu0 %500, %v448
    %v502 = vpop.permute.xlu0 %501
    %505 = vset.pattern.permute.xlu0 0
    %506 = vperm.xlu0 %505, %v449
    %v507 = vpop.permute.xlu0 %506
    %510 = vset.pattern.permute.xlu0 0
    %511 = vperm.xlu0 %510, %v450
    %v512 = vpop.permute.xlu0 %511
    %515 = vset.pattern.permute.xlu0 0
    %516 = vperm.xlu0 %515, %v451
    %v517 = vpop.permute.xlu0 %516
    %520 = vset.pattern.permute.xlu0 0
    %521 = vperm.xlu0 %520, %v452
    %v522 = vpop.permute.xlu0 %521
    %525 = vset.pattern.permute.xlu0 0
    %526 = vperm.xlu0 %525, %v453
    %v527 = vpop.permute.xlu0 %526
    %530 = vset.pattern.permute.xlu0 0
    %531 = vperm.xlu0 %530, %v454
    %v532 = vpop.permute.xlu0 %531
    %535 = vset.pattern.permute.xlu0 0
    %536 = vperm.xlu0 %535, %v455
    %v537 = vpop.permute.xlu0 %536
    %540 = vset.pattern.permute.xlu0 0
    %541 = vperm.xlu0 %540, %v456
    %v542 = vpop.permute.xlu0 %541
    %545 = vset.pattern.permute.xlu0 0
    %546 = vperm.xlu0 %545, %v457
    %v547 = vpop.permute.xlu0 %546
    %550 = vset.pattern.permute.xlu0 0
    %551 = vperm.xlu0 %550, %v458
    %v552 = vpop.permute.xlu0 %551
    %555 = vset.pattern.permute.xlu0 0
    %556 = vperm.xlu0 %555, %v459
    %v557 = vpop.permute.xlu0 %556
    %560 = vset.pattern.permute.xlu0 0
    %561 = vperm.xlu0 %560, %v460
    %v562 = vpop.permute.xlu0 %561
    %565 = vset.pattern.permute.xlu0 0
    %566 = vperm.xlu0 %565, %v461
    %v567 = vpop.permute.xlu0 %566
    %570 = vset.pattern.permute.xlu0 0
    %571 = vperm.xlu0 %570, %v462
    %v572 = vpop.permute.xlu0 %571
    %575 = vset.pattern.permute.xlu0 0
    %576 = vperm.xlu0 %575, %v463
    %v577 = vpop.permute.xlu0 %576
    %580 = vset.pattern.permute.xlu0 0
    %581 = vperm.xlu0 %580, %v464
    %v582 = vpop.permute.xlu0 %581
    %585 = vset.pattern.permute.xlu0 0
    %586 = vperm.xlu0 %585, %v465
    %v587 = vpop.permute.xlu0 %586
    %590 = vset.pattern.permute.xlu0 0
    %591 = vperm.xlu0 %590, %v466
    %v592 = vpop.permute.xlu0 %591
    %595 = vset.pattern.permute.xlu0 0
    %596 = vperm.xlu0 %595, %v467
    %v597 = vpop.permute.xlu0 %596
    %600 = vset.pattern.permute.xlu0 0
    %601 = vperm.xlu0 %600, %v468
    %v602 = vpop.permute.xlu0 %601
    %605 = vset.pattern.permute.xlu0 0
    %606 = vperm.xlu0 %605, %v469
    %v607 = vpop.permute.xlu0 %606
    %610 = vset.pattern.permute.xlu0 0
    %611 = vperm.xlu0 %610, %v470
    %v612 = vpop.permute.xlu0 %611
    %615 = vset.pattern.permute.xlu0 0
    %616 = vperm.xlu0 %615, %v471
    %v617 = vpop.permute.xlu0 %616
    %620 = vset.pattern.permute.xlu0 0
    %621 = vperm.xlu0 %620, %v472
    %v622 = vpop.permute.xlu0 %621
    %625 = vset.pattern.permute.xlu0 0
    %626 = vperm.xlu0 %625, %v473
    %v627 = vpop.permute.xlu0 %626
    %630 = vset.pattern.permute.xlu0 0
    %631 = vperm.xlu0 %630, %v474
    %v632 = vpop.permute.xlu0 %631
    %635 = vset.pattern.permute.xlu0 0
    %636 = vperm.xlu0 %635, %v475
    %v637 = vpop.permute.xlu0 %636
    %v639 = vperm.slane %v478, 0
    %v640 = vmul.f32 %v482, %v639
    %v641 = vmul.f32 %v487, %v639
    %v642 = vmul.f32 %v492, %v639
    %v643 = vmul.f32 %v497, %v639
    %v644 = vmul.f32 %v502, %v639
    %v645 = vmul.f32 %v507, %v639
    %v646 = vmul.f32 %v512, %v639
    %v647 = vmul.f32 %v517, %v639
    %v648 = vmul.f32 %v522, %v639
    %v649 = vmul.f32 %v527, %v639
    %v650 = vmul.f32 %v532, %v639
    %v651 = vmul.f32 %v537, %v639
    %v652 = vmul.f32 %v542, %v639
    %v653 = vmul.f32 %v547, %v639
    %v654 = vmul.f32 %v552, %v639
    %v655 = vmul.f32 %v557, %v639
    %v656 = vmul.f32 %v562, %v639
    %v657 = vmul.f32 %v567, %v639
    %v658 = vmul.f32 %v572, %v639
    %v659 = vmul.f32 %v577, %v639
    %v660 = vmul.f32 %v582, %v639
    %v661 = vmul.f32 %v587, %v639
    %v662 = vmul.f32 %v592, %v639
    %v663 = vmul.f32 %v597, %v639
    %v664 = vmul.f32 %v602, %v639
    %v665 = vmul.f32 %v607, %v639
    %v666 = vmul.f32 %v612, %v639
    %v667 = vmul.f32 %v617, %v639
    %v668 = vmul.f32 %v622, %v639
    %v669 = vmul.f32 %v627, %v639
    %v670 = vmul.f32 %v632, %v639
    %v671 = vmul.f32 %v637, %v639
    %v672 = vadd.f32 %v412, %v640
    %v673 = vadd.f32 %v413, %v641
    %v674 = vadd.f32 %v414, %v642
    %v675 = vadd.f32 %v415, %v643
    %v676 = vadd.f32 %v416, %v644
    %v677 = vadd.f32 %v417, %v645
    %v678 = vadd.f32 %v418, %v646
    %v679 = vadd.f32 %v419, %v647
    %v680 = vadd.f32 %v420, %v648
    %v681 = vadd.f32 %v421, %v649
    %v682 = vadd.f32 %v422, %v650
    %v683 = vadd.f32 %v423, %v651
    %v684 = vadd.f32 %v424, %v652
    %v685 = vadd.f32 %v425, %v653
    %v686 = vadd.f32 %v426, %v654
    %v687 = vadd.f32 %v427, %v655
    %v688 = vadd.f32 %v428, %v656
    %v689 = vadd.f32 %v429, %v657
    %v690 = vadd.f32 %v430, %v658
    %v691 = vadd.f32 %v431, %v659
    %v692 = vadd.f32 %v432, %v660
    %v693 = vadd.f32 %v433, %v661
    %v694 = vadd.f32 %v434, %v662
    %v695 = vadd.f32 %v435, %v663
    %v696 = vadd.f32 %v436, %v664
    %v697 = vadd.f32 %v437, %v665
    %v698 = vadd.f32 %v438, %v666
    %v699 = vadd.f32 %v439, %v667
    %v700 = vadd.f32 %v440, %v668
    %v701 = vadd.f32 %v441, %v669
    %v702 = vadd.f32 %v442, %v670
    %v703 = vadd.f32 %v443, %v671
    %v704 = vld [vmem:[#allocation2 + $0x2] sm:$0xff]
    %v705 = vld [vmem:[#allocation2 + $0xa] sm:$0xff]
    %v706 = vld [vmem:[#allocation2 + $0x12] sm:$0xff]
    %v707 = vld [vmem:[#allocation2 + $0x1a] sm:$0xff]
    %v708 = vld [vmem:[#allocation2 + $0x22] sm:$0xff]
    %v709 = vld [vmem:[#allocation2 + $0x2a] sm:$0xff]
    %v710 = vld [vmem:[#allocation2 + $0x32] sm:$0xff]
    %v711 = vld [vmem:[#allocation2 + $0x3a] sm:$0xff]
    %v712 = vld [vmem:[#allocation2 + $0x4a] sm:$0xff]
    %v713 = vld [vmem:[#allocation2 + $0x52] sm:$0xff]
    %v714 = vld [vmem:[#allocation2 + $0x5a] sm:$0xff]
    %v715 = vld [vmem:[#allocation2 + $0x62] sm:$0xff]
    %v716 = vld [vmem:[#allocation2 + $0x6a] sm:$0xff]
    %v717 = vld [vmem:[#allocation2 + $0x72] sm:$0xff]
    %v718 = vld [vmem:[#allocation2 + $0x7a] sm:$0xff]
    %v719 = vld [vmem:[#allocation2 + $0x82] sm:$0xff]
    %v720 = vld [vmem:[#allocation2 + $0x92] sm:$0xff]
    %v721 = vld [vmem:[#allocation2 + $0x9a] sm:$0xff]
    %v722 = vld [vmem:[#allocation2 + $0xa2] sm:$0xff]
    %v723 = vld [vmem:[#allocation2 + $0xaa] sm:$0xff]
    %v724 = vld [vmem:[#allocation2 + $0xb2] sm:$0xff]
    %v725 = vld [vmem:[#allocation2 + $0xba] sm:$0xff]
    %v726 = vld [vmem:[#allocation2 + $0xc2] sm:$0xff]
    %v727 = vld [vmem:[#allocation2 + $0xca] sm:$0xff]
    %v728 = vld [vmem:[#allocation2 + $0xda] sm:$0xff]
    %v729 = vld [vmem:[#allocation2 + $0xe2] sm:$0xff]
    %v730 = vld [vmem:[#allocation2 + $0xea] sm:$0xff]
    %v731 = vld [vmem:[#allocation2 + $0xf2] sm:$0xff]
    %v732 = vld [vmem:[#allocation2 + $0xfa] sm:$0xff]
    %v733 = vld [vmem:[#allocation2 + $0x102] sm:$0xff]
    %v734 = vld [vmem:[#allocation2 + $0x10a] sm:$0xff]
    %v735 = vld [vmem:[#allocation2 + $0x112] sm:$0xff]
    %s736 = scalar_lea.vmem %s1, 2
    %v737 = vld [vmem:[%s736] sm:$0x1]
    %v738 = vunpack.c.l.bf16 %v737
    %740 = vset.pattern.permute.xlu0 0
    %741 = vperm.xlu0 %740, %v704
    %v742 = vpop.permute.xlu0 %741
    %745 = vset.pattern.permute.xlu0 0
    %746 = vperm.xlu0 %745, %v705
    %v747 = vpop.permute.xlu0 %746
    %750 = vset.pattern.permute.xlu0 0
    %751 = vperm.xlu0 %750, %v706
    %v752 = vpop.permute.xlu0 %751
    %755 = vset.pattern.permute.xlu0 0
    %756 = vperm.xlu0 %755, %v707
    %v757 = vpop.permute.xlu0 %756
    %760 = vset.pattern.permute.xlu0 0
    %761 = vperm.xlu0 %760, %v708
    %v762 = vpop.permute.xlu0 %761
    %765 = vset.pattern.permute.xlu0 0
    %766 = vperm.xlu0 %765, %v709
    %v767 = vpop.permute.xlu0 %766
    %770 = vset.pattern.permute.xlu0 0
    %771 = vperm.xlu0 %770, %v710
    %v772 = vpop.permute.xlu0 %771
    %775 = vset.pattern.permute.xlu0 0
    %776 = vperm.xlu0 %775, %v711
    %v777 = vpop.permute.xlu0 %776
    %780 = vset.pattern.permute.xlu0 0
    %781 = vperm.xlu0 %780, %v712
    %v782 = vpop.permute.xlu0 %781
    %785 = vset.pattern.permute.xlu0 0
    %786 = vperm.xlu0 %785, %v713
    %v787 = vpop.permute.xlu0 %786
    %790 = vset.pattern.permute.xlu0 0
    %791 = vperm.xlu0 %790, %v714
    %v792 = vpop.permute.xlu0 %791
    %795 = vset.pattern.permute.xlu0 0
    %796 = vperm.xlu0 %795, %v715
    %v797 = vpop.permute.xlu0 %796
    %800 = vset.pattern.permute.xlu0 0
    %801 = vperm.xlu0 %800, %v716
    %v802 = vpop.permute.xlu0 %801
    %805 = vset.pattern.permute.xlu0 0
    %806 = vperm.xlu0 %805, %v717
    %v807 = vpop.permute.xlu0 %806
    %810 = vset.pattern.permute.xlu0 0
    %811 = vperm.xlu0 %810, %v718
    %v812 = vpop.permute.xlu0 %811
    %815 = vset.pattern.permute.xlu0 0
    %816 = vperm.xlu0 %815, %v719
    %v817 = vpop.permute.xlu0 %816
    %820 = vset.pattern.permute.xlu0 0
    %821 = vperm.xlu0 %820, %v720
    %v822 = vpop.permute.xlu0 %821
    %825 = vset.pattern.permute.xlu0 0
    %826 = vperm.xlu0 %825, %v721
    %v827 = vpop.permute.xlu0 %826
    %830 = vset.pattern.permute.xlu0 0
    %831 = vperm.xlu0 %830, %v722
    %v832 = vpop.permute.xlu0 %831
    %835 = vset.pattern.permute.xlu0 0
    %836 = vperm.xlu0 %835, %v723
    %v837 = vpop.permute.xlu0 %836
    %840 = vset.pattern.permute.xlu0 0
    %841 = vperm.xlu0 %840, %v724
    %v842 = vpop.permute.xlu0 %841
    %845 = vset.pattern.permute.xlu0 0
    %846 = vperm.xlu0 %845, %v725
    %v847 = vpop.permute.xlu0 %846
    %850 = vset.pattern.permute.xlu0 0
    %851 = vperm.xlu0 %850, %v726
    %v852 = vpop.permute.xlu0 %851
    %855 = vset.pattern.permute.xlu0 0
    %856 = vperm.xlu0 %855, %v727
    %v857 = vpop.permute.xlu0 %856
    %860 = vset.pattern.permute.xlu0 0
    %861 = vperm.xlu0 %860, %v728
    %v862 = vpop.permute.xlu0 %861
    %865 = vset.pattern.permute.xlu0 0
    %866 = vperm.xlu0 %865, %v729
    %v867 = vpop.permute.xlu0 %866
    %870 = vset.pattern.permute.xlu0 0
    %871 = vperm.xlu0 %870, %v730
    %v872 = vpop.permute.xlu0 %871
    %875 = vset.pattern.permute.xlu0 0
    %876 = vperm.xlu0 %875, %v731
    %v877 = vpop.permute.xlu0 %876
    %880 = vset.pattern.permute.xlu0 0
    %881 = vperm.xlu0 %880, %v732
    %v882 = vpop.permute.xlu0 %881
    %885 = vset.pattern.permute.xlu0 0
    %886 = vperm.xlu0 %885, %v733
    %v887 = vpop.permute.xlu0 %886
    %890 = vset.pattern.permute.xlu0 0
    %891 = vperm.xlu0 %890, %v734
    %v892 = vpop.permute.xlu0 %891
    %895 = vset.pattern.permute.xlu0 0
    %896 = vperm.xlu0 %895, %v735
    %v897 = vpop.permute.xlu0 %896
    %v899 = vperm.slane %v738, 0
    %v900 = vmul.f32 %v742, %v899
    %v901 = vmul.f32 %v747, %v899
    %v902 = vmul.f32 %v752, %v899
    %v903 = vmul.f32 %v757, %v899
    %v904 = vmul.f32 %v762, %v899
    %v905 = vmul.f32 %v767, %v899
    %v906 = vmul.f32 %v772, %v899
    %v907 = vmul.f32 %v777, %v899
    %v908 = vmul.f32 %v782, %v899
    %v909 = vmul.f32 %v787, %v899
    %v910 = vmul.f32 %v792, %v899
    %v911 = vmul.f32 %v797, %v899
    %v912 = vmul.f32 %v802, %v899
    %v913 = vmul.f32 %v807, %v899
    %v914 = vmul.f32 %v812, %v899
    %v915 = vmul.f32 %v817, %v899
    %v916 = vmul.f32 %v822, %v899
    %v917 = vmul.f32 %v827, %v899
    %v918 = vmul.f32 %v832, %v899
    %v919 = vmul.f32 %v837, %v899
    %v920 = vmul.f32 %v842, %v899
    %v921 = vmul.f32 %v847, %v899
    %v922 = vmul.f32 %v852, %v899
    %v923 = vmul.f32 %v857, %v899
    %v924 = vmul.f32 %v862, %v899
    %v925 = vmul.f32 %v867, %v899
    %v926 = vmul.f32 %v872, %v899
    %v927 = vmul.f32 %v877, %v899
    %v928 = vmul.f32 %v882, %v899
    %v929 = vmul.f32 %v887, %v899
    %v930 = vmul.f32 %v892, %v899
    %v931 = vmul.f32 %v897, %v899
    %v932 = vadd.f32 %v672, %v900
    %v933 = vadd.f32 %v673, %v901
    %v934 = vadd.f32 %v674, %v902
    %v935 = vadd.f32 %v675, %v903
    %v936 = vadd.f32 %v676, %v904
    %v937 = vadd.f32 %v677, %v905
    %v938 = vadd.f32 %v678, %v906
    %v939 = vadd.f32 %v679, %v907
    %v940 = vadd.f32 %v680, %v908
    %v941 = vadd.f32 %v681, %v909
    %v942 = vadd.f32 %v682, %v910
    %v943 = vadd.f32 %v683, %v911
    %v944 = vadd.f32 %v684, %v912
    %v945 = vadd.f32 %v685, %v913
    %v946 = vadd.f32 %v686, %v914
    %v947 = vadd.f32 %v687, %v915
    %v948 = vadd.f32 %v688, %v916
    %v949 = vadd.f32 %v689, %v917
    %v950 = vadd.f32 %v690, %v918
    %v951 = vadd.f32 %v691, %v919
    %v952 = vadd.f32 %v692, %v920
    %v953 = vadd.f32 %v693, %v921
    %v954 = vadd.f32 %v694, %v922
    %v955 = vadd.f32 %v695, %v923
    %v956 = vadd.f32 %v696, %v924
    %v957 = vadd.f32 %v697, %v925
    %v958 = vadd.f32 %v698, %v926
    %v959 = vadd.f32 %v699, %v927
    %v960 = vadd.f32 %v700, %v928
    %v961 = vadd.f32 %v701, %v929
    %v962 = vadd.f32 %v702, %v930
    %v963 = vadd.f32 %v703, %v931
    %v964 = vld [vmem:[#allocation2 + $0x3] sm:$0xff]
    %v965 = vld [vmem:[#allocation2 + $0xb] sm:$0xff]
    %v966 = vld [vmem:[#allocation2 + $0x13] sm:$0xff]
    %v967 = vld [vmem:[#allocation2 + $0x1b] sm:$0xff]
    %v968 = vld [vmem:[#allocation2 + $0x23] sm:$0xff]
    %v969 = vld [vmem:[#allocation2 + $0x2b] sm:$0xff]
    %v970 = vld [vmem:[#allocation2 + $0x33] sm:$0xff]
    %v971 = vld [vmem:[#allocation2 + $0x3b] sm:$0xff]
    %v972 = vld [vmem:[#allocation2 + $0x4b] sm:$0xff]
    %v973 = vld [vmem:[#allocation2 + $0x53] sm:$0xff]
    %v974 = vld [vmem:[#allocation2 + $0x5b] sm:$0xff]
    %v975 = vld [vmem:[#allocation2 + $0x63] sm:$0xff]
    %v976 = vld [vmem:[#allocation2 + $0x6b] sm:$0xff]
    %v977 = vld [vmem:[#allocation2 + $0x73] sm:$0xff]
    %v978 = vld [vmem:[#allocation2 + $0x7b] sm:$0xff]
    %v979 = vld [vmem:[#allocation2 + $0x83] sm:$0xff]
    %v980 = vld [vmem:[#allocation2 + $0x93] sm:$0xff]
    %v981 = vld [vmem:[#allocation2 + $0x9b] sm:$0xff]
    %v982 = vld [vmem:[#allocation2 + $0xa3] sm:$0xff]
    %v983 = vld [vmem:[#allocation2 + $0xab] sm:$0xff]
    %v984 = vld [vmem:[#allocation2 + $0xb3] sm:$0xff]
    %v985 = vld [vmem:[#allocation2 + $0xbb] sm:$0xff]
    %v986 = vld [vmem:[#allocation2 + $0xc3] sm:$0xff]
    %v987 = vld [vmem:[#allocation2 + $0xcb] sm:$0xff]
    %v988 = vld [vmem:[#allocation2 + $0xdb] sm:$0xff]
    %v989 = vld [vmem:[#allocation2 + $0xe3] sm:$0xff]
    %v990 = vld [vmem:[#allocation2 + $0xeb] sm:$0xff]
    %v991 = vld [vmem:[#allocation2 + $0xf3] sm:$0xff]
    %v992 = vld [vmem:[#allocation2 + $0xfb] sm:$0xff]
    %v993 = vld [vmem:[#allocation2 + $0x103] sm:$0xff]
    %v994 = vld [vmem:[#allocation2 + $0x10b] sm:$0xff]
    %v995 = vld [vmem:[#allocation2 + $0x113] sm:$0xff]
    %s996 = scalar_lea.vmem %s1, 3
    %v997 = vld [vmem:[%s996] sm:$0x1]
    %v998 = vunpack.c.l.bf16 %v997
    %1000 = vset.pattern.permute.xlu0 0
    %1001 = vperm.xlu0 %1000, %v964
    %v1002 = vpop.permute.xlu0 %1001
    %1005 = vset.pattern.permute.xlu0 0
    %1006 = vperm.xlu0 %1005, %v965
    %v1007 = vpop.permute.xlu0 %1006
    %1010 = vset.pattern.permute.xlu0 0
    %1011 = vperm.xlu0 %1010, %v966
    %v1012 = vpop.permute.xlu0 %1011
    %1015 = vset.pattern.permute.xlu0 0
    %1016 = vperm.xlu0 %1015, %v967
    %v1017 = vpop.permute.xlu0 %1016
    %1020 = vset.pattern.permute.xlu0 0
    %1021 = vperm.xlu0 %1020, %v968
    %v1022 = vpop.permute.xlu0 %1021
    %1025 = vset.pattern.permute.xlu0 0
    %1026 = vperm.xlu0 %1025, %v969
    %v1027 = vpop.permute.xlu0 %1026
    %1030 = vset.pattern.permute.xlu0 0
    %1031 = vperm.xlu0 %1030, %v970
    %v1032 = vpop.permute.xlu0 %1031
    %1035 = vset.pattern.permute.xlu0 0
    %1036 = vperm.xlu0 %1035, %v971
    %v1037 = vpop.permute.xlu0 %1036
    %1040 = vset.pattern.permute.xlu0 0
    %1041 = vperm.xlu0 %1040, %v972
    %v1042 = vpop.permute.xlu0 %1041
    %1045 = vset.pattern.permute.xlu0 0
    %1046 = vperm.xlu0 %1045, %v973
    %v1047 = vpop.permute.xlu0 %1046
    %1050 = vset.pattern.permute.xlu0 0
    %1051 = vperm.xlu0 %1050, %v974
    %v1052 = vpop.permute.xlu0 %1051
    %1055 = vset.pattern.permute.xlu0 0
    %1056 = vperm.xlu0 %1055, %v975
    %v1057 = vpop.permute.xlu0 %1056
    %1060 = vset.pattern.permute.xlu0 0
    %1061 = vperm.xlu0 %1060, %v976
    %v1062 = vpop.permute.xlu0 %1061
    %1065 = vset.pattern.permute.xlu0 0
    %1066 = vperm.xlu0 %1065, %v977
    %v1067 = vpop.permute.xlu0 %1066
    %1070 = vset.pattern.permute.xlu0 0
    %1071 = vperm.xlu0 %1070, %v978
    %v1072 = vpop.permute.xlu0 %1071
    %1075 = vset.pattern.permute.xlu0 0
    %1076 = vperm.xlu0 %1075, %v979
    %v1077 = vpop.permute.xlu0 %1076
    %1080 = vset.pattern.permute.xlu0 0
    %1081 = vperm.xlu0 %1080, %v980
    %v1082 = vpop.permute.xlu0 %1081
    %1085 = vset.pattern.permute.xlu0 0
    %1086 = vperm.xlu0 %1085, %v981
    %v1087 = vpop.permute.xlu0 %1086
    %1090 = vset.pattern.permute.xlu0 0
    %1091 = vperm.xlu0 %1090, %v982
    %v1092 = vpop.permute.xlu0 %1091
    %1095 = vset.pattern.permute.xlu0 0
    %1096 = vperm.xlu0 %1095, %v983
    %v1097 = vpop.permute.xlu0 %1096
    %1100 = vset.pattern.permute.xlu0 0
    %1101 = vperm.xlu0 %1100, %v984
    %v1102 = vpop.permute.xlu0 %1101
    %1105 = vset.pattern.permute.xlu0 0
    %1106 = vperm.xlu0 %1105, %v985
    %v1107 = vpop.permute.xlu0 %1106
    %1110 = vset.pattern.permute.xlu0 0
    %1111 = vperm.xlu0 %1110, %v986
    %v1112 = vpop.permute.xlu0 %1111
    %1115 = vset.pattern.permute.xlu0 0
    %1116 = vperm.xlu0 %1115, %v987
    %v1117 = vpop.permute.xlu0 %1116
    %1120 = vset.pattern.permute.xlu0 0
    %1121 = vperm.xlu0 %1120, %v988
    %v1122 = vpop.permute.xlu0 %1121
    %1125 = vset.pattern.permute.xlu0 0
    %1126 = vperm.xlu0 %1125, %v989
    %v1127 = vpop.permute.xlu0 %1126
    %1130 = vset.pattern.permute.xlu0 0
    %1131 = vperm.xlu0 %1130, %v990
    %v1132 = vpop.permute.xlu0 %1131
    %1135 = vset.pattern.permute.xlu0 0
    %1136 = vperm.xlu0 %1135, %v991
    %v1137 = vpop.permute.xlu0 %1136
    %1140 = vset.pattern.permute.xlu0 0
    %1141 = vperm.xlu0 %1140, %v992
    %v1142 = vpop.permute.xlu0 %1141
    %1145 = vset.pattern.permute.xlu0 0
    %1146 = vperm.xlu0 %1145, %v993
    %v1147 = vpop.permute.xlu0 %1146
    %1150 = vset.pattern.permute.xlu0 0
    %1151 = vperm.xlu0 %1150, %v994
    %v1152 = vpop.permute.xlu0 %1151
    %1155 = vset.pattern.permute.xlu0 0
    %1156 = vperm.xlu0 %1155, %v995
    %v1157 = vpop.permute.xlu0 %1156
    %v1159 = vperm.slane %v998, 0
    %v1160 = vmul.f32 %v1002, %v1159
    %v1161 = vmul.f32 %v1007, %v1159
    %v1162 = vmul.f32 %v1012, %v1159
    %v1163 = vmul.f32 %v1017, %v1159
    %v1164 = vmul.f32 %v1022, %v1159
    %v1165 = vmul.f32 %v1027, %v1159
    %v1166 = vmul.f32 %v1032, %v1159
    %v1167 = vmul.f32 %v1037, %v1159
    %v1168 = vmul.f32 %v1042, %v1159
    %v1169 = vmul.f32 %v1047, %v1159
    %v1170 = vmul.f32 %v1052, %v1159
    %v1171 = vmul.f32 %v1057, %v1159
    %v1172 = vmul.f32 %v1062, %v1159
    %v1173 = vmul.f32 %v1067, %v1159
    %v1174 = vmul.f32 %v1072, %v1159
    %v1175 = vmul.f32 %v1077, %v1159
    %v1176 = vmul.f32 %v1082, %v1159
    %v1177 = vmul.f32 %v1087, %v1159
    %v1178 = vmul.f32 %v1092, %v1159
    %v1179 = vmul.f32 %v1097, %v1159
    %v1180 = vmul.f32 %v1102, %v1159
    %v1181 = vmul.f32 %v1107, %v1159
    %v1182 = vmul.f32 %v1112, %v1159
    %v1183 = vmul.f32 %v1117, %v1159
    %v1184 = vmul.f32 %v1122, %v1159
    %v1185 = vmul.f32 %v1127, %v1159
    %v1186 = vmul.f32 %v1132, %v1159
    %v1187 = vmul.f32 %v1137, %v1159
    %v1188 = vmul.f32 %v1142, %v1159
    %v1189 = vmul.f32 %v1147, %v1159
    %v1190 = vmul.f32 %v1152, %v1159
    %v1191 = vmul.f32 %v1157, %v1159
    %v1192 = vadd.f32 %v932, %v1160
    %v1193 = vadd.f32 %v933, %v1161
    %v1194 = vadd.f32 %v934, %v1162
    %v1195 = vadd.f32 %v935, %v1163
    %v1196 = vadd.f32 %v936, %v1164
    %v1197 = vadd.f32 %v937, %v1165
    %v1198 = vadd.f32 %v938, %v1166
    %v1199 = vadd.f32 %v939, %v1167
    %v1200 = vadd.f32 %v940, %v1168
    %v1201 = vadd.f32 %v941, %v1169
    %v1202 = vadd.f32 %v942, %v1170
    %v1203 = vadd.f32 %v943, %v1171
    %v1204 = vadd.f32 %v944, %v1172
    %v1205 = vadd.f32 %v945, %v1173
    %v1206 = vadd.f32 %v946, %v1174
    %v1207 = vadd.f32 %v947, %v1175
    %v1208 = vadd.f32 %v948, %v1176
    %v1209 = vadd.f32 %v949, %v1177
    %v1210 = vadd.f32 %v950, %v1178
    %v1211 = vadd.f32 %v951, %v1179
    %v1212 = vadd.f32 %v952, %v1180
    %v1213 = vadd.f32 %v953, %v1181
    %v1214 = vadd.f32 %v954, %v1182
    %v1215 = vadd.f32 %v955, %v1183
    %v1216 = vadd.f32 %v956, %v1184
    %v1217 = vadd.f32 %v957, %v1185
    %v1218 = vadd.f32 %v958, %v1186
    %v1219 = vadd.f32 %v959, %v1187
    %v1220 = vadd.f32 %v960, %v1188
    %v1221 = vadd.f32 %v961, %v1189
    %v1222 = vadd.f32 %v962, %v1190
    %v1223 = vadd.f32 %v963, %v1191
    %v1224 = vld [vmem:[#allocation2 + $0x4] sm:$0xff]
    %v1225 = vld [vmem:[#allocation2 + $0xc] sm:$0xff]
    %v1226 = vld [vmem:[#allocation2 + $0x14] sm:$0xff]
    %v1227 = vld [vmem:[#allocation2 + $0x1c] sm:$0xff]
    %v1228 = vld [vmem:[#allocation2 + $0x24] sm:$0xff]
    %v1229 = vld [vmem:[#allocation2 + $0x2c] sm:$0xff]
    %v1230 = vld [vmem:[#allocation2 + $0x34] sm:$0xff]
    %v1231 = vld [vmem:[#allocation2 + $0x3c] sm:$0xff]
    %v1232 = vld [vmem:[#allocation2 + $0x4c] sm:$0xff]
    %v1233 = vld [vmem:[#allocation2 + $0x54] sm:$0xff]
    %v1234 = vld [vmem:[#allocation2 + $0x5c] sm:$0xff]
    %v1235 = vld [vmem:[#allocation2 + $0x64] sm:$0xff]
    %v1236 = vld [vmem:[#allocation2 + $0x6c] sm:$0xff]
    %v1237 = vld [vmem:[#allocation2 + $0x74] sm:$0xff]
    %v1238 = vld [vmem:[#allocation2 + $0x7c] sm:$0xff]
    %v1239 = vld [vmem:[#allocation2 + $0x84] sm:$0xff]
    %v1240 = vld [vmem:[#allocation2 + $0x94] sm:$0xff]
    %v1241 = vld [vmem:[#allocation2 + $0x9c] sm:$0xff]
    %v1242 = vld [vmem:[#allocation2 + $0xa4] sm:$0xff]
    %v1243 = vld [vmem:[#allocation2 + $0xac] sm:$0xff]
    %v1244 = vld [vmem:[#allocation2 + $0xb4] sm:$0xff]
    %v1245 = vld [vmem:[#allocation2 + $0xbc] sm:$0xff]
    %v1246 = vld [vmem:[#allocation2 + $0xc4] sm:$0xff]
    %v1247 = vld [vmem:[#allocation2 + $0xcc] sm:$0xff]
    %v1248 = vld [vmem:[#allocation2 + $0xdc] sm:$0xff]
    %v1249 = vld [vmem:[#allocation2 + $0xe4] sm:$0xff]
    %v1250 = vld [vmem:[#allocation2 + $0xec] sm:$0xff]
    %v1251 = vld [vmem:[#allocation2 + $0xf4] sm:$0xff]
    %v1252 = vld [vmem:[#allocation2 + $0xfc] sm:$0xff]
    %v1253 = vld [vmem:[#allocation2 + $0x104] sm:$0xff]
    %v1254 = vld [vmem:[#allocation2 + $0x10c] sm:$0xff]
    %v1255 = vld [vmem:[#allocation2 + $0x114] sm:$0xff]
    %s1256 = scalar_lea.vmem %s1, 4
    %v1257 = vld [vmem:[%s1256] sm:$0x1]
    %v1258 = vunpack.c.l.bf16 %v1257
    %1260 = vset.pattern.permute.xlu0 0
    %1261 = vperm.xlu0 %1260, %v1224
    %v1262 = vpop.permute.xlu0 %1261
    %1265 = vset.pattern.permute.xlu0 0
    %1266 = vperm.xlu0 %1265, %v1225
    %v1267 = vpop.permute.xlu0 %1266
    %1270 = vset.pattern.permute.xlu0 0
    %1271 = vperm.xlu0 %1270, %v1226
    %v1272 = vpop.permute.xlu0 %1271
    %1275 = vset.pattern.permute.xlu0 0
    %1276 = vperm.xlu0 %1275, %v1227
    %v1277 = vpop.permute.xlu0 %1276
    %1280 = vset.pattern.permute.xlu0 0
    %1281 = vperm.xlu0 %1280, %v1228
    %v1282 = vpop.permute.xlu0 %1281
    %1285 = vset.pattern.permute.xlu0 0
    %1286 = vperm.xlu0 %1285, %v1229
    %v1287 = vpop.permute.xlu0 %1286
    %1290 = vset.pattern.permute.xlu0 0
    %1291 = vperm.xlu0 %1290, %v1230
    %v1292 = vpop.permute.xlu0 %1291
    %1295 = vset.pattern.permute.xlu0 0
    %1296 = vperm.xlu0 %1295, %v1231
    %v1297 = vpop.permute.xlu0 %1296
    %1300 = vset.pattern.permute.xlu0 0
    %1301 = vperm.xlu0 %1300, %v1232
    %v1302 = vpop.permute.xlu0 %1301
    %1305 = vset.pattern.permute.xlu0 0
    %1306 = vperm.xlu0 %1305, %v1233
    %v1307 = vpop.permute.xlu0 %1306
    %1310 = vset.pattern.permute.xlu0 0
    %1311 = vperm.xlu0 %1310, %v1234
    %v1312 = vpop.permute.xlu0 %1311
    %1315 = vset.pattern.permute.xlu0 0
    %1316 = vperm.xlu0 %1315, %v1235
    %v1317 = vpop.permute.xlu0 %1316
    %1320 = vset.pattern.permute.xlu0 0
    %1321 = vperm.xlu0 %1320, %v1236
    %v1322 = vpop.permute.xlu0 %1321
    %1325 = vset.pattern.permute.xlu0 0
    %1326 = vperm.xlu0 %1325, %v1237
    %v1327 = vpop.permute.xlu0 %1326
    %1330 = vset.pattern.permute.xlu0 0
    %1331 = vperm.xlu0 %1330, %v1238
    %v1332 = vpop.permute.xlu0 %1331
    %1335 = vset.pattern.permute.xlu0 0
    %1336 = vperm.xlu0 %1335, %v1239
    %v1337 = vpop.permute.xlu0 %1336
    %1340 = vset.pattern.permute.xlu0 0
    %1341 = vperm.xlu0 %1340, %v1240
    %v1342 = vpop.permute.xlu0 %1341
    %1345 = vset.pattern.permute.xlu0 0
    %1346 = vperm.xlu0 %1345, %v1241
    %v1347 = vpop.permute.xlu0 %1346
    %1350 = vset.pattern.permute.xlu0 0
    %1351 = vperm.xlu0 %1350, %v1242
    %v1352 = vpop.permute.xlu0 %1351
    %1355 = vset.pattern.permute.xlu0 0
    %1356 = vperm.xlu0 %1355, %v1243
    %v1357 = vpop.permute.xlu0 %1356
    %1360 = vset.pattern.permute.xlu0 0
    %1361 = vperm.xlu0 %1360, %v1244
    %v1362 = vpop.permute.xlu0 %1361
    %1365 = vset.pattern.permute.xlu0 0
    %1366 = vperm.xlu0 %1365, %v1245
    %v1367 = vpop.permute.xlu0 %1366
    %1370 = vset.pattern.permute.xlu0 0
    %1371 = vperm.xlu0 %1370, %v1246
    %v1372 = vpop.permute.xlu0 %1371
    %1375 = vset.pattern.permute.xlu0 0
    %1376 = vperm.xlu0 %1375, %v1247
    %v1377 = vpop.permute.xlu0 %1376
    %1380 = vset.pattern.permute.xlu0 0
    %1381 = vperm.xlu0 %1380, %v1248
    %v1382 = vpop.permute.xlu0 %1381
    %1385 = vset.pattern.permute.xlu0 0
    %1386 = vperm.xlu0 %1385, %v1249
    %v1387 = vpop.permute.xlu0 %1386
    %1390 = vset.pattern.permute.xlu0 0
    %1391 = vperm.xlu0 %1390, %v1250
    %v1392 = vpop.permute.xlu0 %1391
    %1395 = vset.pattern.permute.xlu0 0
    %1396 = vperm.xlu0 %1395, %v1251
    %v1397 = vpop.permute.xlu0 %1396
    %1400 = vset.pattern.permute.xlu0 0
    %1401 = vperm.xlu0 %1400, %v1252
    %v1402 = vpop.permute.xlu0 %1401
    %1405 = vset.pattern.permute.xlu0 0
    %1406 = vperm.xlu0 %1405, %v1253
    %v1407 = vpop.permute.xlu0 %1406
    %1410 = vset.pattern.permute.xlu0 0
    %1411 = vperm.xlu0 %1410, %v1254
    %v1412 = vpop.permute.xlu0 %1411
    %1415 = vset.pattern.permute.xlu0 0
    %1416 = vperm.xlu0 %1415, %v1255
    %v1417 = vpop.permute.xlu0 %1416
    %v1419 = vperm.slane %v1258, 0
    %v1420 = vmul.f32 %v1262, %v1419
    %v1421 = vmul.f32 %v1267, %v1419
    %v1422 = vmul.f32 %v1272, %v1419
    %v1423 = vmul.f32 %v1277, %v1419
    %v1424 = vmul.f32 %v1282, %v1419
    %v1425 = vmul.f32 %v1287, %v1419
    %v1426 = vmul.f32 %v1292, %v1419
    %v1427 = vmul.f32 %v1297, %v1419
    %v1428 = vmul.f32 %v1302, %v1419
    %v1429 = vmul.f32 %v1307, %v1419
    %v1430 = vmul.f32 %v1312, %v1419
    %v1431 = vmul.f32 %v1317, %v1419
    %v1432 = vmul.f32 %v1322, %v1419
    %v1433 = vmul.f32 %v1327, %v1419
    %v1434 = vmul.f32 %v1332, %v1419
    %v1435 = vmul.f32 %v1337, %v1419
    %v1436 = vmul.f32 %v1342, %v1419
    %v1437 = vmul.f32 %v1347, %v1419
    %v1438 = vmul.f32 %v1352, %v1419
    %v1439 = vmul.f32 %v1357, %v1419
    %v1440 = vmul.f32 %v1362, %v1419
    %v1441 = vmul.f32 %v1367, %v1419
    %v1442 = vmul.f32 %v1372, %v1419
    %v1443 = vmul.f32 %v1377, %v1419
    %v1444 = vmul.f32 %v1382, %v1419
    %v1445 = vmul.f32 %v1387, %v1419
    %v1446 = vmul.f32 %v1392, %v1419
    %v1447 = vmul.f32 %v1397, %v1419
    %v1448 = vmul.f32 %v1402, %v1419
    %v1449 = vmul.f32 %v1407, %v1419
    %v1450 = vmul.f32 %v1412, %v1419
    %v1451 = vmul.f32 %v1417, %v1419
    %v1452 = vadd.f32 %v1192, %v1420
    %v1453 = vadd.f32 %v1193, %v1421
    %v1454 = vadd.f32 %v1194, %v1422
    %v1455 = vadd.f32 %v1195, %v1423
    %v1456 = vadd.f32 %v1196, %v1424
    %v1457 = vadd.f32 %v1197, %v1425
    %v1458 = vadd.f32 %v1198, %v1426
    %v1459 = vadd.f32 %v1199, %v1427
    %v1460 = vadd.f32 %v1200, %v1428
    %v1461 = vadd.f32 %v1201, %v1429
    %v1462 = vadd.f32 %v1202, %v1430
    %v1463 = vadd.f32 %v1203, %v1431
    %v1464 = vadd.f32 %v1204, %v1432
    %v1465 = vadd.f32 %v1205, %v1433
    %v1466 = vadd.f32 %v1206, %v1434
    %v1467 = vadd.f32 %v1207, %v1435
    %v1468 = vadd.f32 %v1208, %v1436
    %v1469 = vadd.f32 %v1209, %v1437
    %v1470 = vadd.f32 %v1210, %v1438
    %v1471 = vadd.f32 %v1211, %v1439
    %v1472 = vadd.f32 %v1212, %v1440
    %v1473 = vadd.f32 %v1213, %v1441
    %v1474 = vadd.f32 %v1214, %v1442
    %v1475 = vadd.f32 %v1215, %v1443
    %v1476 = vadd.f32 %v1216, %v1444
    %v1477 = vadd.f32 %v1217, %v1445
    %v1478 = vadd.f32 %v1218, %v1446
    %v1479 = vadd.f32 %v1219, %v1447
    %v1480 = vadd.f32 %v1220, %v1448
    %v1481 = vadd.f32 %v1221, %v1449
    %v1482 = vadd.f32 %v1222, %v1450
    %v1483 = vadd.f32 %v1223, %v1451
    %v1484 = vld [vmem:[%s2] sm:$0x1]
    %v1486 = vperm.slane %v1484, 0
    %v1488 = vadd.f32 %v1452, %v1486
    %v1489 = vadd.f32 %v1453, %v1486
    %v1490 = vadd.f32 %v1454, %v1486
    %v1491 = vadd.f32 %v1455, %v1486
    %v1492 = vadd.f32 %v1456, %v1486
    %v1493 = vadd.f32 %v1457, %v1486
    %v1494 = vadd.f32 %v1458, %v1486
    %v1495 = vadd.f32 %v1459, %v1486
    %v1496 = vadd.f32 %v1460, %v1486
    %v1497 = vadd.f32 %v1461, %v1486
    %v1498 = vadd.f32 %v1462, %v1486
    %v1499 = vadd.f32 %v1463, %v1486
    %v1500 = vadd.f32 %v1464, %v1486
    %v1501 = vadd.f32 %v1465, %v1486
    %v1502 = vadd.f32 %v1466, %v1486
    %v1503 = vadd.f32 %v1467, %v1486
    %v1504 = vadd.f32 %v1468, %v1486
    %v1505 = vadd.f32 %v1469, %v1486
    %v1506 = vadd.f32 %v1470, %v1486
    %v1507 = vadd.f32 %v1471, %v1486
    %v1508 = vadd.f32 %v1472, %v1486
    %v1509 = vadd.f32 %v1473, %v1486
    %v1510 = vadd.f32 %v1474, %v1486
    %v1511 = vadd.f32 %v1475, %v1486
    %v1512 = vadd.f32 %v1476, %v1486
    %v1513 = vadd.f32 %v1477, %v1486
    %v1514 = vadd.f32 %v1478, %v1486
    %v1515 = vadd.f32 %v1479, %v1486
    %v1516 = vadd.f32 %v1480, %v1486
    %v1517 = vadd.f32 %v1481, %v1486
    %v1518 = vadd.f32 %v1482, %v1486
    %v1519 = vadd.f32 %v1483, %v1486
    %v1520 = vmax.f32 %v1488, 0.0
    %v1521 = vmax.f32 %v1489, 0.0
    %v1522 = vmax.f32 %v1490, 0.0
    %v1523 = vmax.f32 %v1491, 0.0
    %v1524 = vmax.f32 %v1492, 0.0
    %v1525 = vmax.f32 %v1493, 0.0
    %v1526 = vmax.f32 %v1494, 0.0
    %v1527 = vmax.f32 %v1495, 0.0
    %v1528 = vmax.f32 %v1496, 0.0
    %v1529 = vmax.f32 %v1497, 0.0
    %v1530 = vmax.f32 %v1498, 0.0
    %v1531 = vmax.f32 %v1499, 0.0
    %v1532 = vmax.f32 %v1500, 0.0
    %v1533 = vmax.f32 %v1501, 0.0
    %v1534 = vmax.f32 %v1502, 0.0
    %v1535 = vmax.f32 %v1503, 0.0
    %v1536 = vmax.f32 %v1504, 0.0
    %v1537 = vmax.f32 %v1505, 0.0
    %v1538 = vmax.f32 %v1506, 0.0
    %v1539 = vmax.f32 %v1507, 0.0
    %v1540 = vmax.f32 %v1508, 0.0
    %v1541 = vmax.f32 %v1509, 0.0
    %v1542 = vmax.f32 %v1510, 0.0
    %v1543 = vmax.f32 %v1511, 0.0
    %v1544 = vmax.f32 %v1512, 0.0
    %v1545 = vmax.f32 %v1513, 0.0
    %v1546 = vmax.f32 %v1514, 0.0
    %v1547 = vmax.f32 %v1515, 0.0
    %v1548 = vmax.f32 %v1516, 0.0
    %v1549 = vmax.f32 %v1517, 0.0
    %v1550 = vmax.f32 %v1518, 0.0
    %v1551 = vmax.f32 %v1519, 0.0
    %v1552 = vld [vmem:[%s3] sm:$0x1]
    %v1554 = vperm.slane %v1552, 0
    %v1556 = vmul.f32 %v1520, %v1554
    %v1557 = vmul.f32 %v1521, %v1554
    %v1558 = vmul.f32 %v1522, %v1554
    %v1559 = vmul.f32 %v1523, %v1554
    %v1560 = vmul.f32 %v1524, %v1554
    %v1561 = vmul.f32 %v1525, %v1554
    %v1562 = vmul.f32 %v1526, %v1554
    %v1563 = vmul.f32 %v1527, %v1554
    %v1564 = vmul.f32 %v1528, %v1554
    %v1565 = vmul.f32 %v1529, %v1554
    %v1566 = vmul.f32 %v1530, %v1554
    %v1567 = vmul.f32 %v1531, %v1554
    %v1568 = vmul.f32 %v1532, %v1554
    %v1569 = vmul.f32 %v1533, %v1554
    %v1570 = vmul.f32 %v1534, %v1554
    %v1571 = vmul.f32 %v1535, %v1554
    %v1572 = vmul.f32 %v1536, %v1554
    %v1573 = vmul.f32 %v1537, %v1554
    %v1574 = vmul.f32 %v1538, %v1554
    %v1575 = vmul.f32 %v1539, %v1554
    %v1576 = vmul.f32 %v1540, %v1554
    %v1577 = vmul.f32 %v1541, %v1554
    %v1578 = vmul.f32 %v1542, %v1554
    %v1579 = vmul.f32 %v1543, %v1554
    %v1580 = vmul.f32 %v1544, %v1554
    %v1581 = vmul.f32 %v1545, %v1554
    %v1582 = vmul.f32 %v1546, %v1554
    %v1583 = vmul.f32 %v1547, %v1554
    %v1584 = vmul.f32 %v1548, %v1554
    %v1585 = vmul.f32 %v1549, %v1554
    %v1586 = vmul.f32 %v1550, %v1554
    %v1587 = vmul.f32 %v1551, %v1554
    %v1588 = vld [vmem:[%s4] sm:$0x1]
    %v1590 = vperm.slane %v1588, 0
    %v1592 = vadd.f32 %v1556, %v1590
    %v1593 = vadd.f32 %v1557, %v1590
    %v1594 = vadd.f32 %v1558, %v1590
    %v1595 = vadd.f32 %v1559, %v1590
    %v1596 = vadd.f32 %v1560, %v1590
    %v1597 = vadd.f32 %v1561, %v1590
    %v1598 = vadd.f32 %v1562, %v1590
    %v1599 = vadd.f32 %v1563, %v1590
    %v1600 = vadd.f32 %v1564, %v1590
    %v1601 = vadd.f32 %v1565, %v1590
    %v1602 = vadd.f32 %v1566, %v1590
    %v1603 = vadd.f32 %v1567, %v1590
    %v1604 = vadd.f32 %v1568, %v1590
    %v1605 = vadd.f32 %v1569, %v1590
    %v1606 = vadd.f32 %v1570, %v1590
    %v1607 = vadd.f32 %v1571, %v1590
    %v1608 = vadd.f32 %v1572, %v1590
    %v1609 = vadd.f32 %v1573, %v1590
    %v1610 = vadd.f32 %v1574, %v1590
    %v1611 = vadd.f32 %v1575, %v1590
    %v1612 = vadd.f32 %v1576, %v1590
    %v1613 = vadd.f32 %v1577, %v1590
    %v1614 = vadd.f32 %v1578, %v1590
    %v1615 = vadd.f32 %v1579, %v1590
    %v1616 = vadd.f32 %v1580, %v1590
    %v1617 = vadd.f32 %v1581, %v1590
    %v1618 = vadd.f32 %v1582, %v1590
    %v1619 = vadd.f32 %v1583, %v1590
    %v1620 = vadd.f32 %v1584, %v1590
    %v1621 = vadd.f32 %v1585, %v1590
    %v1622 = vadd.f32 %v1586, %v1590
    %v1623 = vadd.f32 %v1587, %v1590
    %v1624 = vlaneseq
    %v1625 = vshrl.u32 %v1624, 7
    %v1626 = vadd.s32 %v1625, 8
    %v1627 = vadd.s32 %v1625, 16
    %v1628 = vadd.s32 %v1625, 24
    %v1629 = vlaneseq
    %v1630 = vand.u32 %v1629, 127
    %v1631 = vmul.u32 %v1625, 2
    %v1632 = vmul.u32 %v1626, 2
    %v1633 = vmul.u32 %v1627, 2
    %v1634 = vmul.u32 %v1628, 2
    %vm1635 = vcmp.eq.s32.totalorder %v1630, %v1631
    %vm1636 = vcmp.eq.s32.totalorder %v1630, %v1632
    %vm1637 = vcmp.eq.s32.totalorder %v1630, %v1633
    %vm1638 = vcmp.eq.s32.totalorder %v1630, %v1634
    %v1639 = vsel %vm1635, 1.0, 0.0
    %v1640 = vsel %vm1636, 1.0, 0.0
    %v1641 = vsel %vm1637, 1.0, 0.0
    %v1642 = vsel %vm1638, 1.0, 0.0
    %v1643 = vadd.s32 %v1631, 1
    %v1644 = vadd.s32 %v1632, 1
    %v1645 = vadd.s32 %v1633, 1
    %v1646 = vadd.s32 %v1634, 1
    %vm1647 = vcmp.eq.s32.totalorder %v1630, %v1643
    %vm1648 = vcmp.eq.s32.totalorder %v1630, %v1644
    %vm1649 = vcmp.eq.s32.totalorder %v1630, %v1645
    %vm1650 = vcmp.eq.s32.totalorder %v1630, %v1646
    %v1651 = vsel %vm1647, 1.0, 0.0
    %v1652 = vsel %vm1648, 1.0, 0.0
    %v1653 = vsel %vm1649, 1.0, 0.0
    %v1654 = vsel %vm1650, 1.0, 0.0
    %vm1655 = vcmask 523264
    %v1657 = vsel %vm1655, %v1639, 0
    %v1660 = vsel %vm1655, %v1640, 0
    %v1663 = vsel %vm1655, %v1641, 0
    %v1666 = vsel %vm1655, %v1642, 0
    %1668 = vmatpush.msra.mxu0 0.0
    %1669 = vmatpush.msra.mxu0 0.0
    %1670 = vmatpush.msra.mxu0 0.0
    %1671 = vmatpush.msra.mxu0 0.0
    %1672 = vmatpush.msra.mxu0 0.0
    %1673 = vmatpush.msra.mxu0 0.0
    %1674 = vmatpush.msra.mxu0 0.0
    %1675 = vmatpush.msra.mxu0 0.0
    %1676 = vmatpush.msra.mxu0 %v1599
    %1677 = vmatpush.msra.mxu0 %v1598
    %1678 = vmatpush.msra.mxu0 %v1597
    %1679 = vmatpush.msra.mxu0 %v1596
    %1680 = vmatpush.msra.mxu0 %v1595
    %1681 = vmatpush.msra.mxu0 %v1594
    %1682 = vmatpush.msra.mxu0 %v1593
    %1683 = vmatpush.msra.mxu0 %v1592
    %1684 = vmatmul.f32.gmra.mxu0 %v1657
    %v1685 = vpop.f32.mrf.mxu0
    %v1686 = vadd.f32 0.0, %v1685
    %1687 = vmatmul.f32.gmra.mxu0 %v1660
    %v1688 = vpop.f32.mrf.mxu0
    %v1689 = vadd.f32 0.0, %v1688
    %1690 = vmatmul.f32.gmra.mxu0 %v1663
    %v1691 = vpop.f32.mrf.mxu0
    %v1692 = vadd.f32 0.0, %v1691
    %1693 = vmatmul.f32.gmra.mxu0 %v1666
    %v1694 = vpop.f32.mrf.mxu0
    %v1695 = vadd.f32 0.0, %v1694
    %1696 = vdwg.mxu0
    %1697 = vmatpush.msra.mxu0 0.0
    %1698 = vmatpush.msra.mxu0 0.0
    %1699 = vmatpush.msra.mxu0 0.0
    %1700 = vmatpush.msra.mxu0 0.0
    %1701 = vmatpush.msra.mxu0 0.0
    %1702 = vmatpush.msra.mxu0 0.0
    %1703 = vmatpush.msra.mxu0 0.0
    %1704 = vmatpush.msra.mxu0 0.0
    %1705 = vmatpush.msra.mxu0 %v1607
    %1706 = vmatpush.msra.mxu0 %v1606
    %1707 = vmatpush.msra.mxu0 %v1605
    %1708 = vmatpush.msra.mxu0 %v1604
    %1709 = vmatpush.msra.mxu0 %v1603
    %1710 = vmatpush.msra.mxu0 %v1602
    %1711 = vmatpush.msra.mxu0 %v1601
    %1712 = vmatpush.msra.mxu0 %v1600
    %1713 = vmatmul.f32.gmra.mxu0 %v1657
    %v1714 = vpop.f32.mrf.mxu0
    %v1715 = vadd.f32 0.0, %v1714
    %1716 = vmatmul.f32.gmra.mxu0 %v1660
    %v1717 = vpop.f32.mrf.mxu0
    %v1718 = vadd.f32 0.0, %v1717
    %1719 = vmatmul.f32.gmra.mxu0 %v1663
    %v1720 = vpop.f32.mrf.mxu0
    %v1721 = vadd.f32 0.0, %v1720
    %1722 = vmatmul.f32.gmra.mxu0 %v1666
    %v1723 = vpop.f32.mrf.mxu0
    %v1724 = vadd.f32 0.0, %v1723
    %1725 = vdwg.mxu0
    %1726 = vmatpush.msra.mxu0 0.0
    %1727 = vmatpush.msra.mxu0 0.0
    %1728 = vmatpush.msra.mxu0 0.0
    %1729 = vmatpush.msra.mxu0 0.0
    %1730 = vmatpush.msra.mxu0 0.0
    %1731 = vmatpush.msra.mxu0 0.0
    %1732 = vmatpush.msra.mxu0 0.0
    %1733 = vmatpush.msra.mxu0 0.0
    %1734 = vmatpush.msra.mxu0 %v1615
    %1735 = vmatpush.msra.mxu0 %v1614
    %1736 = vmatpush.msra.mxu0 %v1613
    %1737 = vmatpush.msra.mxu0 %v1612
    %1738 = vmatpush.msra.mxu0 %v1611
    %1739 = vmatpush.msra.mxu0 %v1610
    %1740 = vmatpush.msra.mxu0 %v1609
    %1741 = vmatpush.msra.mxu0 %v1608
    %1742 = vmatmul.f32.gmra.mxu0 %v1657
    %v1743 = vpop.f32.mrf.mxu0
    %v1744 = vadd.f32 0.0, %v1743
    %1745 = vmatmul.f32.gmra.mxu0 %v1660
    %v1746 = vpop.f32.mrf.mxu0
    %v1747 = vadd.f32 0.0, %v1746
    %1748 = vmatmul.f32.gmra.mxu0 %v1663
    %v1749 = vpop.f32.mrf.mxu0
    %v1750 = vadd.f32 0.0, %v1749
    %1751 = vmatmul.f32.gmra.mxu0 %v1666
    %v1752 = vpop.f32.mrf.mxu0
    %v1753 = vadd.f32 0.0, %v1752
    %1754 = vdwg.mxu0
    %1755 = vmatpush.msra.mxu0 0.0
    %1756 = vmatpush.msra.mxu0 0.0
    %1757 = vmatpush.msra.mxu0 0.0
    %1758 = vmatpush.msra.mxu0 0.0
    %1759 = vmatpush.msra.mxu0 0.0
    %1760 = vmatpush.msra.mxu0 0.0
    %1761 = vmatpush.msra.mxu0 0.0
    %1762 = vmatpush.msra.mxu0 0.0
    %1763 = vmatpush.msra.mxu0 %v1623
    %1764 = vmatpush.msra.mxu0 %v1622
    %1765 = vmatpush.msra.mxu0 %v1621
    %1766 = vmatpush.msra.mxu0 %v1620
    %1767 = vmatpush.msra.mxu0 %v1619
    %1768 = vmatpush.msra.mxu0 %v1618
    %1769 = vmatpush.msra.mxu0 %v1617
    %1770 = vmatpush.msra.mxu0 %v1616
    %1771 = vmatmul.f32.gmra.mxu0 %v1657
    %v1772 = vpop.f32.mrf.mxu0
    %v1773 = vadd.f32 0.0, %v1772
    %1774 = vmatmul.f32.gmra.mxu0 %v1660
    %v1775 = vpop.f32.mrf.mxu0
    %v1776 = vadd.f32 0.0, %v1775
    %1777 = vmatmul.f32.gmra.mxu0 %v1663
    %v1778 = vpop.f32.mrf.mxu0
    %v1779 = vadd.f32 0.0, %v1778
    %1780 = vmatmul.f32.gmra.mxu0 %v1666
    %v1781 = vpop.f32.mrf.mxu0
    %v1782 = vadd.f32 0.0, %v1781
    %1783 = vdwg.mxu0
    %v1785 = vsel %vm1655, %v1651, 0
    %v1788 = vsel %vm1655, %v1652, 0
    %v1791 = vsel %vm1655, %v1653, 0
    %v1794 = vsel %vm1655, %v1654, 0
    %1796 = vmatpush.msra.mxu0 0.0
    %1797 = vmatpush.msra.mxu0 0.0
    %1798 = vmatpush.msra.mxu0 0.0
    %1799 = vmatpush.msra.mxu0 0.0
    %1800 = vmatpush.msra.mxu0 0.0
    %1801 = vmatpush.msra.mxu0 0.0
    %1802 = vmatpush.msra.mxu0 0.0
    %1803 = vmatpush.msra.mxu0 0.0
    %1804 = vmatpush.msra.mxu0 %v1599
    %1805 = vmatpush.msra.mxu0 %v1598
    %1806 = vmatpush.msra.mxu0 %v1597
    %1807 = vmatpush.msra.mxu0 %v1596
    %1808 = vmatpush.msra.mxu0 %v1595
    %1809 = vmatpush.msra.mxu0 %v1594
    %1810 = vmatpush.msra.mxu0 %v1593
    %1811 = vmatpush.msra.mxu0 %v1592
    %1812 = vmatmul.f32.gmra.mxu0 %v1785
    %v1813 = vpop.f32.mrf.mxu0
    %v1814 = vadd.f32 0.0, %v1813
    %1815 = vmatmul.f32.gmra.mxu0 %v1788
    %v1816 = vpop.f32.mrf.mxu0
    %v1817 = vadd.f32 0.0, %v1816
    %1818 = vmatmul.f32.gmra.mxu0 %v1791
    %v1819 = vpop.f32.mrf.mxu0
    %v1820 = vadd.f32 0.0, %v1819
    %1821 = vmatmul.f32.gmra.mxu0 %v1794
    %v1822 = vpop.f32.mrf.mxu0
    %v1823 = vadd.f32 0.0, %v1822
    %1824 = vdwg.mxu0
    %1825 = vmatpush.msra.mxu0 0.0
    %1826 = vmatpush.msra.mxu0 0.0
    %1827 = vmatpush.msra.mxu0 0.0
    %1828 = vmatpush.msra.mxu0 0.0
    %1829 = vmatpush.msra.mxu0 0.0
    %1830 = vmatpush.msra.mxu0 0.0
    %1831 = vmatpush.msra.mxu0 0.0
    %1832 = vmatpush.msra.mxu0 0.0
    %1833 = vmatpush.msra.mxu0 %v1607
    %1834 = vmatpush.msra.mxu0 %v1606
    %1835 = vmatpush.msra.mxu0 %v1605
    %1836 = vmatpush.msra.mxu0 %v1604
    %1837 = vmatpush.msra.mxu0 %v1603
    %1838 = vmatpush.msra.mxu0 %v1602
    %1839 = vmatpush.msra.mxu0 %v1601
    %1840 = vmatpush.msra.mxu0 %v1600
    %1841 = vmatmul.f32.gmra.mxu0 %v1785
    %v1842 = vpop.f32.mrf.mxu0
    %v1843 = vadd.f32 0.0, %v1842
    %1844 = vmatmul.f32.gmra.mxu0 %v1788
    %v1845 = vpop.f32.mrf.mxu0
    %v1846 = vadd.f32 0.0, %v1845
    %1847 = vmatmul.f32.gmra.mxu0 %v1791
    %v1848 = vpop.f32.mrf.mxu0
    %v1849 = vadd.f32 0.0, %v1848
    %1850 = vmatmul.f32.gmra.mxu0 %v1794
    %v1851 = vpop.f32.mrf.mxu0
    %v1852 = vadd.f32 0.0, %v1851
    %1853 = vdwg.mxu0
    %1854 = vmatpush.msra.mxu0 0.0
    %1855 = vmatpush.msra.mxu0 0.0
    %1856 = vmatpush.msra.mxu0 0.0
    %1857 = vmatpush.msra.mxu0 0.0
    %1858 = vmatpush.msra.mxu0 0.0
    %1859 = vmatpush.msra.mxu0 0.0
    %1860 = vmatpush.msra.mxu0 0.0
    %1861 = vmatpush.msra.mxu0 0.0
    %1862 = vmatpush.msra.mxu0 %v1615
    %1863 = vmatpush.msra.mxu0 %v1614
    %1864 = vmatpush.msra.mxu0 %v1613
    %1865 = vmatpush.msra.mxu0 %v1612
    %1866 = vmatpush.msra.mxu0 %v1611
    %1867 = vmatpush.msra.mxu0 %v1610
    %1868 = vmatpush.msra.mxu0 %v1609
    %1869 = vmatpush.msra.mxu0 %v1608
    %1870 = vmatmul.f32.gmra.mxu0 %v1785
    %v1871 = vpop.f32.mrf.mxu0
    %v1872 = vadd.f32 0.0, %v1871
    %1873 = vmatmul.f32.gmra.mxu0 %v1788
    %v1874 = vpop.f32.mrf.mxu0
    %v1875 = vadd.f32 0.0, %v1874
    %1876 = vmatmul.f32.gmra.mxu0 %v1791
    %v1877 = vpop.f32.mrf.mxu0
    %v1878 = vadd.f32 0.0, %v1877
    %1879 = vmatmul.f32.gmra.mxu0 %v1794
    %v1880 = vpop.f32.mrf.mxu0
    %v1881 = vadd.f32 0.0, %v1880
    %1882 = vdwg.mxu0
    %1883 = vmatpush.msra.mxu0 0.0
    %1884 = vmatpush.msra.mxu0 0.0
    %1885 = vmatpush.msra.mxu0 0.0
    %1886 = vmatpush.msra.mxu0 0.0
    %1887 = vmatpush.msra.mxu0 0.0
    %1888 = vmatpush.msra.mxu0 0.0
    %1889 = vmatpush.msra.mxu0 0.0
    %1890 = vmatpush.msra.mxu0 0.0
    %1891 = vmatpush.msra.mxu0 %v1623
    %1892 = vmatpush.msra.mxu0 %v1622
    %1893 = vmatpush.msra.mxu0 %v1621
    %1894 = vmatpush.msra.mxu0 %v1620
    %1895 = vmatpush.msra.mxu0 %v1619
    %1896 = vmatpush.msra.mxu0 %v1618
    %1897 = vmatpush.msra.mxu0 %v1617
    %1898 = vmatpush.msra.mxu0 %v1616
    %1899 = vmatmul.f32.gmra.mxu0 %v1785
    %v1900 = vpop.f32.mrf.mxu0
    %v1901 = vadd.f32 0.0, %v1900
    %1902 = vmatmul.f32.gmra.mxu0 %v1788
    %v1903 = vpop.f32.mrf.mxu0
    %v1904 = vadd.f32 0.0, %v1903
    %1905 = vmatmul.f32.gmra.mxu0 %v1791
    %v1906 = vpop.f32.mrf.mxu0
    %v1907 = vadd.f32 0.0, %v1906
    %1908 = vmatmul.f32.gmra.mxu0 %v1794
    %v1909 = vpop.f32.mrf.mxu0
    %v1910 = vadd.f32 0.0, %v1909
    %1911 = vdwg.mxu0
    %v1912 = vmax.f32 %v1686, %v1814
    %v1913 = vmax.f32 %v1689, %v1817
    %v1914 = vmax.f32 %v1692, %v1820
    %v1915 = vmax.f32 %v1695, %v1823
    %v1916 = vmax.f32 %v1715, %v1843
    %v1917 = vmax.f32 %v1718, %v1846
    %v1918 = vmax.f32 %v1721, %v1849
    %v1919 = vmax.f32 %v1724, %v1852
    %v1920 = vmax.f32 %v1744, %v1872
    %v1921 = vmax.f32 %v1747, %v1875
    %v1922 = vmax.f32 %v1750, %v1878
    %v1923 = vmax.f32 %v1753, %v1881
    %v1924 = vmax.f32 %v1773, %v1901
    %v1925 = vmax.f32 %v1776, %v1904
    %v1926 = vmax.f32 %v1779, %v1907
    %v1927 = vmax.f32 %v1782, %v1910
    %vm1928 = vcmask 517120
    %1929 = vst.msk [vmem:[#allocation3] sm:$0x3] %vm1928, 0.0
    %1930 = vst.msk [vmem:[#allocation3 + $0x28] sm:$0x3] %vm1928, 0.0
    %1931 = vst.msk [vmem:[#allocation3 + $0x50] sm:$0x3] %vm1928, 0.0
    %1932 = vst.msk [vmem:[#allocation3 + $0x78] sm:$0x3] %vm1928, 0.0
    %1933 = vst.msk [vmem:[#allocation3 + $0x22] sm:$0x3] %vm1928, 0.0
    %1934 = vst.msk [vmem:[#allocation3 + $0x4a] sm:$0x3] %vm1928, 0.0
    %1935 = vst.msk [vmem:[#allocation3 + $0x72] sm:$0x3] %vm1928, 0.0
    %1936 = vst.msk [vmem:[#allocation3 + $0x9a] sm:$0x3] %vm1928, 0.0
    %1937 = vst.msk [vmem:[#allocation3 + $0x2] sm:$0xff] %vm1655, %v1912
    %1938 = vst.msk [vmem:[#allocation3 + $0xa] sm:$0xff] %vm1655, %v1913
    %1939 = vst.msk [vmem:[#allocation3 + $0x12] sm:$0xff] %vm1655, %v1914
    %1940 = vst.msk [vmem:[#allocation3 + $0x1a] sm:$0xff] %vm1655, %v1915
    %1941 = vst.msk [vmem:[#allocation3 + $0x2a] sm:$0xff] %vm1655, %v1916
    %1942 = vst.msk [vmem:[#allocation3 + $0x32] sm:$0xff] %vm1655, %v1917
    %1943 = vst.msk [vmem:[#allocation3 + $0x3a] sm:$0xff] %vm1655, %v1918
    %1944 = vst.msk [vmem:[#allocation3 + $0x42] sm:$0xff] %vm1655, %v1919
    %1945 = vst.msk [vmem:[#allocation3 + $0x52] sm:$0xff] %vm1655, %v1920
    %1946 = vst.msk [vmem:[#allocation3 + $0x5a] sm:$0xff] %vm1655, %v1921
    %1947 = vst.msk [vmem:[#allocation3 + $0x62] sm:$0xff] %vm1655, %v1922
    %1948 = vst.msk [vmem:[#allocation3 + $0x6a] sm:$0xff] %vm1655, %v1923
    %1949 = vst.msk [vmem:[#allocation3 + $0x7a] sm:$0xff] %vm1655, %v1924
    %1950 = vst.msk [vmem:[#allocation3 + $0x82] sm:$0xff] %vm1655, %v1925
    %1951 = vst.msk [vmem:[#allocation3 + $0x8a] sm:$0xff] %vm1655, %v1926
    %1952 = vst.msk [vmem:[#allocation3 + $0x92] sm:$0xff] %vm1655, %v1927
    %v1953 = vld [vmem:[#allocation3] sm:$0xff]
    %v1954 = vld [vmem:[#allocation3 + $0x8] sm:$0xff]
    %v1955 = vld [vmem:[#allocation3 + $0x10] sm:$0xff]
    %v1956 = vld [vmem:[#allocation3 + $0x18] sm:$0xff]
    %v1957 = vld [vmem:[#allocation3 + $0x28] sm:$0xff]
    %v1958 = vld [vmem:[#allocation3 + $0x30] sm:$0xff]
    %v1959 = vld [vmem:[#allocation3 + $0x38] sm:$0xff]
    %v1960 = vld [vmem:[#allocation3 + $0x40] sm:$0xff]
    %v1961 = vld [vmem:[#allocation3 + $0x50] sm:$0xff]
    %v1962 = vld [vmem:[#allocation3 + $0x58] sm:$0xff]
    %v1963 = vld [vmem:[#allocation3 + $0x60] sm:$0xff]
    %v1964 = vld [vmem:[#allocation3 + $0x68] sm:$0xff]
    %v1965 = vld [vmem:[#allocation3 + $0x78] sm:$0xff]
    %v1966 = vld [vmem:[#allocation3 + $0x80] sm:$0xff]
    %v1967 = vld [vmem:[#allocation3 + $0x88] sm:$0xff]
    %v1968 = vld [vmem:[#allocation3 + $0x90] sm:$0xff]
    %v1969 = vpack.c.bf16 %v1954, %v1953
    %v1970 = vpack.c.bf16 %v1956, %v1955
    %v1971 = vpack.c.bf16 %v1958, %v1957
    %v1972 = vpack.c.bf16 %v1960, %v1959
    %v1973 = vpack.c.bf16 %v1962, %v1961
    %v1974 = vpack.c.bf16 %v1964, %v1963
    %v1975 = vpack.c.bf16 %v1966, %v1965
    %v1976 = vpack.c.bf16 %v1968, %v1967
    %v1977 = vld [vmem:[%s5] sm:$0xf]
    %v1978 = vld [vmem:[%s5 + $0x4] sm:$0xf]
    %v1979 = vld [vmem:[%s5 + $0x8] sm:$0xf]
    %v1980 = vld [vmem:[%s5 + $0xc] sm:$0xf]
    %v1981 = vld [vmem:[%s5 + $0x10] sm:$0xf]
    %v1982 = vld [vmem:[%s5 + $0x14] sm:$0xf]
    %v1983 = vld [vmem:[%s5 + $0x18] sm:$0xf]
    %v1984 = vld [vmem:[%s5 + $0x1c] sm:$0xf]
    %v1985 = vld [vmem:[#allocation3 + $0x1] sm:$0xff]
    %v1986 = vld [vmem:[#allocation3 + $0x9] sm:$0xff]
    %v1987 = vld [vmem:[#allocation3 + $0x11] sm:$0xff]
    %v1988 = vld [vmem:[#allocation3 + $0x19] sm:$0xff]
    %v1989 = vld [vmem:[#allocation3 + $0x29] sm:$0xff]
    %v1990 = vld [vmem:[#allocation3 + $0x31] sm:$0xff]
    %v1991 = vld [vmem:[#allocation3 + $0x39] sm:$0xff]
    %v1992 = vld [vmem:[#allocation3 + $0x41] sm:$0xff]
    %v1993 = vld [vmem:[#allocation3 + $0x51] sm:$0xff]
    %v1994 = vld [vmem:[#allocation3 + $0x59] sm:$0xff]
    %v1995 = vld [vmem:[#allocation3 + $0x61] sm:$0xff]
    %v1996 = vld [vmem:[#allocation3 + $0x69] sm:$0xff]
    %v1997 = vld [vmem:[#allocation3 + $0x79] sm:$0xff]
    %v1998 = vld [vmem:[#allocation3 + $0x81] sm:$0xff]
    %v1999 = vld [vmem:[#allocation3 + $0x89] sm:$0xff]
    %v2000 = vld [vmem:[#allocation3 + $0x91] sm:$0xff]
    %v2001 = vpack.c.bf16 %v1986, %v1985
    %v2002 = vpack.c.bf16 %v1988, %v1987
    %v2003 = vpack.c.bf16 %v1990, %v1989
    %v2004 = vpack.c.bf16 %v1992, %v1991
    %v2005 = vpack.c.bf16 %v1994, %v1993
    %v2006 = vpack.c.bf16 %v1996, %v1995
    %v2007 = vpack.c.bf16 %v1998, %v1997
    %v2008 = vpack.c.bf16 %v2000, %v1999
    %s2009 = scalar_lea.vmem %s5, 32
    %v2010 = vld [vmem:[%s2009] sm:$0xf]
    %v2011 = vld [vmem:[%s2009 + $0x4] sm:$0xf]
    %v2012 = vld [vmem:[%s2009 + $0x8] sm:$0xf]
    %v2013 = vld [vmem:[%s2009 + $0xc] sm:$0xf]
    %v2014 = vld [vmem:[%s2009 + $0x10] sm:$0xf]
    %v2015 = vld [vmem:[%s2009 + $0x14] sm:$0xf]
    %v2016 = vld [vmem:[%s2009 + $0x18] sm:$0xf]
    %v2017 = vld [vmem:[%s2009 + $0x1c] sm:$0xf]
    %v2026 = vunpack.c.l.b16 %v2010
    %v2027 = vunpack.c.l.b16 %v2011
    %v2028 = vunpack.c.l.b16 %v2012
    %v2029 = vunpack.c.l.b16 %v2013
    %v2030 = vunpack.c.l.b16 %v2014
    %v2031 = vunpack.c.l.b16 %v2015
    %v2032 = vunpack.c.l.b16 %v2016
    %v2033 = vunpack.c.l.b16 %v2017
    %v2034 = vpack.c.b16 %v2027, %v2026
    %v2035 = vpack.c.b16 %v2029, %v2028
    %v2036 = vpack.c.b16 %v2031, %v2030
    %v2037 = vpack.c.b16 %v2033, %v2032
    %v2043 = vsel %vm1655, %v2001, 0
    %v2046 = vsel %vm1655, %v2002, 0
    %v2049 = vsel %vm1655, %v2003, 0
    %v2052 = vsel %vm1655, %v2004, 0
    %v2055 = vsel %vm1655, %v2005, 0
    %v2058 = vsel %vm1655, %v2006, 0
    %v2061 = vsel %vm1655, %v2007, 0
    %v2064 = vsel %vm1655, %v2008, 0
    %2066 = vmatpush.bf16.msra.mxu0 0
    %2067 = vmatpush.bf16.msra.mxu0 0
    %2068 = vmatpush.bf16.msra.mxu0 0
    %2069 = vmatpush.bf16.msra.mxu0 0
    %2070 = vmatpush.bf16.msra.mxu0 %v2037
    %2071 = vmatpush.bf16.msra.mxu0 %v2036
    %2072 = vmatpush.bf16.msra.mxu0 %v2035
    %2073 = vmatpush.bf16.msra.mxu0 %v2034
    %2074 = vmatmul.bf16.gmra.mxu0 %v2043
    %v2075 = vpop.f32.mrf.mxu0
    %v2076 = vadd.f32 0.0, %v2075
    %v2077 = vpop.f32.mrf.mxu0
    %v2078 = vadd.f32 0.0, %v2077
    %2079 = vmatmul.bf16.gmra.mxu0 %v2046
    %v2080 = vpop.f32.mrf.mxu0
    %v2081 = vadd.f32 0.0, %v2080
    %v2082 = vpop.f32.mrf.mxu0
    %v2083 = vadd.f32 0.0, %v2082
    %2084 = vmatmul.bf16.gmra.mxu0 %v2049
    %v2085 = vpop.f32.mrf.mxu0
    %v2086 = vadd.f32 0.0, %v2085
    %v2087 = vpop.f32.mrf.mxu0
    %v2088 = vadd.f32 0.0, %v2087
    %2089 = vmatmul.bf16.gmra.mxu0 %v2052
    %v2090 = vpop.f32.mrf.mxu0
    %v2091 = vadd.f32 0.0, %v2090
    %v2092 = vpop.f32.mrf.mxu0
    %v2093 = vadd.f32 0.0, %v2092
    %2094 = vmatmul.bf16.gmra.mxu0 %v2055
    %v2095 = vpop.f32.mrf.mxu0
    %v2096 = vadd.f32 0.0, %v2095
    %v2097 = vpop.f32.mrf.mxu0
    %v2098 = vadd.f32 0.0, %v2097
    %2099 = vmatmul.bf16.gmra.mxu0 %v2058
    %v2100 = vpop.f32.mrf.mxu0
    %v2101 = vadd.f32 0.0, %v2100
    %v2102 = vpop.f32.mrf.mxu0
    %v2103 = vadd.f32 0.0, %v2102
    %2104 = vmatmul.bf16.gmra.mxu0 %v2061
    %v2105 = vpop.f32.mrf.mxu0
    %v2106 = vadd.f32 0.0, %v2105
    %v2107 = vpop.f32.mrf.mxu0
    %v2108 = vadd.f32 0.0, %v2107
    %2109 = vmatmul.bf16.gmra.mxu0 %v2064
    %v2110 = vpop.f32.mrf.mxu0
    %v2111 = vadd.f32 0.0, %v2110
    %v2112 = vpop.f32.mrf.mxu0
    %v2113 = vadd.f32 0.0, %v2112
    %2114 = vdwg.mxu0
    %v2123 = vunpack.c.l.b16 %v1977
    %v2124 = vunpack.c.l.b16 %v1978
    %v2125 = vunpack.c.l.b16 %v1979
    %v2126 = vunpack.c.l.b16 %v1980
    %v2127 = vunpack.c.l.b16 %v1981
    %v2128 = vunpack.c.l.b16 %v1982
    %v2129 = vunpack.c.l.b16 %v1983
    %v2130 = vunpack.c.l.b16 %v1984
    %v2131 = vpack.c.b16 %v2124, %v2123
    %v2132 = vpack.c.b16 %v2126, %v2125
    %v2133 = vpack.c.b16 %v2128, %v2127
    %v2134 = vpack.c.b16 %v2130, %v2129
    %v2140 = vsel %vm1655, %v1969, 0
    %v2143 = vsel %vm1655, %v1970, 0
    %v2146 = vsel %vm1655, %v1971, 0
    %v2149 = vsel %vm1655, %v1972, 0
    %v2152 = vsel %vm1655, %v1973, 0
    %v2155 = vsel %vm1655, %v1974, 0
    %v2158 = vsel %vm1655, %v1975, 0
    %v2161 = vsel %vm1655, %v1976, 0
    %2163 = vmatpush.bf16.msra.mxu0 0
    %2164 = vmatpush.bf16.msra.mxu0 0
    %2165 = vmatpush.bf16.msra.mxu0 0
    %2166 = vmatpush.bf16.msra.mxu0 0
    %2167 = vmatpush.bf16.msra.mxu0 %v2134
    %2168 = vmatpush.bf16.msra.mxu0 %v2133
    %2169 = vmatpush.bf16.msra.mxu0 %v2132
    %2170 = vmatpush.bf16.msra.mxu0 %v2131
    %2171 = vmatmul.bf16.gmra.mxu0 %v2140
    %v2172 = vpop.f32.mrf.mxu0
    %v2173 = vadd.f32 %v2076, %v2172
    %v2174 = vpop.f32.mrf.mxu0
    %v2175 = vadd.f32 %v2078, %v2174
    %2176 = vmatmul.bf16.gmra.mxu0 %v2143
    %v2177 = vpop.f32.mrf.mxu0
    %v2178 = vadd.f32 %v2081, %v2177
    %v2179 = vpop.f32.mrf.mxu0
    %v2180 = vadd.f32 %v2083, %v2179
    %2181 = vmatmul.bf16.gmra.mxu0 %v2146
    %v2182 = vpop.f32.mrf.mxu0
    %v2183 = vadd.f32 %v2086, %v2182
    %v2184 = vpop.f32.mrf.mxu0
    %v2185 = vadd.f32 %v2088, %v2184
    %2186 = vmatmul.bf16.gmra.mxu0 %v2149
    %v2187 = vpop.f32.mrf.mxu0
    %v2188 = vadd.f32 %v2091, %v2187
    %v2189 = vpop.f32.mrf.mxu0
    %v2190 = vadd.f32 %v2093, %v2189
    %2191 = vmatmul.bf16.gmra.mxu0 %v2152
    %v2192 = vpop.f32.mrf.mxu0
    %v2193 = vadd.f32 %v2096, %v2192
    %v2194 = vpop.f32.mrf.mxu0
    %v2195 = vadd.f32 %v2098, %v2194
    %2196 = vmatmul.bf16.gmra.mxu0 %v2155
    %v2197 = vpop.f32.mrf.mxu0
    %v2198 = vadd.f32 %v2101, %v2197
    %v2199 = vpop.f32.mrf.mxu0
    %v2200 = vadd.f32 %v2103, %v2199
    %2201 = vmatmul.bf16.gmra.mxu0 %v2158
    %v2202 = vpop.f32.mrf.mxu0
    %v2203 = vadd.f32 %v2106, %v2202
    %v2204 = vpop.f32.mrf.mxu0
    %v2205 = vadd.f32 %v2108, %v2204
    %2206 = vmatmul.bf16.gmra.mxu0 %v2161
    %v2207 = vpop.f32.mrf.mxu0
    %v2208 = vadd.f32 %v2111, %v2207
    %v2209 = vpop.f32.mrf.mxu0
    %v2210 = vadd.f32 %v2113, %v2209
    %2211 = vdwg.mxu0
    %v2212 = vld [vmem:[#allocation3 + $0x2] sm:$0xff]
    %v2213 = vld [vmem:[#allocation3 + $0xa] sm:$0xff]
    %v2214 = vld [vmem:[#allocation3 + $0x12] sm:$0xff]
    %v2215 = vld [vmem:[#allocation3 + $0x1a] sm:$0xff]
    %v2216 = vld [vmem:[#allocation3 + $0x2a] sm:$0xff]
    %v2217 = vld [vmem:[#allocation3 + $0x32] sm:$0xff]
    %v2218 = vld [vmem:[#allocation3 + $0x3a] sm:$0xff]
    %v2219 = vld [vmem:[#allocation3 + $0x42] sm:$0xff]
    %v2220 = vld [vmem:[#allocation3 + $0x52] sm:$0xff]
    %v2221 = vld [vmem:[#allocation3 + $0x5a] sm:$0xff]
    %v2222 = vld [vmem:[#allocation3 + $0x62] sm:$0xff]
    %v2223 = vld [vmem:[#allocation3 + $0x6a] sm:$0xff]
    %v2224 = vld [vmem:[#allocation3 + $0x7a] sm:$0xff]
    %v2225 = vld [vmem:[#allocation3 + $0x82] sm:$0xff]
    %v2226 = vld [vmem:[#allocation3 + $0x8a] sm:$0xff]
    %v2227 = vld [vmem:[#allocation3 + $0x92] sm:$0xff]
    %v2228 = vpack.c.bf16 %v2213, %v2212
    %v2229 = vpack.c.bf16 %v2215, %v2214
    %v2230 = vpack.c.bf16 %v2217, %v2216
    %v2231 = vpack.c.bf16 %v2219, %v2218
    %v2232 = vpack.c.bf16 %v2221, %v2220
    %v2233 = vpack.c.bf16 %v2223, %v2222
    %v2234 = vpack.c.bf16 %v2225, %v2224
    %v2235 = vpack.c.bf16 %v2227, %v2226
    %s2236 = scalar_lea.vmem %s5, 64
    %v2237 = vld [vmem:[%s2236] sm:$0xf]
    %v2238 = vld [vmem:[%s2236 + $0x4] sm:$0xf]
    %v2239 = vld [vmem:[%s2236 + $0x8] sm:$0xf]
    %v2240 = vld [vmem:[%s2236 + $0xc] sm:$0xf]
    %v2241 = vld [vmem:[%s2236 + $0x10] sm:$0xf]
    %v2242 = vld [vmem:[%s2236 + $0x14] sm:$0xf]
    %v2243 = vld [vmem:[%s2236 + $0x18] sm:$0xf]
    %v2244 = vld [vmem:[%s2236 + $0x1c] sm:$0xf]
    %v2253 = vunpack.c.l.b16 %v2237
    %v2254 = vunpack.c.l.b16 %v2238
    %v2255 = vunpack.c.l.b16 %v2239
    %v2256 = vunpack.c.l.b16 %v2240
    %v2257 = vunpack.c.l.b16 %v2241
    %v2258 = vunpack.c.l.b16 %v2242
    %v2259 = vunpack.c.l.b16 %v2243
    %v2260 = vunpack.c.l.b16 %v2244
    %v2261 = vpack.c.b16 %v2254, %v2253
    %v2262 = vpack.c.b16 %v2256, %v2255
    %v2263 = vpack.c.b16 %v2258, %v2257
    %v2264 = vpack.c.b16 %v2260, %v2259
    %v2270 = vsel %vm1655, %v2228, 0
    %v2273 = vsel %vm1655, %v2229, 0
    %v2276 = vsel %vm1655, %v2230, 0
    %v2279 = vsel %vm1655, %v2231, 0
    %v2282 = vsel %vm1655, %v2232, 0
    %v2285 = vsel %vm1655, %v2233, 0
    %v2288 = vsel %vm1655, %v2234, 0
    %v2291 = vsel %vm1655, %v2235, 0
    %2293 = vmatpush.bf16.msra.mxu0 0
    %2294 = vmatpush.bf16.msra.mxu0 0
    %2295 = vmatpush.bf16.msra.mxu0 0
    %2296 = vmatpush.bf16.msra.mxu0 0
    %2297 = vmatpush.bf16.msra.mxu0 %v2264
    %2298 = vmatpush.bf16.msra.mxu0 %v2263
    %2299 = vmatpush.bf16.msra.mxu0 %v2262
    %2300 = vmatpush.bf16.msra.mxu0 %v2261
    %2301 = vmatmul.bf16.gmra.mxu0 %v2270
    %v2302 = vpop.f32.mrf.mxu0
    %v2303 = vadd.f32 0.0, %v2302
    %v2304 = vpop.f32.mrf.mxu0
    %v2305 = vadd.f32 0.0, %v2304
    %2306 = vmatmul.bf16.gmra.mxu0 %v2273
    %v2307 = vpop.f32.mrf.mxu0
    %v2308 = vadd.f32 0.0, %v2307
    %v2309 = vpop.f32.mrf.mxu0
    %v2310 = vadd.f32 0.0, %v2309
    %2311 = vmatmul.bf16.gmra.mxu0 %v2276
    %v2312 = vpop.f32.mrf.mxu0
    %v2313 = vadd.f32 0.0, %v2312
    %v2314 = vpop.f32.mrf.mxu0
    %v2315 = vadd.f32 0.0, %v2314
    %2316 = vmatmul.bf16.gmra.mxu0 %v2279
    %v2317 = vpop.f32.mrf.mxu0
    %v2318 = vadd.f32 0.0, %v2317
    %v2319 = vpop.f32.mrf.mxu0
    %v2320 = vadd.f32 0.0, %v2319
    %2321 = vmatmul.bf16.gmra.mxu0 %v2282
    %v2322 = vpop.f32.mrf.mxu0
    %v2323 = vadd.f32 0.0, %v2322
    %v2324 = vpop.f32.mrf.mxu0
    %v2325 = vadd.f32 0.0, %v2324
    %2326 = vmatmul.bf16.gmra.mxu0 %v2285
    %v2327 = vpop.f32.mrf.mxu0
    %v2328 = vadd.f32 0.0, %v2327
    %v2329 = vpop.f32.mrf.mxu0
    %v2330 = vadd.f32 0.0, %v2329
    %2331 = vmatmul.bf16.gmra.mxu0 %v2288
    %v2332 = vpop.f32.mrf.mxu0
    %v2333 = vadd.f32 0.0, %v2332
    %v2334 = vpop.f32.mrf.mxu0
    %v2335 = vadd.f32 0.0, %v2334
    %2336 = vmatmul.bf16.gmra.mxu0 %v2291
    %v2337 = vpop.f32.mrf.mxu0
    %v2338 = vadd.f32 0.0, %v2337
    %v2339 = vpop.f32.mrf.mxu0
    %v2340 = vadd.f32 0.0, %v2339
    %2341 = vdwg.mxu0
    %v2342 = vadd.f32 %v2173, %v2303
    %v2343 = vadd.f32 %v2175, %v2305
    %v2344 = vadd.f32 %v2178, %v2308
    %v2345 = vadd.f32 %v2180, %v2310
    %v2346 = vadd.f32 %v2183, %v2313
    %v2347 = vadd.f32 %v2185, %v2315
    %v2348 = vadd.f32 %v2188, %v2318
    %v2349 = vadd.f32 %v2190, %v2320
    %v2350 = vadd.f32 %v2193, %v2323
    %v2351 = vadd.f32 %v2195, %v2325
    %v2352 = vadd.f32 %v2198, %v2328
    %v2353 = vadd.f32 %v2200, %v2330
    %v2354 = vadd.f32 %v2203, %v2333
    %v2355 = vadd.f32 %v2205, %v2335
    %v2356 = vadd.f32 %v2208, %v2338
    %v2357 = vadd.f32 %v2210, %v2340
    %v2358 = vld [vmem:[#allocation3 + $0x3] sm:$0xff]
    %v2359 = vld [vmem:[#allocation3 + $0xb] sm:$0xff]
    %v2360 = vld [vmem:[#allocation3 + $0x13] sm:$0xff]
    %v2361 = vld [vmem:[#allocation3 + $0x1b] sm:$0xff]
    %v2362 = vld [vmem:[#allocation3 + $0x2b] sm:$0xff]
    %v2363 = vld [vmem:[#allocation3 + $0x33] sm:$0xff]
    %v2364 = vld [vmem:[#allocation3 + $0x3b] sm:$0xff]
    %v2365 = vld [vmem:[#allocation3 + $0x43] sm:$0xff]
    %v2366 = vld [vmem:[#allocation3 + $0x53] sm:$0xff]
    %v2367 = vld [vmem:[#allocation3 + $0x5b] sm:$0xff]
    %v2368 = vld [vmem:[#allocation3 + $0x63] sm:$0xff]
    %v2369 = vld [vmem:[#allocation3 + $0x6b] sm:$0xff]
    %v2370 = vld [vmem:[#allocation3 + $0x7b] sm:$0xff]
    %v2371 = vld [vmem:[#allocation3 + $0x83] sm:$0xff]
    %v2372 = vld [vmem:[#allocation3 + $0x8b] sm:$0xff]
    %v2373 = vld [vmem:[#allocation3 + $0x93] sm:$0xff]
    %v2374 = vpack.c.bf16 %v2359, %v2358
    %v2375 = vpack.c.bf16 %v2361, %v2360
    %v2376 = vpack.c.bf16 %v2363, %v2362
    %v2377 = vpack.c.bf16 %v2365, %v2364
    %v2378 = vpack.c.bf16 %v2367, %v2366
    %v2379 = vpack.c.bf16 %v2369, %v2368
    %v2380 = vpack.c.bf16 %v2371, %v2370
    %v2381 = vpack.c.bf16 %v2373, %v2372
    %s2382 = scalar_lea.vmem %s5, 96
    %v2383 = vld [vmem:[%s2382] sm:$0xf]
    %v2384 = vld [vmem:[%s2382 + $0x4] sm:$0xf]
    %v2385 = vld [vmem:[%s2382 + $0x8] sm:$0xf]
    %v2386 = vld [vmem:[%s2382 + $0xc] sm:$0xf]
    %v2387 = vld [vmem:[%s2382 + $0x10] sm:$0xf]
    %v2388 = vld [vmem:[%s2382 + $0x14] sm:$0xf]
    %v2389 = vld [vmem:[%s2382 + $0x18] sm:$0xf]
    %v2390 = vld [vmem:[%s2382 + $0x1c] sm:$0xf]
    %v2399 = vunpack.c.l.b16 %v2383
    %v2400 = vunpack.c.l.b16 %v2384
    %v2401 = vunpack.c.l.b16 %v2385
    %v2402 = vunpack.c.l.b16 %v2386
    %v2403 = vunpack.c.l.b16 %v2387
    %v2404 = vunpack.c.l.b16 %v2388
    %v2405 = vunpack.c.l.b16 %v2389
    %v2406 = vunpack.c.l.b16 %v2390
    %v2407 = vpack.c.b16 %v2400, %v2399
    %v2408 = vpack.c.b16 %v2402, %v2401
    %v2409 = vpack.c.b16 %v2404, %v2403
    %v2410 = vpack.c.b16 %v2406, %v2405
    %v2416 = vsel %vm1655, %v2374, 0
    %v2419 = vsel %vm1655, %v2375, 0
    %v2422 = vsel %vm1655, %v2376, 0
    %v2425 = vsel %vm1655, %v2377, 0
    %v2428 = vsel %vm1655, %v2378, 0
    %v2431 = vsel %vm1655, %v2379, 0
    %v2434 = vsel %vm1655, %v2380, 0
    %v2437 = vsel %vm1655, %v2381, 0
    %2439 = vmatpush.bf16.msra.mxu0 0
    %2440 = vmatpush.bf16.msra.mxu0 0
    %2441 = vmatpush.bf16.msra.mxu0 0
    %2442 = vmatpush.bf16.msra.mxu0 0
    %2443 = vmatpush.bf16.msra.mxu0 %v2410
    %2444 = vmatpush.bf16.msra.mxu0 %v2409
    %2445 = vmatpush.bf16.msra.mxu0 %v2408
    %2446 = vmatpush.bf16.msra.mxu0 %v2407
    %2447 = vmatmul.bf16.gmra.mxu0 %v2416
    %v2448 = vpop.f32.mrf.mxu0
    %v2449 = vadd.f32 0.0, %v2448
    %v2450 = vpop.f32.mrf.mxu0
    %v2451 = vadd.f32 0.0, %v2450
    %2452 = vmatmul.bf16.gmra.mxu0 %v2419
    %v2453 = vpop.f32.mrf.mxu0
    %v2454 = vadd.f32 0.0, %v2453
    %v2455 = vpop.f32.mrf.mxu0
    %v2456 = vadd.f32 0.0, %v2455
    %2457 = vmatmul.bf16.gmra.mxu0 %v2422
    %v2458 = vpop.f32.mrf.mxu0
    %v2459 = vadd.f32 0.0, %v2458
    %v2460 = vpop.f32.mrf.mxu0
    %v2461 = vadd.f32 0.0, %v2460
    %2462 = vmatmul.bf16.gmra.mxu0 %v2425
    %v2463 = vpop.f32.mrf.mxu0
    %v2464 = vadd.f32 0.0, %v2463
    %v2465 = vpop.f32.mrf.mxu0
    %v2466 = vadd.f32 0.0, %v2465
    %2467 = vmatmul.bf16.gmra.mxu0 %v2428
    %v2468 = vpop.f32.mrf.mxu0
    %v2469 = vadd.f32 0.0, %v2468
    %v2470 = vpop.f32.mrf.mxu0
    %v2471 = vadd.f32 0.0, %v2470
    %2472 = vmatmul.bf16.gmra.mxu0 %v2431
    %v2473 = vpop.f32.mrf.mxu0
    %v2474 = vadd.f32 0.0, %v2473
    %v2475 = vpop.f32.mrf.mxu0
    %v2476 = vadd.f32 0.0, %v2475
    %2477 = vmatmul.bf16.gmra.mxu0 %v2434
    %v2478 = vpop.f32.mrf.mxu0
    %v2479 = vadd.f32 0.0, %v2478
    %v2480 = vpop.f32.mrf.mxu0
    %v2481 = vadd.f32 0.0, %v2480
    %2482 = vmatmul.bf16.gmra.mxu0 %v2437
    %v2483 = vpop.f32.mrf.mxu0
    %v2484 = vadd.f32 0.0, %v2483
    %v2485 = vpop.f32.mrf.mxu0
    %v2486 = vadd.f32 0.0, %v2485
    %2487 = vdwg.mxu0
    %v2488 = vadd.f32 %v2342, %v2449
    %v2489 = vadd.f32 %v2343, %v2451
    %v2490 = vadd.f32 %v2344, %v2454
    %v2491 = vadd.f32 %v2345, %v2456
    %v2492 = vadd.f32 %v2346, %v2459
    %v2493 = vadd.f32 %v2347, %v2461
    %v2494 = vadd.f32 %v2348, %v2464
    %v2495 = vadd.f32 %v2349, %v2466
    %v2496 = vadd.f32 %v2350, %v2469
    %v2497 = vadd.f32 %v2351, %v2471
    %v2498 = vadd.f32 %v2352, %v2474
    %v2499 = vadd.f32 %v2353, %v2476
    %v2500 = vadd.f32 %v2354, %v2479
    %v2501 = vadd.f32 %v2355, %v2481
    %v2502 = vadd.f32 %v2356, %v2484
    %v2503 = vadd.f32 %v2357, %v2486
    %v2504 = vld [vmem:[#allocation3 + $0x4] sm:$0xff]
    %v2505 = vld [vmem:[#allocation3 + $0xc] sm:$0xff]
    %v2506 = vld [vmem:[#allocation3 + $0x14] sm:$0xff]
    %v2507 = vld [vmem:[#allocation3 + $0x1c] sm:$0xff]
    %v2508 = vld [vmem:[#allocation3 + $0x2c] sm:$0xff]
    %v2509 = vld [vmem:[#allocation3 + $0x34] sm:$0xff]
    %v2510 = vld [vmem:[#allocation3 + $0x3c] sm:$0xff]
    %v2511 = vld [vmem:[#allocation3 + $0x44] sm:$0xff]
    %v2512 = vld [vmem:[#allocation3 + $0x54] sm:$0xff]
    %v2513 = vld [vmem:[#allocation3 + $0x5c] sm:$0xff]
    %v2514 = vld [vmem:[#allocation3 + $0x64] sm:$0xff]
    %v2515 = vld [vmem:[#allocation3 + $0x6c] sm:$0xff]
    %v2516 = vld [vmem:[#allocation3 + $0x7c] sm:$0xff]
    %v2517 = vld [vmem:[#allocation3 + $0x84] sm:$0xff]
    %v2518 = vld [vmem:[#allocation3 + $0x8c] sm:$0xff]
    %v2519 = vld [vmem:[#allocation3 + $0x94] sm:$0xff]
    %v2520 = vpack.c.bf16 %v2505, %v2504
    %v2521 = vpack.c.bf16 %v2507, %v2506
    %v2522 = vpack.c.bf16 %v2509, %v2508
    %v2523 = vpack.c.bf16 %v2511, %v2510
    %v2524 = vpack.c.bf16 %v2513, %v2512
    %v2525 = vpack.c.bf16 %v2515, %v2514
    %v2526 = vpack.c.bf16 %v2517, %v2516
    %v2527 = vpack.c.bf16 %v2519, %v2518
    %s2528 = scalar_lea.vmem %s5, 128
    %v2529 = vld [vmem:[%s2528] sm:$0xf]
    %v2530 = vld [vmem:[%s2528 + $0x4] sm:$0xf]
    %v2531 = vld [vmem:[%s2528 + $0x8] sm:$0xf]
    %v2532 = vld [vmem:[%s2528 + $0xc] sm:$0xf]
    %v2533 = vld [vmem:[%s2528 + $0x10] sm:$0xf]
    %v2534 = vld [vmem:[%s2528 + $0x14] sm:$0xf]
    %v2535 = vld [vmem:[%s2528 + $0x18] sm:$0xf]
    %v2536 = vld [vmem:[%s2528 + $0x1c] sm:$0xf]
    %v2545 = vunpack.c.l.b16 %v2529
    %v2546 = vunpack.c.l.b16 %v2530
    %v2547 = vunpack.c.l.b16 %v2531
    %v2548 = vunpack.c.l.b16 %v2532
    %v2549 = vunpack.c.l.b16 %v2533
    %v2550 = vunpack.c.l.b16 %v2534
    %v2551 = vunpack.c.l.b16 %v2535
    %v2552 = vunpack.c.l.b16 %v2536
    %v2553 = vpack.c.b16 %v2546, %v2545
    %v2554 = vpack.c.b16 %v2548, %v2547
    %v2555 = vpack.c.b16 %v2550, %v2549
    %v2556 = vpack.c.b16 %v2552, %v2551
    %v2562 = vsel %vm1655, %v2520, 0
    %v2565 = vsel %vm1655, %v2521, 0
    %v2568 = vsel %vm1655, %v2522, 0
    %v2571 = vsel %vm1655, %v2523, 0
    %v2574 = vsel %vm1655, %v2524, 0
    %v2577 = vsel %vm1655, %v2525, 0
    %v2580 = vsel %vm1655, %v2526, 0
    %v2583 = vsel %vm1655, %v2527, 0
    %2585 = vmatpush.bf16.msra.mxu0 0
    %2586 = vmatpush.bf16.msra.mxu0 0
    %2587 = vmatpush.bf16.msra.mxu0 0
    %2588 = vmatpush.bf16.msra.mxu0 0
    %2589 = vmatpush.bf16.msra.mxu0 %v2556
    %2590 = vmatpush.bf16.msra.mxu0 %v2555
    %2591 = vmatpush.bf16.msra.mxu0 %v2554
    %2592 = vmatpush.bf16.msra.mxu0 %v2553
    %2593 = vmatmul.bf16.gmra.mxu0 %v2562
    %v2594 = vpop.f32.mrf.mxu0
    %v2595 = vadd.f32 0.0, %v2594
    %v2596 = vpop.f32.mrf.mxu0
    %v2597 = vadd.f32 0.0, %v2596
    %2598 = vmatmul.bf16.gmra.mxu0 %v2565
    %v2599 = vpop.f32.mrf.mxu0
    %v2600 = vadd.f32 0.0, %v2599
    %v2601 = vpop.f32.mrf.mxu0
    %v2602 = vadd.f32 0.0, %v2601
    %2603 = vmatmul.bf16.gmra.mxu0 %v2568
    %v2604 = vpop.f32.mrf.mxu0
    %v2605 = vadd.f32 0.0, %v2604
    %v2606 = vpop.f32.mrf.mxu0
    %v2607 = vadd.f32 0.0, %v2606
    %2608 = vmatmul.bf16.gmra.mxu0 %v2571
    %v2609 = vpop.f32.mrf.mxu0
    %v2610 = vadd.f32 0.0, %v2609
    %v2611 = vpop.f32.mrf.mxu0
    %v2612 = vadd.f32 0.0, %v2611
    %2613 = vmatmul.bf16.gmra.mxu0 %v2574
    %v2614 = vpop.f32.mrf.mxu0
    %v2615 = vadd.f32 0.0, %v2614
    %v2616 = vpop.f32.mrf.mxu0
    %v2617 = vadd.f32 0.0, %v2616
    %2618 = vmatmul.bf16.gmra.mxu0 %v2577
    %v2619 = vpop.f32.mrf.mxu0
    %v2620 = vadd.f32 0.0, %v2619
    %v2621 = vpop.f32.mrf.mxu0
    %v2622 = vadd.f32 0.0, %v2621
    %2623 = vmatmul.bf16.gmra.mxu0 %v2580
    %v2624 = vpop.f32.mrf.mxu0
    %v2625 = vadd.f32 0.0, %v2624
    %v2626 = vpop.f32.mrf.mxu0
    %v2627 = vadd.f32 0.0, %v2626
    %2628 = vmatmul.bf16.gmra.mxu0 %v2583
    %v2629 = vpop.f32.mrf.mxu0
    %v2630 = vadd.f32 0.0, %v2629
    %v2631 = vpop.f32.mrf.mxu0
    %v2632 = vadd.f32 0.0, %v2631
    %2633 = vdwg.mxu0
    %v2634 = vadd.f32 %v2488, %v2595
    %v2635 = vadd.f32 %v2489, %v2597
    %v2636 = vadd.f32 %v2490, %v2600
    %v2637 = vadd.f32 %v2491, %v2602
    %v2638 = vadd.f32 %v2492, %v2605
    %v2639 = vadd.f32 %v2493, %v2607
    %v2640 = vadd.f32 %v2494, %v2610
    %v2641 = vadd.f32 %v2495, %v2612
    %v2642 = vadd.f32 %v2496, %v2615
    %v2643 = vadd.f32 %v2497, %v2617
    %v2644 = vadd.f32 %v2498, %v2620
    %v2645 = vadd.f32 %v2499, %v2622
    %v2646 = vadd.f32 %v2500, %v2625
    %v2647 = vadd.f32 %v2501, %v2627
    %v2648 = vadd.f32 %v2502, %v2630
    %v2649 = vadd.f32 %v2503, %v2632
    %v2650 = vld [vmem:[%s6] sm:$0x1]
    %v2652 = vperm.slane %v2650, 0
    %v2654 = vadd.f32 %v2634, %v2652
    %v2655 = vadd.f32 %v2635, %v2652
    %v2656 = vadd.f32 %v2636, %v2652
    %v2657 = vadd.f32 %v2637, %v2652
    %v2658 = vadd.f32 %v2638, %v2652
    %v2659 = vadd.f32 %v2639, %v2652
    %v2660 = vadd.f32 %v2640, %v2652
    %v2661 = vadd.f32 %v2641, %v2652
    %v2662 = vadd.f32 %v2642, %v2652
    %v2663 = vadd.f32 %v2643, %v2652
    %v2664 = vadd.f32 %v2644, %v2652
    %v2665 = vadd.f32 %v2645, %v2652
    %v2666 = vadd.f32 %v2646, %v2652
    %v2667 = vadd.f32 %v2647, %v2652
    %v2668 = vadd.f32 %v2648, %v2652
    %v2669 = vadd.f32 %v2649, %v2652
    %v2670 = vmax.f32 %v2654, 0.0
    %v2671 = vmax.f32 %v2655, 0.0
    %v2672 = vmax.f32 %v2656, 0.0
    %v2673 = vmax.f32 %v2657, 0.0
    %v2674 = vmax.f32 %v2658, 0.0
    %v2675 = vmax.f32 %v2659, 0.0
    %v2676 = vmax.f32 %v2660, 0.0
    %v2677 = vmax.f32 %v2661, 0.0
    %v2678 = vmax.f32 %v2662, 0.0
    %v2679 = vmax.f32 %v2663, 0.0
    %v2680 = vmax.f32 %v2664, 0.0
    %v2681 = vmax.f32 %v2665, 0.0
    %v2682 = vmax.f32 %v2666, 0.0
    %v2683 = vmax.f32 %v2667, 0.0
    %v2684 = vmax.f32 %v2668, 0.0
    %v2685 = vmax.f32 %v2669, 0.0
    %v2686 = vld [vmem:[%s7] sm:$0x1]
    %v2688 = vperm.slane %v2686, 0
    %v2690 = vmul.f32 %v2670, %v2688
    %v2691 = vmul.f32 %v2671, %v2688
    %v2692 = vmul.f32 %v2672, %v2688
    %v2693 = vmul.f32 %v2673, %v2688
    %v2694 = vmul.f32 %v2674, %v2688
    %v2695 = vmul.f32 %v2675, %v2688
    %v2696 = vmul.f32 %v2676, %v2688
    %v2697 = vmul.f32 %v2677, %v2688
    %v2698 = vmul.f32 %v2678, %v2688
    %v2699 = vmul.f32 %v2679, %v2688
    %v2700 = vmul.f32 %v2680, %v2688
    %v2701 = vmul.f32 %v2681, %v2688
    %v2702 = vmul.f32 %v2682, %v2688
    %v2703 = vmul.f32 %v2683, %v2688
    %v2704 = vmul.f32 %v2684, %v2688
    %v2705 = vmul.f32 %v2685, %v2688
    %v2706 = vld [vmem:[%s8] sm:$0x1]
    %v2708 = vperm.slane %v2706, 0
    %v2710 = vadd.f32 %v2690, %v2708
    %v2711 = vadd.f32 %v2691, %v2708
    %v2712 = vadd.f32 %v2692, %v2708
    %v2713 = vadd.f32 %v2693, %v2708
    %v2714 = vadd.f32 %v2694, %v2708
    %v2715 = vadd.f32 %v2695, %v2708
    %v2716 = vadd.f32 %v2696, %v2708
    %v2717 = vadd.f32 %v2697, %v2708
    %v2718 = vadd.f32 %v2698, %v2708
    %v2719 = vadd.f32 %v2699, %v2708
    %v2720 = vadd.f32 %v2700, %v2708
    %v2721 = vadd.f32 %v2701, %v2708
    %v2722 = vadd.f32 %v2702, %v2708
    %v2723 = vadd.f32 %v2703, %v2708
    %v2724 = vadd.f32 %v2704, %v2708
    %v2725 = vadd.f32 %v2705, %v2708
    %vm2726 = vcmask 261120
    %v2727 = vsel %vm2726, %v1639, 0
    %v2729 = vsel %vm2726, %v1640, 0
    %2731 = vmatpush.msra.mxu0 0.0
    %2732 = vmatpush.msra.mxu0 0.0
    %2733 = vmatpush.msra.mxu0 0.0
    %2734 = vmatpush.msra.mxu0 0.0
    %2735 = vmatpush.msra.mxu0 0.0
    %2736 = vmatpush.msra.mxu0 0.0
    %2737 = vmatpush.msra.mxu0 0.0
    %2738 = vmatpush.msra.mxu0 0.0
    %2739 = vmatpush.msra.mxu0 0.0
    %2740 = vmatpush.msra.mxu0 0.0
    %2741 = vmatpush.msra.mxu0 0.0
    %2742 = vmatpush.msra.mxu0 0.0
    %2743 = vmatpush.msra.mxu0 %v2713
    %2744 = vmatpush.msra.mxu0 %v2712
    %2745 = vmatpush.msra.mxu0 %v2711
    %2746 = vmatpush.msra.mxu0 %v2710
    %2747 = vmatmul.f32.gmra.mxu0 %v2727
    %v2748 = vpop.f32.mrf.mxu0
    %v2749 = vadd.f32 0.0, %v2748
    %2750 = vmatmul.f32.gmra.mxu0 %v2729
    %v2751 = vpop.f32.mrf.mxu0
    %v2752 = vadd.f32 0.0, %v2751
    %2753 = vdwg.mxu0
    %2754 = vmatpush.msra.mxu0 0.0
    %2755 = vmatpush.msra.mxu0 0.0
    %2756 = vmatpush.msra.mxu0 0.0
    %2757 = vmatpush.msra.mxu0 0.0
    %2758 = vmatpush.msra.mxu0 0.0
    %2759 = vmatpush.msra.mxu0 0.0
    %2760 = vmatpush.msra.mxu0 0.0
    %2761 = vmatpush.msra.mxu0 0.0
    %2762 = vmatpush.msra.mxu0 0.0
    %2763 = vmatpush.msra.mxu0 0.0
    %2764 = vmatpush.msra.mxu0 0.0
    %2765 = vmatpush.msra.mxu0 0.0
    %2766 = vmatpush.msra.mxu0 %v2717
    %2767 = vmatpush.msra.mxu0 %v2716
    %2768 = vmatpush.msra.mxu0 %v2715
    %2769 = vmatpush.msra.mxu0 %v2714
    %2770 = vmatmul.f32.gmra.mxu0 %v2727
    %v2771 = vpop.f32.mrf.mxu0
    %v2772 = vadd.f32 0.0, %v2771
    %2773 = vmatmul.f32.gmra.mxu0 %v2729
    %v2774 = vpop.f32.mrf.mxu0
    %v2775 = vadd.f32 0.0, %v2774
    %2776 = vdwg.mxu0
    %2777 = vmatpush.msra.mxu0 0.0
    %2778 = vmatpush.msra.mxu0 0.0
    %2779 = vmatpush.msra.mxu0 0.0
    %2780 = vmatpush.msra.mxu0 0.0
    %2781 = vmatpush.msra.mxu0 0.0
    %2782 = vmatpush.msra.mxu0 0.0
    %2783 = vmatpush.msra.mxu0 0.0
    %2784 = vmatpush.msra.mxu0 0.0
    %2785 = vmatpush.msra.mxu0 0.0
    %2786 = vmatpush.msra.mxu0 0.0
    %2787 = vmatpush.msra.mxu0 0.0
    %2788 = vmatpush.msra.mxu0 0.0
    %2789 = vmatpush.msra.mxu0 %v2721
    %2790 = vmatpush.msra.mxu0 %v2720
    %2791 = vmatpush.msra.mxu0 %v2719
    %2792 = vmatpush.msra.mxu0 %v2718
    %2793 = vmatmul.f32.gmra.mxu0 %v2727
    %v2794 = vpop.f32.mrf.mxu0
    %v2795 = vadd.f32 0.0, %v2794
    %2796 = vmatmul.f32.gmra.mxu0 %v2729
    %v2797 = vpop.f32.mrf.mxu0
    %v2798 = vadd.f32 0.0, %v2797
    %2799 = vdwg.mxu0
    %2800 = vmatpush.msra.mxu0 0.0
    %2801 = vmatpush.msra.mxu0 0.0
    %2802 = vmatpush.msra.mxu0 0.0
    %2803 = vmatpush.msra.mxu0 0.0
    %2804 = vmatpush.msra.mxu0 0.0
    %2805 = vmatpush.msra.mxu0 0.0
    %2806 = vmatpush.msra.mxu0 0.0
    %2807 = vmatpush.msra.mxu0 0.0
    %2808 = vmatpush.msra.mxu0 0.0
    %2809 = vmatpush.msra.mxu0 0.0
    %2810 = vmatpush.msra.mxu0 0.0
    %2811 = vmatpush.msra.mxu0 0.0
    %2812 = vmatpush.msra.mxu0 %v2725
    %2813 = vmatpush.msra.mxu0 %v2724
    %2814 = vmatpush.msra.mxu0 %v2723
    %2815 = vmatpush.msra.mxu0 %v2722
    %2816 = vmatmul.f32.gmra.mxu0 %v2727
    %v2817 = vpop.f32.mrf.mxu0
    %v2818 = vadd.f32 0.0, %v2817
    %2819 = vmatmul.f32.gmra.mxu0 %v2729
    %v2820 = vpop.f32.mrf.mxu0
    %v2821 = vadd.f32 0.0, %v2820
    %2822 = vdwg.mxu0
    %v2823 = vsel %vm2726, %v1651, 0
    %v2825 = vsel %vm2726, %v1652, 0
    %2827 = vmatpush.msra.mxu0 0.0
    %2828 = vmatpush.msra.mxu0 0.0
    %2829 = vmatpush.msra.mxu0 0.0
    %2830 = vmatpush.msra.mxu0 0.0
    %2831 = vmatpush.msra.mxu0 0.0
    %2832 = vmatpush.msra.mxu0 0.0
    %2833 = vmatpush.msra.mxu0 0.0
    %2834 = vmatpush.msra.mxu0 0.0
    %2835 = vmatpush.msra.mxu0 0.0
    %2836 = vmatpush.msra.mxu0 0.0
    %2837 = vmatpush.msra.mxu0 0.0
    %2838 = vmatpush.msra.mxu0 0.0
    %2839 = vmatpush.msra.mxu0 %v2713
    %2840 = vmatpush.msra.mxu0 %v2712
    %2841 = vmatpush.msra.mxu0 %v2711
    %2842 = vmatpush.msra.mxu0 %v2710
    %2843 = vmatmul.f32.gmra.mxu0 %v2823
    %v2844 = vpop.f32.mrf.mxu0
    %v2845 = vadd.f32 0.0, %v2844
    %2846 = vmatmul.f32.gmra.mxu0 %v2825
    %v2847 = vpop.f32.mrf.mxu0
    %v2848 = vadd.f32 0.0, %v2847
    %2849 = vdwg.mxu0
    %2850 = vmatpush.msra.mxu0 0.0
    %2851 = vmatpush.msra.mxu0 0.0
    %2852 = vmatpush.msra.mxu0 0.0
    %2853 = vmatpush.msra.mxu0 0.0
    %2854 = vmatpush.msra.mxu0 0.0
    %2855 = vmatpush.msra.mxu0 0.0
    %2856 = vmatpush.msra.mxu0 0.0
    %2857 = vmatpush.msra.mxu0 0.0
    %2858 = vmatpush.msra.mxu0 0.0
    %2859 = vmatpush.msra.mxu0 0.0
    %2860 = vmatpush.msra.mxu0 0.0
    %2861 = vmatpush.msra.mxu0 0.0
    %2862 = vmatpush.msra.mxu0 %v2717
    %2863 = vmatpush.msra.mxu0 %v2716
    %2864 = vmatpush.msra.mxu0 %v2715
    %2865 = vmatpush.msra.mxu0 %v2714
    %2866 = vmatmul.f32.gmra.mxu0 %v2823
    %v2867 = vpop.f32.mrf.mxu0
    %v2868 = vadd.f32 0.0, %v2867
    %2869 = vmatmul.f32.gmra.mxu0 %v2825
    %v2870 = vpop.f32.mrf.mxu0
    %v2871 = vadd.f32 0.0, %v2870
    %2872 = vdwg.mxu0
    %2873 = vmatpush.msra.mxu0 0.0
    %2874 = vmatpush.msra.mxu0 0.0
    %2875 = vmatpush.msra.mxu0 0.0
    %2876 = vmatpush.msra.mxu0 0.0
    %2877 = vmatpush.msra.mxu0 0.0
    %2878 = vmatpush.msra.mxu0 0.0
    %2879 = vmatpush.msra.mxu0 0.0
    %2880 = vmatpush.msra.mxu0 0.0
    %2881 = vmatpush.msra.mxu0 0.0
    %2882 = vmatpush.msra.mxu0 0.0
    %2883 = vmatpush.msra.mxu0 0.0
    %2884 = vmatpush.msra.mxu0 0.0
    %2885 = vmatpush.msra.mxu0 %v2721
    %2886 = vmatpush.msra.mxu0 %v2720
    %2887 = vmatpush.msra.mxu0 %v2719
    %2888 = vmatpush.msra.mxu0 %v2718
    %2889 = vmatmul.f32.gmra.mxu0 %v2823
    %v2890 = vpop.f32.mrf.mxu0
    %v2891 = vadd.f32 0.0, %v2890
    %2892 = vmatmul.f32.gmra.mxu0 %v2825
    %v2893 = vpop.f32.mrf.mxu0
    %v2894 = vadd.f32 0.0, %v2893
    %2895 = vdwg.mxu0
    %2896 = vmatpush.msra.mxu0 0.0
    %2897 = vmatpush.msra.mxu0 0.0
    %2898 = vmatpush.msra.mxu0 0.0
    %2899 = vmatpush.msra.mxu0 0.0
    %2900 = vmatpush.msra.mxu0 0.0
    %2901 = vmatpush.msra.mxu0 0.0
    %2902 = vmatpush.msra.mxu0 0.0
    %2903 = vmatpush.msra.mxu0 0.0
    %2904 = vmatpush.msra.mxu0 0.0
    %2905 = vmatpush.msra.mxu0 0.0
    %2906 = vmatpush.msra.mxu0 0.0
    %2907 = vmatpush.msra.mxu0 0.0
    %2908 = vmatpush.msra.mxu0 %v2725
    %2909 = vmatpush.msra.mxu0 %v2724
    %2910 = vmatpush.msra.mxu0 %v2723
    %2911 = vmatpush.msra.mxu0 %v2722
    %2912 = vmatmul.f32.gmra.mxu0 %v2823
    %v2913 = vpop.f32.mrf.mxu0
    %v2914 = vadd.f32 0.0, %v2913
    %2915 = vmatmul.f32.gmra.mxu0 %v2825
    %v2916 = vpop.f32.mrf.mxu0
    %v2917 = vadd.f32 0.0, %v2916
    %2918 = vdwg.mxu0
    %v2919 = vmax.f32 %v2749, %v2845
    %v2920 = vmax.f32 %v2752, %v2848
    %v2921 = vmax.f32 %v2772, %v2868
    %v2922 = vmax.f32 %v2775, %v2871
    %v2923 = vmax.f32 %v2795, %v2891
    %v2924 = vmax.f32 %v2798, %v2894
    %v2925 = vmax.f32 %v2818, %v2914
    %v2926 = vmax.f32 %v2821, %v2917
    %2927 = vst.msk [vmem:[#allocation4] sm:$0x3] %vm1928, 0.0
    %2928 = vst.msk [vmem:[#allocation4 + $0x18] sm:$0x3] %vm1928, 0.0
    %2929 = vst.msk [vmem:[#allocation4 + $0x30] sm:$0x3] %vm1928, 0.0
    %2930 = vst.msk [vmem:[#allocation4 + $0x48] sm:$0x3] %vm1928, 0.0
    %2931 = vst.msk [vmem:[#allocation4 + $0x12] sm:$0x3] %vm1928, 0.0
    %2932 = vst.msk [vmem:[#allocation4 + $0x2a] sm:$0x3] %vm1928, 0.0
    %2933 = vst.msk [vmem:[#allocation4 + $0x42] sm:$0x3] %vm1928, 0.0
    %2934 = vst.msk [vmem:[#allocation4 + $0x5a] sm:$0x3] %vm1928, 0.0
    %2935 = vst.msk [vmem:[#allocation4 + $0x2] sm:$0xff] %vm1655, %v2919
    %2936 = vst.msk [vmem:[#allocation4 + $0xa] sm:$0xff] %vm1655, %v2920
    %2937 = vst.msk [vmem:[#allocation4 + $0x1a] sm:$0xff] %vm1655, %v2921
    %2938 = vst.msk [vmem:[#allocation4 + $0x22] sm:$0xff] %vm1655, %v2922
    %2939 = vst.msk [vmem:[#allocation4 + $0x32] sm:$0xff] %vm1655, %v2923
    %2940 = vst.msk [vmem:[#allocation4 + $0x3a] sm:$0xff] %vm1655, %v2924
    %2941 = vst.msk [vmem:[#allocation4 + $0x4a] sm:$0xff] %vm1655, %v2925
    %2942 = vst.msk [vmem:[#allocation4 + $0x52] sm:$0xff] %vm1655, %v2926
    %v2943 = vld [vmem:[#allocation4] sm:$0xff]
    %v2944 = vld [vmem:[#allocation4 + $0x8] sm:$0xff]
    %v2945 = vld [vmem:[#allocation4 + $0x18] sm:$0xff]
    %v2946 = vld [vmem:[#allocation4 + $0x20] sm:$0xff]
    %v2947 = vld [vmem:[#allocation4 + $0x30] sm:$0xff]
    %v2948 = vld [vmem:[#allocation4 + $0x38] sm:$0xff]
    %v2949 = vld [vmem:[#allocation4 + $0x48] sm:$0xff]
    %v2950 = vld [vmem:[#allocation4 + $0x50] sm:$0xff]
    %v2951 = vpack.c.bf16 %v2944, %v2943
    %v2952 = vpack.c.bf16 %v2946, %v2945
    %v2953 = vpack.c.bf16 %v2948, %v2947
    %v2954 = vpack.c.bf16 %v2950, %v2949
    %v2955 = vld [vmem:[#allocation7] sm:$0xf]
    %v2956 = vld [vmem:[#allocation7 + $0x4] sm:$0xf]
    %v2957 = vld [vmem:[#allocation7 + $0x8] sm:$0xf]
    %v2958 = vld [vmem:[#allocation7 + $0xc] sm:$0xf]
    %v2959 = vld [vmem:[#allocation7 + $0x10] sm:$0xf]
    %v2960 = vld [vmem:[#allocation7 + $0x14] sm:$0xf]
    %v2961 = vld [vmem:[#allocation7 + $0x18] sm:$0xf]
    %v2962 = vld [vmem:[#allocation7 + $0x1c] sm:$0xf]
    %v2963 = vld [vmem:[#allocation4 + $0x1] sm:$0xff]
    %v2964 = vld [vmem:[#allocation4 + $0x9] sm:$0xff]
    %v2965 = vld [vmem:[#allocation4 + $0x19] sm:$0xff]
    %v2966 = vld [vmem:[#allocation4 + $0x21] sm:$0xff]
    %v2967 = vld [vmem:[#allocation4 + $0x31] sm:$0xff]
    %v2968 = vld [vmem:[#allocation4 + $0x39] sm:$0xff]
    %v2969 = vld [vmem:[#allocation4 + $0x49] sm:$0xff]
    %v2970 = vld [vmem:[#allocation4 + $0x51] sm:$0xff]
    %v2971 = vpack.c.bf16 %v2964, %v2963
    %v2972 = vpack.c.bf16 %v2966, %v2965
    %v2973 = vpack.c.bf16 %v2968, %v2967
    %v2974 = vpack.c.bf16 %v2970, %v2969
    %s2975 = scalar_lea.vmem [#allocation7], 32
    %v2976 = vld [vmem:[%s2975] sm:$0xf]
    %v2977 = vld [vmem:[%s2975 + $0x4] sm:$0xf]
    %v2978 = vld [vmem:[%s2975 + $0x8] sm:$0xf]
    %v2979 = vld [vmem:[%s2975 + $0xc] sm:$0xf]
    %v2980 = vld [vmem:[%s2975 + $0x10] sm:$0xf]
    %v2981 = vld [vmem:[%s2975 + $0x14] sm:$0xf]
    %v2982 = vld [vmem:[%s2975 + $0x18] sm:$0xf]
    %v2983 = vld [vmem:[%s2975 + $0x1c] sm:$0xf]
    %v2992 = vunpack.c.l.b16 %v2976
    %v2993 = vunpack.c.l.b16 %v2977
    %v2994 = vunpack.c.l.b16 %v2978
    %v2995 = vunpack.c.l.b16 %v2979
    %v2996 = vunpack.c.l.b16 %v2980
    %v2997 = vunpack.c.l.b16 %v2981
    %v2998 = vunpack.c.l.b16 %v2982
    %v2999 = vunpack.c.l.b16 %v2983
    %v3000 = vpack.c.b16 %v2993, %v2992
    %v3001 = vpack.c.b16 %v2995, %v2994
    %v3002 = vpack.c.b16 %v2997, %v2996
    %v3003 = vpack.c.b16 %v2999, %v2998
    %v3009 = vsel %vm1655, %v2971, 0
    %v3012 = vsel %vm1655, %v2972, 0
    %v3015 = vsel %vm1655, %v2973, 0
    %v3018 = vsel %vm1655, %v2974, 0
    %3020 = vmatpush.bf16.msra.mxu0 0
    %3021 = vmatpush.bf16.msra.mxu0 0
    %3022 = vmatpush.bf16.msra.mxu0 0
    %3023 = vmatpush.bf16.msra.mxu0 0
    %3024 = vmatpush.bf16.msra.mxu0 %v3003
    %3025 = vmatpush.bf16.msra.mxu0 %v3002
    %3026 = vmatpush.bf16.msra.mxu0 %v3001
    %3027 = vmatpush.bf16.msra.mxu0 %v3000
    %3028 = vmatmul.bf16.gmra.mxu0 %v3009
    %v3029 = vpop.f32.mrf.mxu0
    %v3030 = vadd.f32 0.0, %v3029
    %v3031 = vpop.f32.mrf.mxu0
    %v3032 = vadd.f32 0.0, %v3031
    %3033 = vmatmul.bf16.gmra.mxu0 %v3012
    %v3034 = vpop.f32.mrf.mxu0
    %v3035 = vadd.f32 0.0, %v3034
    %v3036 = vpop.f32.mrf.mxu0
    %v3037 = vadd.f32 0.0, %v3036
    %3038 = vmatmul.bf16.gmra.mxu0 %v3015
    %v3039 = vpop.f32.mrf.mxu0
    %v3040 = vadd.f32 0.0, %v3039
    %v3041 = vpop.f32.mrf.mxu0
    %v3042 = vadd.f32 0.0, %v3041
    %3043 = vmatmul.bf16.gmra.mxu0 %v3018
    %v3044 = vpop.f32.mrf.mxu0
    %v3045 = vadd.f32 0.0, %v3044
    %v3046 = vpop.f32.mrf.mxu0
    %v3047 = vadd.f32 0.0, %v3046
    %3048 = vdwg.mxu0
    %v3057 = vunpack.c.l.b16 %v2955
    %v3058 = vunpack.c.l.b16 %v2956
    %v3059 = vunpack.c.l.b16 %v2957
    %v3060 = vunpack.c.l.b16 %v2958
    %v3061 = vunpack.c.l.b16 %v2959
    %v3062 = vunpack.c.l.b16 %v2960
    %v3063 = vunpack.c.l.b16 %v2961
    %v3064 = vunpack.c.l.b16 %v2962
    %v3065 = vpack.c.b16 %v3058, %v3057
    %v3066 = vpack.c.b16 %v3060, %v3059
    %v3067 = vpack.c.b16 %v3062, %v3061
    %v3068 = vpack.c.b16 %v3064, %v3063
    %v3074 = vsel %vm1655, %v2951, 0
    %v3077 = vsel %vm1655, %v2952, 0
    %v3080 = vsel %vm1655, %v2953, 0
    %v3083 = vsel %vm1655, %v2954, 0
    %3085 = vmatpush.bf16.msra.mxu0 0
    %3086 = vmatpush.bf16.msra.mxu0 0
    %3087 = vmatpush.bf16.msra.mxu0 0
    %3088 = vmatpush.bf16.msra.mxu0 0
    %3089 = vmatpush.bf16.msra.mxu0 %v3068
    %3090 = vmatpush.bf16.msra.mxu0 %v3067
    %3091 = vmatpush.bf16.msra.mxu0 %v3066
    %3092 = vmatpush.bf16.msra.mxu0 %v3065
    %3093 = vmatmul.bf16.gmra.mxu0 %v3074
    %v3094 = vpop.f32.mrf.mxu0
    %v3095 = vadd.f32 %v3030, %v3094
    %v3096 = vpop.f32.mrf.mxu0
    %v3097 = vadd.f32 %v3032, %v3096
    %3098 = vmatmul.bf16.gmra.mxu0 %v3077
    %v3099 = vpop.f32.mrf.mxu0
    %v3100 = vadd.f32 %v3035, %v3099
    %v3101 = vpop.f32.mrf.mxu0
    %v3102 = vadd.f32 %v3037, %v3101
    %3103 = vmatmul.bf16.gmra.mxu0 %v3080
    %v3104 = vpop.f32.mrf.mxu0
    %v3105 = vadd.f32 %v3040, %v3104
    %v3106 = vpop.f32.mrf.mxu0
    %v3107 = vadd.f32 %v3042, %v3106
    %3108 = vmatmul.bf16.gmra.mxu0 %v3083
    %v3109 = vpop.f32.mrf.mxu0
    %v3110 = vadd.f32 %v3045, %v3109
    %v3111 = vpop.f32.mrf.mxu0
    %v3112 = vadd.f32 %v3047, %v3111
    %3113 = vdwg.mxu0
    %v3114 = vld [vmem:[#allocation4 + $0x2] sm:$0xff]
    %v3115 = vld [vmem:[#allocation4 + $0xa] sm:$0xff]
    %v3116 = vld [vmem:[#allocation4 + $0x1a] sm:$0xff]
    %v3117 = vld [vmem:[#allocation4 + $0x22] sm:$0xff]
    %v3118 = vld [vmem:[#allocation4 + $0x32] sm:$0xff]
    %v3119 = vld [vmem:[#allocation4 + $0x3a] sm:$0xff]
    %v3120 = vld [vmem:[#allocation4 + $0x4a] sm:$0xff]
    %v3121 = vld [vmem:[#allocation4 + $0x52] sm:$0xff]
    %v3122 = vpack.c.bf16 %v3115, %v3114
    %v3123 = vpack.c.bf16 %v3117, %v3116
    %v3124 = vpack.c.bf16 %v3119, %v3118
    %v3125 = vpack.c.bf16 %v3121, %v3120
    %s3126 = scalar_lea.vmem [#allocation7], 64
    %v3127 = vld [vmem:[%s3126] sm:$0xf]
    %v3128 = vld [vmem:[%s3126 + $0x4] sm:$0xf]
    %v3129 = vld [vmem:[%s3126 + $0x8] sm:$0xf]
    %v3130 = vld [vmem:[%s3126 + $0xc] sm:$0xf]
    %v3131 = vld [vmem:[%s3126 + $0x10] sm:$0xf]
    %v3132 = vld [vmem:[%s3126 + $0x14] sm:$0xf]
    %v3133 = vld [vmem:[%s3126 + $0x18] sm:$0xf]
    %v3134 = vld [vmem:[%s3126 + $0x1c] sm:$0xf]
    %v3143 = vunpack.c.l.b16 %v3127
    %v3144 = vunpack.c.l.b16 %v3128
    %v3145 = vunpack.c.l.b16 %v3129
    %v3146 = vunpack.c.l.b16 %v3130
    %v3147 = vunpack.c.l.b16 %v3131
    %v3148 = vunpack.c.l.b16 %v3132
    %v3149 = vunpack.c.l.b16 %v3133
    %v3150 = vunpack.c.l.b16 %v3134
    %v3151 = vpack.c.b16 %v3144, %v3143
    %v3152 = vpack.c.b16 %v3146, %v3145
    %v3153 = vpack.c.b16 %v3148, %v3147
    %v3154 = vpack.c.b16 %v3150, %v3149
    %v3160 = vsel %vm1655, %v3122, 0
    %v3163 = vsel %vm1655, %v3123, 0
    %v3166 = vsel %vm1655, %v3124, 0
    %v3169 = vsel %vm1655, %v3125, 0
    %3171 = vmatpush.bf16.msra.mxu0 0
    %3172 = vmatpush.bf16.msra.mxu0 0
    %3173 = vmatpush.bf16.msra.mxu0 0
    %3174 = vmatpush.bf16.msra.mxu0 0
    %3175 = vmatpush.bf16.msra.mxu0 %v3154
    %3176 = vmatpush.bf16.msra.mxu0 %v3153
    %3177 = vmatpush.bf16.msra.mxu0 %v3152
    %3178 = vmatpush.bf16.msra.mxu0 %v3151
    %3179 = vmatmul.bf16.gmra.mxu0 %v3160
    %v3180 = vpop.f32.mrf.mxu0
    %v3181 = vadd.f32 0.0, %v3180
    %v3182 = vpop.f32.mrf.mxu0
    %v3183 = vadd.f32 0.0, %v3182
    %3184 = vmatmul.bf16.gmra.mxu0 %v3163
    %v3185 = vpop.f32.mrf.mxu0
    %v3186 = vadd.f32 0.0, %v3185
    %v3187 = vpop.f32.mrf.mxu0
    %v3188 = vadd.f32 0.0, %v3187
    %3189 = vmatmul.bf16.gmra.mxu0 %v3166
    %v3190 = vpop.f32.mrf.mxu0
    %v3191 = vadd.f32 0.0, %v3190
    %v3192 = vpop.f32.mrf.mxu0
    %v3193 = vadd.f32 0.0, %v3192
    %3194 = vmatmul.bf16.gmra.mxu0 %v3169
    %v3195 = vpop.f32.mrf.mxu0
    %v3196 = vadd.f32 0.0, %v3195
    %v3197 = vpop.f32.mrf.mxu0
    %v3198 = vadd.f32 0.0, %v3197
    %3199 = vdwg.mxu0
    %v3200 = vadd.f32 %v3095, %v3181
    %v3201 = vadd.f32 %v3097, %v3183
    %v3202 = vadd.f32 %v3100, %v3186
    %v3203 = vadd.f32 %v3102, %v3188
    %v3204 = vadd.f32 %v3105, %v3191
    %v3205 = vadd.f32 %v3107, %v3193
    %v3206 = vadd.f32 %v3110, %v3196
    %v3207 = vadd.f32 %v3112, %v3198
    %v3208 = vld [vmem:[#allocation4 + $0x3] sm:$0xff]
    %v3209 = vld [vmem:[#allocation4 + $0xb] sm:$0xff]
    %v3210 = vld [vmem:[#allocation4 + $0x1b] sm:$0xff]
    %v3211 = vld [vmem:[#allocation4 + $0x23] sm:$0xff]
    %v3212 = vld [vmem:[#allocation4 + $0x33] sm:$0xff]
    %v3213 = vld [vmem:[#allocation4 + $0x3b] sm:$0xff]
    %v3214 = vld [vmem:[#allocation4 + $0x4b] sm:$0xff]
    %v3215 = vld [vmem:[#allocation4 + $0x53] sm:$0xff]
    %v3216 = vpack.c.bf16 %v3209, %v3208
    %v3217 = vpack.c.bf16 %v3211, %v3210
    %v3218 = vpack.c.bf16 %v3213, %v3212
    %v3219 = vpack.c.bf16 %v3215, %v3214
    %s3220 = scalar_lea.vmem [#allocation7], 96
    %v3221 = vld [vmem:[%s3220] sm:$0xf]
    %v3222 = vld [vmem:[%s3220 + $0x4] sm:$0xf]
    %v3223 = vld [vmem:[%s3220 + $0x8] sm:$0xf]
    %v3224 = vld [vmem:[%s3220 + $0xc] sm:$0xf]
    %v3225 = vld [vmem:[%s3220 + $0x10] sm:$0xf]
    %v3226 = vld [vmem:[%s3220 + $0x14] sm:$0xf]
    %v3227 = vld [vmem:[%s3220 + $0x18] sm:$0xf]
    %v3228 = vld [vmem:[%s3220 + $0x1c] sm:$0xf]
    %v3237 = vunpack.c.l.b16 %v3221
    %v3238 = vunpack.c.l.b16 %v3222
    %v3239 = vunpack.c.l.b16 %v3223
    %v3240 = vunpack.c.l.b16 %v3224
    %v3241 = vunpack.c.l.b16 %v3225
    %v3242 = vunpack.c.l.b16 %v3226
    %v3243 = vunpack.c.l.b16 %v3227
    %v3244 = vunpack.c.l.b16 %v3228
    %v3245 = vpack.c.b16 %v3238, %v3237
    %v3246 = vpack.c.b16 %v3240, %v3239
    %v3247 = vpack.c.b16 %v3242, %v3241
    %v3248 = vpack.c.b16 %v3244, %v3243
    %v3254 = vsel %vm1655, %v3216, 0
    %v3257 = vsel %vm1655, %v3217, 0
    %v3260 = vsel %vm1655, %v3218, 0
    %v3263 = vsel %vm1655, %v3219, 0
    %3265 = vmatpush.bf16.msra.mxu0 0
    %3266 = vmatpush.bf16.msra.mxu0 0
    %3267 = vmatpush.bf16.msra.mxu0 0
    %3268 = vmatpush.bf16.msra.mxu0 0
    %3269 = vmatpush.bf16.msra.mxu0 %v3248
    %3270 = vmatpush.bf16.msra.mxu0 %v3247
    %3271 = vmatpush.bf16.msra.mxu0 %v3246
    %3272 = vmatpush.bf16.msra.mxu0 %v3245
    %3273 = vmatmul.bf16.gmra.mxu0 %v3254
    %v3274 = vpop.f32.mrf.mxu0
    %v3275 = vadd.f32 0.0, %v3274
    %v3276 = vpop.f32.mrf.mxu0
    %v3277 = vadd.f32 0.0, %v3276
    %3278 = vmatmul.bf16.gmra.mxu0 %v3257
    %v3279 = vpop.f32.mrf.mxu0
    %v3280 = vadd.f32 0.0, %v3279
    %v3281 = vpop.f32.mrf.mxu0
    %v3282 = vadd.f32 0.0, %v3281
    %3283 = vmatmul.bf16.gmra.mxu0 %v3260
    %v3284 = vpop.f32.mrf.mxu0
    %v3285 = vadd.f32 0.0, %v3284
    %v3286 = vpop.f32.mrf.mxu0
    %v3287 = vadd.f32 0.0, %v3286
    %3288 = vmatmul.bf16.gmra.mxu0 %v3263
    %v3289 = vpop.f32.mrf.mxu0
    %v3290 = vadd.f32 0.0, %v3289
    %v3291 = vpop.f32.mrf.mxu0
    %v3292 = vadd.f32 0.0, %v3291
    %3293 = vdwg.mxu0
    %v3294 = vadd.f32 %v3200, %v3275
    %v3295 = vadd.f32 %v3201, %v3277
    %v3296 = vadd.f32 %v3202, %v3280
    %v3297 = vadd.f32 %v3203, %v3282
    %v3298 = vadd.f32 %v3204, %v3285
    %v3299 = vadd.f32 %v3205, %v3287
    %v3300 = vadd.f32 %v3206, %v3290
    %v3301 = vadd.f32 %v3207, %v3292
    %v3302 = vld [vmem:[#allocation4 + $0x4] sm:$0xff]
    %v3303 = vld [vmem:[#allocation4 + $0xc] sm:$0xff]
    %v3304 = vld [vmem:[#allocation4 + $0x1c] sm:$0xff]
    %v3305 = vld [vmem:[#allocation4 + $0x24] sm:$0xff]
    %v3306 = vld [vmem:[#allocation4 + $0x34] sm:$0xff]
    %v3307 = vld [vmem:[#allocation4 + $0x3c] sm:$0xff]
    %v3308 = vld [vmem:[#allocation4 + $0x4c] sm:$0xff]
    %v3309 = vld [vmem:[#allocation4 + $0x54] sm:$0xff]
    %v3310 = vpack.c.bf16 %v3303, %v3302
    %v3311 = vpack.c.bf16 %v3305, %v3304
    %v3312 = vpack.c.bf16 %v3307, %v3306
    %v3313 = vpack.c.bf16 %v3309, %v3308
    %s3314 = scalar_lea.vmem [#allocation7], 128
    %v3315 = vld [vmem:[%s3314] sm:$0xf]
    %v3316 = vld [vmem:[%s3314 + $0x4] sm:$0xf]
    %v3317 = vld [vmem:[%s3314 + $0x8] sm:$0xf]
    %v3318 = vld [vmem:[%s3314 + $0xc] sm:$0xf]
    %v3319 = vld [vmem:[%s3314 + $0x10] sm:$0xf]
    %v3320 = vld [vmem:[%s3314 + $0x14] sm:$0xf]
    %v3321 = vld [vmem:[%s3314 + $0x18] sm:$0xf]
    %v3322 = vld [vmem:[%s3314 + $0x1c] sm:$0xf]
    %v3331 = vunpack.c.l.b16 %v3315
    %v3332 = vunpack.c.l.b16 %v3316
    %v3333 = vunpack.c.l.b16 %v3317
    %v3334 = vunpack.c.l.b16 %v3318
    %v3335 = vunpack.c.l.b16 %v3319
    %v3336 = vunpack.c.l.b16 %v3320
    %v3337 = vunpack.c.l.b16 %v3321
    %v3338 = vunpack.c.l.b16 %v3322
    %v3339 = vpack.c.b16 %v3332, %v3331
    %v3340 = vpack.c.b16 %v3334, %v3333
    %v3341 = vpack.c.b16 %v3336, %v3335
    %v3342 = vpack.c.b16 %v3338, %v3337
    %v3348 = vsel %vm1655, %v3310, 0
    %v3351 = vsel %vm1655, %v3311, 0
    %v3354 = vsel %vm1655, %v3312, 0
    %v3357 = vsel %vm1655, %v3313, 0
    %3359 = vmatpush.bf16.msra.mxu0 0
    %3360 = vmatpush.bf16.msra.mxu0 0
    %3361 = vmatpush.bf16.msra.mxu0 0
    %3362 = vmatpush.bf16.msra.mxu0 0
    %3363 = vmatpush.bf16.msra.mxu0 %v3342
    %3364 = vmatpush.bf16.msra.mxu0 %v3341
    %3365 = vmatpush.bf16.msra.mxu0 %v3340
    %3366 = vmatpush.bf16.msra.mxu0 %v3339
    %3367 = vmatmul.bf16.gmra.mxu0 %v3348
    %v3368 = vpop.f32.mrf.mxu0
    %v3369 = vadd.f32 0.0, %v3368
    %v3370 = vpop.f32.mrf.mxu0
    %v3371 = vadd.f32 0.0, %v3370
    %3372 = vmatmul.bf16.gmra.mxu0 %v3351
    %v3373 = vpop.f32.mrf.mxu0
    %v3374 = vadd.f32 0.0, %v3373
    %v3375 = vpop.f32.mrf.mxu0
    %v3376 = vadd.f32 0.0, %v3375
    %3377 = vmatmul.bf16.gmra.mxu0 %v3354
    %v3378 = vpop.f32.mrf.mxu0
    %v3379 = vadd.f32 0.0, %v3378
    %v3380 = vpop.f32.mrf.mxu0
    %v3381 = vadd.f32 0.0, %v3380
    %3382 = vmatmul.bf16.gmra.mxu0 %v3357
    %v3383 = vpop.f32.mrf.mxu0
    %v3384 = vadd.f32 0.0, %v3383
    %v3385 = vpop.f32.mrf.mxu0
    %v3386 = vadd.f32 0.0, %v3385
    %3387 = vdwg.mxu0
    %v3388 = vadd.f32 %v3294, %v3369
    %v3389 = vadd.f32 %v3295, %v3371
    %v3390 = vadd.f32 %v3296, %v3374
    %v3391 = vadd.f32 %v3297, %v3376
    %v3392 = vadd.f32 %v3298, %v3379
    %v3393 = vadd.f32 %v3299, %v3381
    %v3394 = vadd.f32 %v3300, %v3384
    %v3395 = vadd.f32 %v3301, %v3386
    %v3396 = vld [vmem:[%s10] sm:$0x1]
    %v3398 = vperm.slane %v3396, 0
    %v3400 = vadd.f32 %v3388, %v3398
    %v3401 = vadd.f32 %v3389, %v3398
    %v3402 = vadd.f32 %v3390, %v3398
    %v3403 = vadd.f32 %v3391, %v3398
    %v3404 = vadd.f32 %v3392, %v3398
    %v3405 = vadd.f32 %v3393, %v3398
    %v3406 = vadd.f32 %v3394, %v3398
    %v3407 = vadd.f32 %v3395, %v3398
    %v3408 = vmax.f32 %v3400, 0.0
    %v3409 = vmax.f32 %v3401, 0.0
    %v3410 = vmax.f32 %v3402, 0.0
    %v3411 = vmax.f32 %v3403, 0.0
    %v3412 = vmax.f32 %v3404, 0.0
    %v3413 = vmax.f32 %v3405, 0.0
    %v3414 = vmax.f32 %v3406, 0.0
    %v3415 = vmax.f32 %v3407, 0.0
    %v3416 = vld [vmem:[%s11] sm:$0x1]
    %v3418 = vperm.slane %v3416, 0
    %v3420 = vmul.f32 %v3408, %v3418
    %v3421 = vmul.f32 %v3409, %v3418
    %v3422 = vmul.f32 %v3410, %v3418
    %v3423 = vmul.f32 %v3411, %v3418
    %v3424 = vmul.f32 %v3412, %v3418
    %v3425 = vmul.f32 %v3413, %v3418
    %v3426 = vmul.f32 %v3414, %v3418
    %v3427 = vmul.f32 %v3415, %v3418
    %v3428 = vld [vmem:[%s12] sm:$0x1]
    %v3430 = vperm.slane %v3428, 0
    %v3432 = vadd.f32 %v3420, %v3430
    %v3433 = vadd.f32 %v3421, %v3430
    %v3434 = vadd.f32 %v3422, %v3430
    %v3435 = vadd.f32 %v3423, %v3430
    %v3436 = vadd.f32 %v3424, %v3430
    %v3437 = vadd.f32 %v3425, %v3430
    %v3438 = vadd.f32 %v3426, %v3430
    %v3439 = vadd.f32 %v3427, %v3430
    %vm3440 = vcmask 130048
    %v3441 = vsel %vm3440, %v1639, 0
    %3443 = vmatpush.msra.mxu0 0.0
    %3444 = vmatpush.msra.mxu0 0.0
    %3445 = vmatpush.msra.mxu0 0.0
    %3446 = vmatpush.msra.mxu0 0.0
    %3447 = vmatpush.msra.mxu0 0.0
    %3448 = vmatpush.msra.mxu0 0.0
    %3449 = vmatpush.msra.mxu0 0.0
    %3450 = vmatpush.msra.mxu0 0.0
    %3451 = vmatpush.msra.mxu0 0.0
    %3452 = vmatpush.msra.mxu0 0.0
    %3453 = vmatpush.msra.mxu0 0.0
    %3454 = vmatpush.msra.mxu0 0.0
    %3455 = vmatpush.msra.mxu0 0.0
    %3456 = vmatpush.msra.mxu0 0.0
    %3457 = vmatpush.msra.mxu0 %v3433
    %3458 = vmatpush.msra.mxu0 %v3432
    %3459 = vmatmul.f32.gmra.mxu0 %v3441
    %v3460 = vpop.f32.mrf.mxu0
    %v3461 = vadd.f32 0.0, %v3460
    %3462 = vdwg.mxu0
    %3463 = vmatpush.msra.mxu0 0.0
    %3464 = vmatpush.msra.mxu0 0.0
    %3465 = vmatpush.msra.mxu0 0.0
    %3466 = vmatpush.msra.mxu0 0.0
    %3467 = vmatpush.msra.mxu0 0.0
    %3468 = vmatpush.msra.mxu0 0.0
    %3469 = vmatpush.msra.mxu0 0.0
    %3470 = vmatpush.msra.mxu0 0.0
    %3471 = vmatpush.msra.mxu0 0.0
    %3472 = vmatpush.msra.mxu0 0.0
    %3473 = vmatpush.msra.mxu0 0.0
    %3474 = vmatpush.msra.mxu0 0.0
    %3475 = vmatpush.msra.mxu0 0.0
    %3476 = vmatpush.msra.mxu0 0.0
    %3477 = vmatpush.msra.mxu0 %v3435
    %3478 = vmatpush.msra.mxu0 %v3434
    %3479 = vmatmul.f32.gmra.mxu0 %v3441
    %v3480 = vpop.f32.mrf.mxu0
    %v3481 = vadd.f32 0.0, %v3480
    %3482 = vdwg.mxu0
    %3483 = vmatpush.msra.mxu0 0.0
    %3484 = vmatpush.msra.mxu0 0.0
    %3485 = vmatpush.msra.mxu0 0.0
    %3486 = vmatpush.msra.mxu0 0.0
    %3487 = vmatpush.msra.mxu0 0.0
    %3488 = vmatpush.msra.mxu0 0.0
    %3489 = vmatpush.msra.mxu0 0.0
    %3490 = vmatpush.msra.mxu0 0.0
    %3491 = vmatpush.msra.mxu0 0.0
    %3492 = vmatpush.msra.mxu0 0.0
    %3493 = vmatpush.msra.mxu0 0.0
    %3494 = vmatpush.msra.mxu0 0.0
    %3495 = vmatpush.msra.mxu0 0.0
    %3496 = vmatpush.msra.mxu0 0.0
    %3497 = vmatpush.msra.mxu0 %v3437
    %3498 = vmatpush.msra.mxu0 %v3436
    %3499 = vmatmul.f32.gmra.mxu0 %v3441
    %v3500 = vpop.f32.mrf.mxu0
    %v3501 = vadd.f32 0.0, %v3500
    %3502 = vdwg.mxu0
    %3503 = vmatpush.msra.mxu0 0.0
    %3504 = vmatpush.msra.mxu0 0.0
    %3505 = vmatpush.msra.mxu0 0.0
    %3506 = vmatpush.msra.mxu0 0.0
    %3507 = vmatpush.msra.mxu0 0.0
    %3508 = vmatpush.msra.mxu0 0.0
    %3509 = vmatpush.msra.mxu0 0.0
    %3510 = vmatpush.msra.mxu0 0.0
    %3511 = vmatpush.msra.mxu0 0.0
    %3512 = vmatpush.msra.mxu0 0.0
    %3513 = vmatpush.msra.mxu0 0.0
    %3514 = vmatpush.msra.mxu0 0.0
    %3515 = vmatpush.msra.mxu0 0.0
    %3516 = vmatpush.msra.mxu0 0.0
    %3517 = vmatpush.msra.mxu0 %v3439
    %3518 = vmatpush.msra.mxu0 %v3438
    %3519 = vmatmul.f32.gmra.mxu0 %v3441
    %v3520 = vpop.f32.mrf.mxu0
    %v3521 = vadd.f32 0.0, %v3520
    %3522 = vdwg.mxu0
    %v3523 = vsel %vm3440, %v1651, 0
    %3525 = vmatpush.msra.mxu0 0.0
    %3526 = vmatpush.msra.mxu0 0.0
    %3527 = vmatpush.msra.mxu0 0.0
    %3528 = vmatpush.msra.mxu0 0.0
    %3529 = vmatpush.msra.mxu0 0.0
    %3530 = vmatpush.msra.mxu0 0.0
    %3531 = vmatpush.msra.mxu0 0.0
    %3532 = vmatpush.msra.mxu0 0.0
    %3533 = vmatpush.msra.mxu0 0.0
    %3534 = vmatpush.msra.mxu0 0.0
    %3535 = vmatpush.msra.mxu0 0.0
    %3536 = vmatpush.msra.mxu0 0.0
    %3537 = vmatpush.msra.mxu0 0.0
    %3538 = vmatpush.msra.mxu0 0.0
    %3539 = vmatpush.msra.mxu0 %v3433
    %3540 = vmatpush.msra.mxu0 %v3432
    %3541 = vmatmul.f32.gmra.mxu0 %v3523
    %v3542 = vpop.f32.mrf.mxu0
    %v3543 = vadd.f32 0.0, %v3542
    %3544 = vdwg.mxu0
    %3545 = vmatpush.msra.mxu0 0.0
    %3546 = vmatpush.msra.mxu0 0.0
    %3547 = vmatpush.msra.mxu0 0.0
    %3548 = vmatpush.msra.mxu0 0.0
    %3549 = vmatpush.msra.mxu0 0.0
    %3550 = vmatpush.msra.mxu0 0.0
    %3551 = vmatpush.msra.mxu0 0.0
    %3552 = vmatpush.msra.mxu0 0.0
    %3553 = vmatpush.msra.mxu0 0.0
    %3554 = vmatpush.msra.mxu0 0.0
    %3555 = vmatpush.msra.mxu0 0.0
    %3556 = vmatpush.msra.mxu0 0.0
    %3557 = vmatpush.msra.mxu0 0.0
    %3558 = vmatpush.msra.mxu0 0.0
    %3559 = vmatpush.msra.mxu0 %v3435
    %3560 = vmatpush.msra.mxu0 %v3434
    %3561 = vmatmul.f32.gmra.mxu0 %v3523
    %v3562 = vpop.f32.mrf.mxu0
    %v3563 = vadd.f32 0.0, %v3562
    %3564 = vdwg.mxu0
    %3565 = vmatpush.msra.mxu0 0.0
    %3566 = vmatpush.msra.mxu0 0.0
    %3567 = vmatpush.msra.mxu0 0.0
    %3568 = vmatpush.msra.mxu0 0.0
    %3569 = vmatpush.msra.mxu0 0.0
    %3570 = vmatpush.msra.mxu0 0.0
    %3571 = vmatpush.msra.mxu0 0.0
    %3572 = vmatpush.msra.mxu0 0.0
    %3573 = vmatpush.msra.mxu0 0.0
    %3574 = vmatpush.msra.mxu0 0.0
    %3575 = vmatpush.msra.mxu0 0.0
    %3576 = vmatpush.msra.mxu0 0.0
    %3577 = vmatpush.msra.mxu0 0.0
    %3578 = vmatpush.msra.mxu0 0.0
    %3579 = vmatpush.msra.mxu0 %v3437
    %3580 = vmatpush.msra.mxu0 %v3436
    %3581 = vmatmul.f32.gmra.mxu0 %v3523
    %v3582 = vpop.f32.mrf.mxu0
    %v3583 = vadd.f32 0.0, %v3582
    %3584 = vdwg.mxu0
    %3585 = vmatpush.msra.mxu0 0.0
    %3586 = vmatpush.msra.mxu0 0.0
    %3587 = vmatpush.msra.mxu0 0.0
    %3588 = vmatpush.msra.mxu0 0.0
    %3589 = vmatpush.msra.mxu0 0.0
    %3590 = vmatpush.msra.mxu0 0.0
    %3591 = vmatpush.msra.mxu0 0.0
    %3592 = vmatpush.msra.mxu0 0.0
    %3593 = vmatpush.msra.mxu0 0.0
    %3594 = vmatpush.msra.mxu0 0.0
    %3595 = vmatpush.msra.mxu0 0.0
    %3596 = vmatpush.msra.mxu0 0.0
    %3597 = vmatpush.msra.mxu0 0.0
    %3598 = vmatpush.msra.mxu0 0.0
    %3599 = vmatpush.msra.mxu0 %v3439
    %3600 = vmatpush.msra.mxu0 %v3438
    %3601 = vmatmul.f32.gmra.mxu0 %v3523
    %v3602 = vpop.f32.mrf.mxu0
    %v3603 = vadd.f32 0.0, %v3602
    %3604 = vdwg.mxu0
    %v3605 = vmax.f32 %v3461, %v3543
    %v3606 = vmax.f32 %v3481, %v3563
    %v3607 = vmax.f32 %v3501, %v3583
    %v3608 = vmax.f32 %v3521, %v3603
    %3609 = vst [vmem:[#allocation5] sm:$0x3] 0.0
    %3610 = vst [vmem:[#allocation5 + $0x10] sm:$0x3] 0.0
    %3611 = vst [vmem:[#allocation5 + $0x20] sm:$0x3] 0.0
    %3612 = vst [vmem:[#allocation5 + $0x30] sm:$0x3] 0.0
    %3613 = vst [vmem:[#allocation5 + $0xa] sm:$0x3] 0.0
    %3614 = vst [vmem:[#allocation5 + $0x1a] sm:$0x3] 0.0
    %3615 = vst [vmem:[#allocation5 + $0x2a] sm:$0x3] 0.0
    %3616 = vst [vmem:[#allocation5 + $0x3a] sm:$0x3] 0.0
    %3617 = vst [vmem:[#allocation5 + $0x2] sm:$0xff] %v3605
    %3618 = vst [vmem:[#allocation5 + $0x12] sm:$0xff] %v3606
    %3619 = vst [vmem:[#allocation5 + $0x22] sm:$0xff] %v3607
    %3620 = vst [vmem:[#allocation5 + $0x32] sm:$0xff] %v3608
    %v3621 = vld [vmem:[#allocation5] sm:$0xff]
    %v3622 = vld [vmem:[#allocation5 + $0x10] sm:$0xff]
    %v3623 = vld [vmem:[#allocation5 + $0x20] sm:$0xff]
    %v3624 = vld [vmem:[#allocation5 + $0x30] sm:$0xff]
    %v3625 = vpack.c.bf16 %v3622, %v3621
    %v3626 = vpack.c.bf16 %v3624, %v3623
    %v3627 = vld [vmem:[#allocation10] sm:$0xff]
    %v3628 = vld [vmem:[#allocation10 + $0x8] sm:$0xff]
    %v3629 = vld [vmem:[#allocation10 + $0x10] sm:$0xff]
    %v3630 = vld [vmem:[#allocation10 + $0x18] sm:$0xff]
    %v3631 = vld [vmem:[#allocation10 + $0x20] sm:$0xff]
    %v3632 = vld [vmem:[#allocation10 + $0x28] sm:$0xff]
    %v3633 = vld [vmem:[#allocation10 + $0x30] sm:$0xff]
    %v3634 = vld [vmem:[#allocation10 + $0x38] sm:$0xff]
    %v3635 = vld [vmem:[#allocation10 + $0x40] sm:$0xff]
    %v3636 = vld [vmem:[#allocation10 + $0x48] sm:$0xff]
    %v3637 = vld [vmem:[#allocation10 + $0x50] sm:$0xff]
    %v3638 = vld [vmem:[#allocation10 + $0x58] sm:$0xff]
    %v3639 = vld [vmem:[#allocation10 + $0x60] sm:$0xff]
    %v3640 = vld [vmem:[#allocation10 + $0x68] sm:$0xff]
    %v3641 = vld [vmem:[#allocation10 + $0x70] sm:$0xff]
    %v3642 = vld [vmem:[#allocation10 + $0x78] sm:$0xff]
    %v3643 = vld [vmem:[#allocation5 + $0x1] sm:$0xff]
    %v3644 = vld [vmem:[#allocation5 + $0x11] sm:$0xff]
    %v3645 = vld [vmem:[#allocation5 + $0x21] sm:$0xff]
    %v3646 = vld [vmem:[#allocation5 + $0x31] sm:$0xff]
    %v3647 = vpack.c.bf16 %v3644, %v3643
    %v3648 = vpack.c.bf16 %v3646, %v3645
    %s3649 = scalar_lea.vmem [#allocation10], 128
    %v3650 = vld [vmem:[%s3649] sm:$0xff]
    %v3651 = vld [vmem:[%s3649 + $0x8] sm:$0xff]
    %v3652 = vld [vmem:[%s3649 + $0x10] sm:$0xff]
    %v3653 = vld [vmem:[%s3649 + $0x18] sm:$0xff]
    %v3654 = vld [vmem:[%s3649 + $0x20] sm:$0xff]
    %v3655 = vld [vmem:[%s3649 + $0x28] sm:$0xff]
    %v3656 = vld [vmem:[%s3649 + $0x30] sm:$0xff]
    %v3657 = vld [vmem:[%s3649 + $0x38] sm:$0xff]
    %v3658 = vld [vmem:[%s3649 + $0x40] sm:$0xff]
    %v3659 = vld [vmem:[%s3649 + $0x48] sm:$0xff]
    %v3660 = vld [vmem:[%s3649 + $0x50] sm:$0xff]
    %v3661 = vld [vmem:[%s3649 + $0x58] sm:$0xff]
    %v3662 = vld [vmem:[%s3649 + $0x60] sm:$0xff]
    %v3663 = vld [vmem:[%s3649 + $0x68] sm:$0xff]
    %v3664 = vld [vmem:[%s3649 + $0x70] sm:$0xff]
    %v3665 = vld [vmem:[%s3649 + $0x78] sm:$0xff]
    %v3682 = vunpack.c.l.b16 %v3650
    %v3683 = vunpack.c.h.b16 %v3650
    %v3684 = vunpack.c.l.b16 %v3651
    %v3685 = vunpack.c.h.b16 %v3651
    %v3686 = vunpack.c.l.b16 %v3652
    %v3687 = vunpack.c.h.b16 %v3652
    %v3688 = vunpack.c.l.b16 %v3653
    %v3689 = vunpack.c.h.b16 %v3653
    %v3690 = vunpack.c.l.b16 %v3654
    %v3691 = vunpack.c.h.b16 %v3654
    %v3692 = vunpack.c.l.b16 %v3655
    %v3693 = vunpack.c.h.b16 %v3655
    %v3694 = vunpack.c.l.b16 %v3656
    %v3695 = vunpack.c.h.b16 %v3656
    %v3696 = vunpack.c.l.b16 %v3657
    %v3697 = vunpack.c.h.b16 %v3657
    %v3698 = vunpack.c.l.b16 %v3658
    %v3699 = vunpack.c.h.b16 %v3658
    %v3700 = vunpack.c.l.b16 %v3659
    %v3701 = vunpack.c.h.b16 %v3659
    %v3702 = vunpack.c.l.b16 %v3660
    %v3703 = vunpack.c.h.b16 %v3660
    %v3704 = vunpack.c.l.b16 %v3661
    %v3705 = vunpack.c.h.b16 %v3661
    %v3706 = vunpack.c.l.b16 %v3662
    %v3707 = vunpack.c.h.b16 %v3662
    %v3708 = vunpack.c.l.b16 %v3663
    %v3709 = vunpack.c.h.b16 %v3663
    %v3710 = vunpack.c.l.b16 %v3664
    %v3711 = vunpack.c.h.b16 %v3664
    %v3712 = vunpack.c.l.b16 %v3665
    %v3713 = vunpack.c.h.b16 %v3665
    %v3714 = vpack.c.b16 %v3684, %v3682
    %v3715 = vpack.c.b16 %v3685, %v3683
    %v3716 = vpack.c.b16 %v3688, %v3686
    %v3717 = vpack.c.b16 %v3689, %v3687
    %v3718 = vpack.c.b16 %v3692, %v3690
    %v3719 = vpack.c.b16 %v3693, %v3691
    %v3720 = vpack.c.b16 %v3696, %v3694
    %v3721 = vpack.c.b16 %v3697, %v3695
    %v3722 = vpack.c.b16 %v3700, %v3698
    %v3723 = vpack.c.b16 %v3701, %v3699
    %v3724 = vpack.c.b16 %v3704, %v3702
    %v3725 = vpack.c.b16 %v3705, %v3703
    %v3726 = vpack.c.b16 %v3708, %v3706
    %v3727 = vpack.c.b16 %v3709, %v3707
    %v3728 = vpack.c.b16 %v3712, %v3710
    %v3729 = vpack.c.b16 %v3713, %v3711
    %3746 = vmatpush.bf16.msra.mxu0 %v3728
    %3747 = vmatpush.bf16.msra.mxu0 %v3726
    %3748 = vmatpush.bf16.msra.mxu0 %v3724
    %3749 = vmatpush.bf16.msra.mxu0 %v3722
    %3750 = vmatpush.bf16.msra.mxu0 %v3720
    %3751 = vmatpush.bf16.msra.mxu0 %v3718
    %3752 = vmatpush.bf16.msra.mxu0 %v3716
    %3753 = vmatpush.bf16.msra.mxu0 %v3714
    %3754 = vmatmul.bf16.gmra.mxu0 %v3647
    %v3755 = vpop.f32.mrf.mxu0
    %v3756 = vadd.f32 0.0, %v3755
    %v3757 = vpop.f32.mrf.mxu0
    %v3758 = vadd.f32 0.0, %v3757
    %3759 = vmatmul.bf16.gmra.mxu0 %v3648
    %v3760 = vpop.f32.mrf.mxu0
    %v3761 = vadd.f32 0.0, %v3760
    %v3762 = vpop.f32.mrf.mxu0
    %v3763 = vadd.f32 0.0, %v3762
    %3764 = vdwg.mxu0
    %3765 = vmatpush.bf16.msra.mxu0 %v3729
    %3766 = vmatpush.bf16.msra.mxu0 %v3727
    %3767 = vmatpush.bf16.msra.mxu0 %v3725
    %3768 = vmatpush.bf16.msra.mxu0 %v3723
    %3769 = vmatpush.bf16.msra.mxu0 %v3721
    %3770 = vmatpush.bf16.msra.mxu0 %v3719
    %3771 = vmatpush.bf16.msra.mxu0 %v3717
    %3772 = vmatpush.bf16.msra.mxu0 %v3715
    %3773 = vmatmul.bf16.gmra.mxu0 %v3647
    %v3774 = vpop.f32.mrf.mxu0
    %v3775 = vadd.f32 0.0, %v3774
    %v3776 = vpop.f32.mrf.mxu0
    %v3777 = vadd.f32 0.0, %v3776
    %3778 = vmatmul.bf16.gmra.mxu0 %v3648
    %v3779 = vpop.f32.mrf.mxu0
    %v3780 = vadd.f32 0.0, %v3779
    %v3781 = vpop.f32.mrf.mxu0
    %v3782 = vadd.f32 0.0, %v3781
    %3783 = vdwg.mxu0
    %v3800 = vunpack.c.l.b16 %v3627
    %v3801 = vunpack.c.h.b16 %v3627
    %v3802 = vunpack.c.l.b16 %v3628
    %v3803 = vunpack.c.h.b16 %v3628
    %v3804 = vunpack.c.l.b16 %v3629
    %v3805 = vunpack.c.h.b16 %v3629
    %v3806 = vunpack.c.l.b16 %v3630
    %v3807 = vunpack.c.h.b16 %v3630
    %v3808 = vunpack.c.l.b16 %v3631
    %v3809 = vunpack.c.h.b16 %v3631
    %v3810 = vunpack.c.l.b16 %v3632
    %v3811 = vunpack.c.h.b16 %v3632
    %v3812 = vunpack.c.l.b16 %v3633
    %v3813 = vunpack.c.h.b16 %v3633
    %v3814 = vunpack.c.l.b16 %v3634
    %v3815 = vunpack.c.h.b16 %v3634
    %v3816 = vunpack.c.l.b16 %v3635
    %v3817 = vunpack.c.h.b16 %v3635
    %v3818 = vunpack.c.l.b16 %v3636
    %v3819 = vunpack.c.h.b16 %v3636
    %v3820 = vunpack.c.l.b16 %v3637
    %v3821 = vunpack.c.h.b16 %v3637
    %v3822 = vunpack.c.l.b16 %v3638
    %v3823 = vunpack.c.h.b16 %v3638
    %v3824 = vunpack.c.l.b16 %v3639
    %v3825 = vunpack.c.h.b16 %v3639
    %v3826 = vunpack.c.l.b16 %v3640
    %v3827 = vunpack.c.h.b16 %v3640
    %v3828 = vunpack.c.l.b16 %v3641
    %v3829 = vunpack.c.h.b16 %v3641
    %v3830 = vunpack.c.l.b16 %v3642
    %v3831 = vunpack.c.h.b16 %v3642
    %v3832 = vpack.c.b16 %v3802, %v3800
    %v3833 = vpack.c.b16 %v3803, %v3801
    %v3834 = vpack.c.b16 %v3806, %v3804
    %v3835 = vpack.c.b16 %v3807, %v3805
    %v3836 = vpack.c.b16 %v3810, %v3808
    %v3837 = vpack.c.b16 %v3811, %v3809
    %v3838 = vpack.c.b16 %v3814, %v3812
    %v3839 = vpack.c.b16 %v3815, %v3813
    %v3840 = vpack.c.b16 %v3818, %v3816
    %v3841 = vpack.c.b16 %v3819, %v3817
    %v3842 = vpack.c.b16 %v3822, %v3820
    %v3843 = vpack.c.b16 %v3823, %v3821
    %v3844 = vpack.c.b16 %v3826, %v3824
    %v3845 = vpack.c.b16 %v3827, %v3825
    %v3846 = vpack.c.b16 %v3830, %v3828
    %v3847 = vpack.c.b16 %v3831, %v3829
    %3864 = vmatpush.bf16.msra.mxu0 %v3846
    %3865 = vmatpush.bf16.msra.mxu0 %v3844
    %3866 = vmatpush.bf16.msra.mxu0 %v3842
    %3867 = vmatpush.bf16.msra.mxu0 %v3840
    %3868 = vmatpush.bf16.msra.mxu0 %v3838
    %3869 = vmatpush.bf16.msra.mxu0 %v3836
    %3870 = vmatpush.bf16.msra.mxu0 %v3834
    %3871 = vmatpush.bf16.msra.mxu0 %v3832
    %3872 = vmatmul.bf16.gmra.mxu0 %v3625
    %v3873 = vpop.f32.mrf.mxu0
    %v3874 = vadd.f32 %v3756, %v3873
    %v3875 = vpop.f32.mrf.mxu0
    %v3876 = vadd.f32 %v3758, %v3875
    %3877 = vmatmul.bf16.gmra.mxu0 %v3626
    %v3878 = vpop.f32.mrf.mxu0
    %v3879 = vadd.f32 %v3761, %v3878
    %v3880 = vpop.f32.mrf.mxu0
    %v3881 = vadd.f32 %v3763, %v3880
    %3882 = vdwg.mxu0
    %3883 = vmatpush.bf16.msra.mxu0 %v3847
    %3884 = vmatpush.bf16.msra.mxu0 %v3845
    %3885 = vmatpush.bf16.msra.mxu0 %v3843
    %3886 = vmatpush.bf16.msra.mxu0 %v3841
    %3887 = vmatpush.bf16.msra.mxu0 %v3839
    %3888 = vmatpush.bf16.msra.mxu0 %v3837
    %3889 = vmatpush.bf16.msra.mxu0 %v3835
    %3890 = vmatpush.bf16.msra.mxu0 %v3833
    %3891 = vmatmul.bf16.gmra.mxu0 %v3625
    %v3892 = vpop.f32.mrf.mxu0
    %v3893 = vadd.f32 %v3775, %v3892
    %v3894 = vpop.f32.mrf.mxu0
    %v3895 = vadd.f32 %v3777, %v3894
    %3896 = vmatmul.bf16.gmra.mxu0 %v3626
    %v3897 = vpop.f32.mrf.mxu0
    %v3898 = vadd.f32 %v3780, %v3897
    %v3899 = vpop.f32.mrf.mxu0
    %v3900 = vadd.f32 %v3782, %v3899
    %3901 = vdwg.mxu0
    %v3902 = vld [vmem:[#allocation5 + $0x2] sm:$0xff]
    %v3903 = vld [vmem:[#allocation5 + $0x12] sm:$0xff]
    %v3904 = vld [vmem:[#allocation5 + $0x22] sm:$0xff]
    %v3905 = vld [vmem:[#allocation5 + $0x32] sm:$0xff]
    %v3906 = vpack.c.bf16 %v3903, %v3902
    %v3907 = vpack.c.bf16 %v3905, %v3904
    %s3908 = scalar_lea.vmem [#allocation10], 256
    %v3909 = vld [vmem:[%s3908] sm:$0xff]
    %v3910 = vld [vmem:[%s3908 + $0x8] sm:$0xff]
    %v3911 = vld [vmem:[%s3908 + $0x10] sm:$0xff]
    %v3912 = vld [vmem:[%s3908 + $0x18] sm:$0xff]
    %v3913 = vld [vmem:[%s3908 + $0x20] sm:$0xff]
    %v3914 = vld [vmem:[%s3908 + $0x28] sm:$0xff]
    %v3915 = vld [vmem:[%s3908 + $0x30] sm:$0xff]
    %v3916 = vld [vmem:[%s3908 + $0x38] sm:$0xff]
    %v3917 = vld [vmem:[%s3908 + $0x40] sm:$0xff]
    %v3918 = vld [vmem:[%s3908 + $0x48] sm:$0xff]
    %v3919 = vld [vmem:[%s3908 + $0x50] sm:$0xff]
    %v3920 = vld [vmem:[%s3908 + $0x58] sm:$0xff]
    %v3921 = vld [vmem:[%s3908 + $0x60] sm:$0xff]
    %v3922 = vld [vmem:[%s3908 + $0x68] sm:$0xff]
    %v3923 = vld [vmem:[%s3908 + $0x70] sm:$0xff]
    %v3924 = vld [vmem:[%s3908 + $0x78] sm:$0xff]
    %v3941 = vunpack.c.l.b16 %v3909
    %v3942 = vunpack.c.h.b16 %v3909
    %v3943 = vunpack.c.l.b16 %v3910
    %v3944 = vunpack.c.h.b16 %v3910
    %v3945 = vunpack.c.l.b16 %v3911
    %v3946 = vunpack.c.h.b16 %v3911
    %v3947 = vunpack.c.l.b16 %v3912
    %v3948 = vunpack.c.h.b16 %v3912
    %v3949 = vunpack.c.l.b16 %v3913
    %v3950 = vunpack.c.h.b16 %v3913
    %v3951 = vunpack.c.l.b16 %v3914
    %v3952 = vunpack.c.h.b16 %v3914
    %v3953 = vunpack.c.l.b16 %v3915
    %v3954 = vunpack.c.h.b16 %v3915
    %v3955 = vunpack.c.l.b16 %v3916
    %v3956 = vunpack.c.h.b16 %v3916
    %v3957 = vunpack.c.l.b16 %v3917
    %v3958 = vunpack.c.h.b16 %v3917
    %v3959 = vunpack.c.l.b16 %v3918
    %v3960 = vunpack.c.h.b16 %v3918
    %v3961 = vunpack.c.l.b16 %v3919
    %v3962 = vunpack.c.h.b16 %v3919
    %v3963 = vunpack.c.l.b16 %v3920
    %v3964 = vunpack.c.h.b16 %v3920
    %v3965 = vunpack.c.l.b16 %v3921
    %v3966 = vunpack.c.h.b16 %v3921
    %v3967 = vunpack.c.l.b16 %v3922
    %v3968 = vunpack.c.h.b16 %v3922
    %v3969 = vunpack.c.l.b16 %v3923
    %v3970 = vunpack.c.h.b16 %v3923
    %v3971 = vunpack.c.l.b16 %v3924
    %v3972 = vunpack.c.h.b16 %v3924
    %v3973 = vpack.c.b16 %v3943, %v3941
    %v3974 = vpack.c.b16 %v3944, %v3942
    %v3975 = vpack.c.b16 %v3947, %v3945
    %v3976 = vpack.c.b16 %v3948, %v3946
    %v3977 = vpack.c.b16 %v3951, %v3949
    %v3978 = vpack.c.b16 %v3952, %v3950
    %v3979 = vpack.c.b16 %v3955, %v3953
    %v3980 = vpack.c.b16 %v3956, %v3954
    %v3981 = vpack.c.b16 %v3959, %v3957
    %v3982 = vpack.c.b16 %v3960, %v3958
    %v3983 = vpack.c.b16 %v3963, %v3961
    %v3984 = vpack.c.b16 %v3964, %v3962
    %v3985 = vpack.c.b16 %v3967, %v3965
    %v3986 = vpack.c.b16 %v3968, %v3966
    %v3987 = vpack.c.b16 %v3971, %v3969
    %v3988 = vpack.c.b16 %v3972, %v3970
    %4005 = vmatpush.bf16.msra.mxu0 %v3987
    %4006 = vmatpush.bf16.msra.mxu0 %v3985
    %4007 = vmatpush.bf16.msra.mxu0 %v3983
    %4008 = vmatpush.bf16.msra.mxu0 %v3981
    %4009 = vmatpush.bf16.msra.mxu0 %v3979
    %4010 = vmatpush.bf16.msra.mxu0 %v3977
    %4011 = vmatpush.bf16.msra.mxu0 %v3975
    %4012 = vmatpush.bf16.msra.mxu0 %v3973
    %4013 = vmatmul.bf16.gmra.mxu0 %v3906
    %v4014 = vpop.f32.mrf.mxu0
    %v4015 = vadd.f32 0.0, %v4014
    %v4016 = vpop.f32.mrf.mxu0
    %v4017 = vadd.f32 0.0, %v4016
    %4018 = vmatmul.bf16.gmra.mxu0 %v3907
    %v4019 = vpop.f32.mrf.mxu0
    %v4020 = vadd.f32 0.0, %v4019
    %v4021 = vpop.f32.mrf.mxu0
    %v4022 = vadd.f32 0.0, %v4021
    %4023 = vdwg.mxu0
    %4024 = vmatpush.bf16.msra.mxu0 %v3988
    %4025 = vmatpush.bf16.msra.mxu0 %v3986
    %4026 = vmatpush.bf16.msra.mxu0 %v3984
    %4027 = vmatpush.bf16.msra.mxu0 %v3982
    %4028 = vmatpush.bf16.msra.mxu0 %v3980
    %4029 = vmatpush.bf16.msra.mxu0 %v3978
    %4030 = vmatpush.bf16.msra.mxu0 %v3976
    %4031 = vmatpush.bf16.msra.mxu0 %v3974
    %4032 = vmatmul.bf16.gmra.mxu0 %v3906
    %v4033 = vpop.f32.mrf.mxu0
    %v4034 = vadd.f32 0.0, %v4033
    %v4035 = vpop.f32.mrf.mxu0
    %v4036 = vadd.f32 0.0, %v4035
    %4037 = vmatmul.bf16.gmra.mxu0 %v3907
    %v4038 = vpop.f32.mrf.mxu0
    %v4039 = vadd.f32 0.0, %v4038
    %v4040 = vpop.f32.mrf.mxu0
    %v4041 = vadd.f32 0.0, %v4040
    %4042 = vdwg.mxu0
    %v4043 = vadd.f32 %v3874, %v4015
    %v4044 = vadd.f32 %v3893, %v4034
    %v4045 = vadd.f32 %v3876, %v4017
    %v4046 = vadd.f32 %v3895, %v4036
    %v4047 = vadd.f32 %v3879, %v4020
    %v4048 = vadd.f32 %v3898, %v4039
    %v4049 = vadd.f32 %v3881, %v4022
    %v4050 = vadd.f32 %v3900, %v4041
    %v4051 = vld [vmem:[#allocation5 + $0x3] sm:$0xff]
    %v4052 = vld [vmem:[#allocation5 + $0x13] sm:$0xff]
    %v4053 = vld [vmem:[#allocation5 + $0x23] sm:$0xff]
    %v4054 = vld [vmem:[#allocation5 + $0x33] sm:$0xff]
    %v4055 = vpack.c.bf16 %v4052, %v4051
    %v4056 = vpack.c.bf16 %v4054, %v4053
    %s4057 = scalar_lea.vmem [#allocation10], 384
    %v4058 = vld [vmem:[%s4057] sm:$0xff]
    %v4059 = vld [vmem:[%s4057 + $0x8] sm:$0xff]
    %v4060 = vld [vmem:[%s4057 + $0x10] sm:$0xff]
    %v4061 = vld [vmem:[%s4057 + $0x18] sm:$0xff]
    %v4062 = vld [vmem:[%s4057 + $0x20] sm:$0xff]
    %v4063 = vld [vmem:[%s4057 + $0x28] sm:$0xff]
    %v4064 = vld [vmem:[%s4057 + $0x30] sm:$0xff]
    %v4065 = vld [vmem:[%s4057 + $0x38] sm:$0xff]
    %v4066 = vld [vmem:[%s4057 + $0x40] sm:$0xff]
    %v4067 = vld [vmem:[%s4057 + $0x48] sm:$0xff]
    %v4068 = vld [vmem:[%s4057 + $0x50] sm:$0xff]
    %v4069 = vld [vmem:[%s4057 + $0x58] sm:$0xff]
    %v4070 = vld [vmem:[%s4057 + $0x60] sm:$0xff]
    %v4071 = vld [vmem:[%s4057 + $0x68] sm:$0xff]
    %v4072 = vld [vmem:[%s4057 + $0x70] sm:$0xff]
    %v4073 = vld [vmem:[%s4057 + $0x78] sm:$0xff]
    %v4090 = vunpack.c.l.b16 %v4058
    %v4091 = vunpack.c.h.b16 %v4058
    %v4092 = vunpack.c.l.b16 %v4059
    %v4093 = vunpack.c.h.b16 %v4059
    %v4094 = vunpack.c.l.b16 %v4060
    %v4095 = vunpack.c.h.b16 %v4060
    %v4096 = vunpack.c.l.b16 %v4061
    %v4097 = vunpack.c.h.b16 %v4061
    %v4098 = vunpack.c.l.b16 %v4062
    %v4099 = vunpack.c.h.b16 %v4062
    %v4100 = vunpack.c.l.b16 %v4063
    %v4101 = vunpack.c.h.b16 %v4063
    %v4102 = vunpack.c.l.b16 %v4064
    %v4103 = vunpack.c.h.b16 %v4064
    %v4104 = vunpack.c.l.b16 %v4065
    %v4105 = vunpack.c.h.b16 %v4065
    %v4106 = vunpack.c.l.b16 %v4066
    %v4107 = vunpack.c.h.b16 %v4066
    %v4108 = vunpack.c.l.b16 %v4067
    %v4109 = vunpack.c.h.b16 %v4067
    %v4110 = vunpack.c.l.b16 %v4068
    %v4111 = vunpack.c.h.b16 %v4068
    %v4112 = vunpack.c.l.b16 %v4069
    %v4113 = vunpack.c.h.b16 %v4069
    %v4114 = vunpack.c.l.b16 %v4070
    %v4115 = vunpack.c.h.b16 %v4070
    %v4116 = vunpack.c.l.b16 %v4071
    %v4117 = vunpack.c.h.b16 %v4071
    %v4118 = vunpack.c.l.b16 %v4072
    %v4119 = vunpack.c.h.b16 %v4072
    %v4120 = vunpack.c.l.b16 %v4073
    %v4121 = vunpack.c.h.b16 %v4073
    %v4122 = vpack.c.b16 %v4092, %v4090
    %v4123 = vpack.c.b16 %v4093, %v4091
    %v4124 = vpack.c.b16 %v4096, %v4094
    %v4125 = vpack.c.b16 %v4097, %v4095
    %v4126 = vpack.c.b16 %v4100, %v4098
    %v4127 = vpack.c.b16 %v4101, %v4099
    %v4128 = vpack.c.b16 %v4104, %v4102
    %v4129 = vpack.c.b16 %v4105, %v4103
    %v4130 = vpack.c.b16 %v4108, %v4106
    %v4131 = vpack.c.b16 %v4109, %v4107
    %v4132 = vpack.c.b16 %v4112, %v4110
    %v4133 = vpack.c.b16 %v4113, %v4111
    %v4134 = vpack.c.b16 %v4116, %v4114
    %v4135 = vpack.c.b16 %v4117, %v4115
    %v4136 = vpack.c.b16 %v4120, %v4118
    %v4137 = vpack.c.b16 %v4121, %v4119
    %4154 = vmatpush.bf16.msra.mxu0 %v4136
    %4155 = vmatpush.bf16.msra.mxu0 %v4134
    %4156 = vmatpush.bf16.msra.mxu0 %v4132
    %4157 = vmatpush.bf16.msra.mxu0 %v4130
    %4158 = vmatpush.bf16.msra.mxu0 %v4128
    %4159 = vmatpush.bf16.msra.mxu0 %v4126
    %4160 = vmatpush.bf16.msra.mxu0 %v4124
    %4161 = vmatpush.bf16.msra.mxu0 %v4122
    %4162 = vmatmul.bf16.gmra.mxu0 %v4055
    %v4163 = vpop.f32.mrf.mxu0
    %v4164 = vadd.f32 0.0, %v4163
    %v4165 = vpop.f32.mrf.mxu0
    %v4166 = vadd.f32 0.0, %v4165
    %4167 = vmatmul.bf16.gmra.mxu0 %v4056
    %v4168 = vpop.f32.mrf.mxu0
    %v4169 = vadd.f32 0.0, %v4168
    %v4170 = vpop.f32.mrf.mxu0
    %v4171 = vadd.f32 0.0, %v4170
    %4172 = vdwg.mxu0
    %4173 = vmatpush.bf16.msra.mxu0 %v4137
    %4174 = vmatpush.bf16.msra.mxu0 %v4135
    %4175 = vmatpush.bf16.msra.mxu0 %v4133
    %4176 = vmatpush.bf16.msra.mxu0 %v4131
    %4177 = vmatpush.bf16.msra.mxu0 %v4129
    %4178 = vmatpush.bf16.msra.mxu0 %v4127
    %4179 = vmatpush.bf16.msra.mxu0 %v4125
    %4180 = vmatpush.bf16.msra.mxu0 %v4123
    %4181 = vmatmul.bf16.gmra.mxu0 %v4055
    %v4182 = vpop.f32.mrf.mxu0
    %v4183 = vadd.f32 0.0, %v4182
    %v4184 = vpop.f32.mrf.mxu0
    %v4185 = vadd.f32 0.0, %v4184
    %4186 = vmatmul.bf16.gmra.mxu0 %v4056
    %v4187 = vpop.f32.mrf.mxu0
    %v4188 = vadd.f32 0.0, %v4187
    %v4189 = vpop.f32.mrf.mxu0
    %v4190 = vadd.f32 0.0, %v4189
    %4191 = vdwg.mxu0
    %v4192 = vadd.f32 %v4043, %v4164
    %v4193 = vadd.f32 %v4044, %v4183
    %v4194 = vadd.f32 %v4045, %v4166
    %v4195 = vadd.f32 %v4046, %v4185
    %v4196 = vadd.f32 %v4047, %v4169
    %v4197 = vadd.f32 %v4048, %v4188
    %v4198 = vadd.f32 %v4049, %v4171
    %v4199 = vadd.f32 %v4050, %v4190
    %v4200 = vld [vmem:[#allocation5 + $0x4] sm:$0xff]
    %v4201 = vld [vmem:[#allocation5 + $0x14] sm:$0xff]
    %v4202 = vld [vmem:[#allocation5 + $0x24] sm:$0xff]
    %v4203 = vld [vmem:[#allocation5 + $0x34] sm:$0xff]
    %v4204 = vpack.c.bf16 %v4201, %v4200
    %v4205 = vpack.c.bf16 %v4203, %v4202
    %s4206 = scalar_lea.vmem [#allocation10], 512
    %v4207 = vld [vmem:[%s4206] sm:$0xff]
    %v4208 = vld [vmem:[%s4206 + $0x8] sm:$0xff]
    %v4209 = vld [vmem:[%s4206 + $0x10] sm:$0xff]
    %v4210 = vld [vmem:[%s4206 + $0x18] sm:$0xff]
    %v4211 = vld [vmem:[%s4206 + $0x20] sm:$0xff]
    %v4212 = vld [vmem:[%s4206 + $0x28] sm:$0xff]
    %v4213 = vld [vmem:[%s4206 + $0x30] sm:$0xff]
    %v4214 = vld [vmem:[%s4206 + $0x38] sm:$0xff]
    %v4215 = vld [vmem:[%s4206 + $0x40] sm:$0xff]
    %v4216 = vld [vmem:[%s4206 + $0x48] sm:$0xff]
    %v4217 = vld [vmem:[%s4206 + $0x50] sm:$0xff]
    %v4218 = vld [vmem:[%s4206 + $0x58] sm:$0xff]
    %v4219 = vld [vmem:[%s4206 + $0x60] sm:$0xff]
    %v4220 = vld [vmem:[%s4206 + $0x68] sm:$0xff]
    %v4221 = vld [vmem:[%s4206 + $0x70] sm:$0xff]
    %v4222 = vld [vmem:[%s4206 + $0x78] sm:$0xff]
    %v4239 = vunpack.c.l.b16 %v4207
    %v4240 = vunpack.c.h.b16 %v4207
    %v4241 = vunpack.c.l.b16 %v4208
    %v4242 = vunpack.c.h.b16 %v4208
    %v4243 = vunpack.c.l.b16 %v4209
    %v4244 = vunpack.c.h.b16 %v4209
    %v4245 = vunpack.c.l.b16 %v4210
    %v4246 = vunpack.c.h.b16 %v4210
    %v4247 = vunpack.c.l.b16 %v4211
    %v4248 = vunpack.c.h.b16 %v4211
    %v4249 = vunpack.c.l.b16 %v4212
    %v4250 = vunpack.c.h.b16 %v4212
    %v4251 = vunpack.c.l.b16 %v4213
    %v4252 = vunpack.c.h.b16 %v4213
    %v4253 = vunpack.c.l.b16 %v4214
    %v4254 = vunpack.c.h.b16 %v4214
    %v4255 = vunpack.c.l.b16 %v4215
    %v4256 = vunpack.c.h.b16 %v4215
    %v4257 = vunpack.c.l.b16 %v4216
    %v4258 = vunpack.c.h.b16 %v4216
    %v4259 = vunpack.c.l.b16 %v4217
    %v4260 = vunpack.c.h.b16 %v4217
    %v4261 = vunpack.c.l.b16 %v4218
    %v4262 = vunpack.c.h.b16 %v4218
    %v4263 = vunpack.c.l.b16 %v4219
    %v4264 = vunpack.c.h.b16 %v4219
    %v4265 = vunpack.c.l.b16 %v4220
    %v4266 = vunpack.c.h.b16 %v4220
    %v4267 = vunpack.c.l.b16 %v4221
    %v4268 = vunpack.c.h.b16 %v4221
    %v4269 = vunpack.c.l.b16 %v4222
    %v4270 = vunpack.c.h.b16 %v4222
    %v4271 = vpack.c.b16 %v4241, %v4239
    %v4272 = vpack.c.b16 %v4242, %v4240
    %v4273 = vpack.c.b16 %v4245, %v4243
    %v4274 = vpack.c.b16 %v4246, %v4244
    %v4275 = vpack.c.b16 %v4249, %v4247
    %v4276 = vpack.c.b16 %v4250, %v4248
    %v4277 = vpack.c.b16 %v4253, %v4251
    %v4278 = vpack.c.b16 %v4254, %v4252
    %v4279 = vpack.c.b16 %v4257, %v4255
    %v4280 = vpack.c.b16 %v4258, %v4256
    %v4281 = vpack.c.b16 %v4261, %v4259
    %v4282 = vpack.c.b16 %v4262, %v4260
    %v4283 = vpack.c.b16 %v4265, %v4263
    %v4284 = vpack.c.b16 %v4266, %v4264
    %v4285 = vpack.c.b16 %v4269, %v4267
    %v4286 = vpack.c.b16 %v4270, %v4268
    %4303 = vmatpush.bf16.msra.mxu0 %v4285
    %4304 = vmatpush.bf16.msra.mxu0 %v4283
    %4305 = vmatpush.bf16.msra.mxu0 %v4281
    %4306 = vmatpush.bf16.msra.mxu0 %v4279
    %4307 = vmatpush.bf16.msra.mxu0 %v4277
    %4308 = vmatpush.bf16.msra.mxu0 %v4275
    %4309 = vmatpush.bf16.msra.mxu0 %v4273
    %4310 = vmatpush.bf16.msra.mxu0 %v4271
    %4311 = vmatmul.bf16.gmra.mxu0 %v4204
    %v4312 = vpop.f32.mrf.mxu0
    %v4313 = vadd.f32 0.0, %v4312
    %v4314 = vpop.f32.mrf.mxu0
    %v4315 = vadd.f32 0.0, %v4314
    %4316 = vmatmul.bf16.gmra.mxu0 %v4205
    %v4317 = vpop.f32.mrf.mxu0
    %v4318 = vadd.f32 0.0, %v4317
    %v4319 = vpop.f32.mrf.mxu0
    %v4320 = vadd.f32 0.0, %v4319
    %4321 = vdwg.mxu0
    %4322 = vmatpush.bf16.msra.mxu0 %v4286
    %4323 = vmatpush.bf16.msra.mxu0 %v4284
    %4324 = vmatpush.bf16.msra.mxu0 %v4282
    %4325 = vmatpush.bf16.msra.mxu0 %v4280
    %4326 = vmatpush.bf16.msra.mxu0 %v4278
    %4327 = vmatpush.bf16.msra.mxu0 %v4276
    %4328 = vmatpush.bf16.msra.mxu0 %v4274
    %4329 = vmatpush.bf16.msra.mxu0 %v4272
    %4330 = vmatmul.bf16.gmra.mxu0 %v4204
    %v4331 = vpop.f32.mrf.mxu0
    %v4332 = vadd.f32 0.0, %v4331
    %v4333 = vpop.f32.mrf.mxu0
    %v4334 = vadd.f32 0.0, %v4333
    %4335 = vmatmul.bf16.gmra.mxu0 %v4205
    %v4336 = vpop.f32.mrf.mxu0
    %v4337 = vadd.f32 0.0, %v4336
    %v4338 = vpop.f32.mrf.mxu0
    %v4339 = vadd.f32 0.0, %v4338
    %4340 = vdwg.mxu0
    %v4341 = vadd.f32 %v4192, %v4313
    %v4342 = vadd.f32 %v4193, %v4332
    %v4343 = vadd.f32 %v4194, %v4315
    %v4344 = vadd.f32 %v4195, %v4334
    %v4345 = vadd.f32 %v4196, %v4318
    %v4346 = vadd.f32 %v4197, %v4337
    %v4347 = vadd.f32 %v4198, %v4320
    %v4348 = vadd.f32 %v4199, %v4339
    %v4349 = vld [vmem:[%s14] sm:$0x3]
    %v4351 = vperm.slane %v4349, 0
    %v4352 = vperm.slane %v4349, 1
    %v4355 = vadd.f32 %v4341, %v4351
    %v4356 = vadd.f32 %v4342, %v4352
    %v4357 = vadd.f32 %v4343, %v4351
    %v4358 = vadd.f32 %v4344, %v4352
    %v4359 = vadd.f32 %v4345, %v4351
    %v4360 = vadd.f32 %v4346, %v4352
    %v4361 = vadd.f32 %v4347, %v4351
    %v4362 = vadd.f32 %v4348, %v4352
    %v4363 = vmax.f32 %v4355, 0.0
    %v4364 = vmax.f32 %v4356, 0.0
    %v4365 = vmax.f32 %v4357, 0.0
    %v4366 = vmax.f32 %v4358, 0.0
    %v4367 = vmax.f32 %v4359, 0.0
    %v4368 = vmax.f32 %v4360, 0.0
    %v4369 = vmax.f32 %v4361, 0.0
    %v4370 = vmax.f32 %v4362, 0.0
    %v4371 = vld [vmem:[%s15] sm:$0x3]
    %v4373 = vperm.slane %v4371, 0
    %v4374 = vperm.slane %v4371, 1
    %v4377 = vmul.f32 %v4363, %v4373
    %v4378 = vmul.f32 %v4364, %v4374
    %v4379 = vmul.f32 %v4365, %v4373
    %v4380 = vmul.f32 %v4366, %v4374
    %v4381 = vmul.f32 %v4367, %v4373
    %v4382 = vmul.f32 %v4368, %v4374
    %v4383 = vmul.f32 %v4369, %v4373
    %v4384 = vmul.f32 %v4370, %v4374
    %v4385 = vld [vmem:[%s16] sm:$0x3]
    %v4387 = vperm.slane %v4385, 0
    %v4388 = vperm.slane %v4385, 1
    %v4391 = vadd.f32 %v4377, %v4387
    %v4392 = vadd.f32 %v4378, %v4388
    %v4393 = vadd.f32 %v4379, %v4387
    %v4394 = vadd.f32 %v4380, %v4388
    %v4395 = vadd.f32 %v4381, %v4387
    %v4396 = vadd.f32 %v4382, %v4388
    %v4397 = vadd.f32 %v4383, %v4387
    %v4398 = vadd.f32 %v4384, %v4388
    %vm4399 = vcmask 64512
    %v4400 = vsel %vm4399, %v1639, 0
    %4402 = vmatpush.msra.mxu0 0.0
    %4403 = vmatpush.msra.mxu0 0.0
    %4404 = vmatpush.msra.mxu0 0.0
    %4405 = vmatpush.msra.mxu0 0.0
    %4406 = vmatpush.msra.mxu0 0.0
    %4407 = vmatpush.msra.mxu0 0.0
    %4408 = vmatpush.msra.mxu0 0.0
    %4409 = vmatpush.msra.mxu0 0.0
    %4410 = vmatpush.msra.mxu0 0.0
    %4411 = vmatpush.msra.mxu0 0.0
    %4412 = vmatpush.msra.mxu0 0.0
    %4413 = vmatpush.msra.mxu0 0.0
    %4414 = vmatpush.msra.mxu0 0.0
    %4415 = vmatpush.msra.mxu0 0.0
    %4416 = vmatpush.msra.mxu0 0.0
    %4417 = vmatpush.msra.mxu0 %v4391
    %4418 = vmatmul.f32.gmra.mxu0 %v4400
    %v4419 = vpop.f32.mrf.mxu0
    %v4420 = vadd.f32 0.0, %v4419
    %4421 = vdwg.mxu0
    %4422 = vmatpush.msra.mxu0 0.0
    %4423 = vmatpush.msra.mxu0 0.0
    %4424 = vmatpush.msra.mxu0 0.0
    %4425 = vmatpush.msra.mxu0 0.0
    %4426 = vmatpush.msra.mxu0 0.0
    %4427 = vmatpush.msra.mxu0 0.0
    %4428 = vmatpush.msra.mxu0 0.0
    %4429 = vmatpush.msra.mxu0 0.0
    %4430 = vmatpush.msra.mxu0 0.0
    %4431 = vmatpush.msra.mxu0 0.0
    %4432 = vmatpush.msra.mxu0 0.0
    %4433 = vmatpush.msra.mxu0 0.0
    %4434 = vmatpush.msra.mxu0 0.0
    %4435 = vmatpush.msra.mxu0 0.0
    %4436 = vmatpush.msra.mxu0 0.0
    %4437 = vmatpush.msra.mxu0 %v4392
    %4438 = vmatmul.f32.gmra.mxu0 %v4400
    %v4439 = vpop.f32.mrf.mxu0
    %v4440 = vadd.f32 0.0, %v4439
    %4441 = vdwg.mxu0
    %4442 = vmatpush.msra.mxu0 0.0
    %4443 = vmatpush.msra.mxu0 0.0
    %4444 = vmatpush.msra.mxu0 0.0
    %4445 = vmatpush.msra.mxu0 0.0
    %4446 = vmatpush.msra.mxu0 0.0
    %4447 = vmatpush.msra.mxu0 0.0
    %4448 = vmatpush.msra.mxu0 0.0
    %4449 = vmatpush.msra.mxu0 0.0
    %4450 = vmatpush.msra.mxu0 0.0
    %4451 = vmatpush.msra.mxu0 0.0
    %4452 = vmatpush.msra.mxu0 0.0
    %4453 = vmatpush.msra.mxu0 0.0
    %4454 = vmatpush.msra.mxu0 0.0
    %4455 = vmatpush.msra.mxu0 0.0
    %4456 = vmatpush.msra.mxu0 0.0
    %4457 = vmatpush.msra.mxu0 %v4393
    %4458 = vmatmul.f32.gmra.mxu0 %v4400
    %v4459 = vpop.f32.mrf.mxu0
    %v4460 = vadd.f32 0.0, %v4459
    %4461 = vdwg.mxu0
    %4462 = vmatpush.msra.mxu0 0.0
    %4463 = vmatpush.msra.mxu0 0.0
    %4464 = vmatpush.msra.mxu0 0.0
    %4465 = vmatpush.msra.mxu0 0.0
    %4466 = vmatpush.msra.mxu0 0.0
    %4467 = vmatpush.msra.mxu0 0.0
    %4468 = vmatpush.msra.mxu0 0.0
    %4469 = vmatpush.msra.mxu0 0.0
    %4470 = vmatpush.msra.mxu0 0.0
    %4471 = vmatpush.msra.mxu0 0.0
    %4472 = vmatpush.msra.mxu0 0.0
    %4473 = vmatpush.msra.mxu0 0.0
    %4474 = vmatpush.msra.mxu0 0.0
    %4475 = vmatpush.msra.mxu0 0.0
    %4476 = vmatpush.msra.mxu0 0.0
    %4477 = vmatpush.msra.mxu0 %v4394
    %4478 = vmatmul.f32.gmra.mxu0 %v4400
    %v4479 = vpop.f32.mrf.mxu0
    %v4480 = vadd.f32 0.0, %v4479
    %4481 = vdwg.mxu0
    %4482 = vmatpush.msra.mxu0 0.0
    %4483 = vmatpush.msra.mxu0 0.0
    %4484 = vmatpush.msra.mxu0 0.0
    %4485 = vmatpush.msra.mxu0 0.0
    %4486 = vmatpush.msra.mxu0 0.0
    %4487 = vmatpush.msra.mxu0 0.0
    %4488 = vmatpush.msra.mxu0 0.0
    %4489 = vmatpush.msra.mxu0 0.0
    %4490 = vmatpush.msra.mxu0 0.0
    %4491 = vmatpush.msra.mxu0 0.0
    %4492 = vmatpush.msra.mxu0 0.0
    %4493 = vmatpush.msra.mxu0 0.0
    %4494 = vmatpush.msra.mxu0 0.0
    %4495 = vmatpush.msra.mxu0 0.0
    %4496 = vmatpush.msra.mxu0 0.0
    %4497 = vmatpush.msra.mxu0 %v4395
    %4498 = vmatmul.f32.gmra.mxu0 %v4400
    %v4499 = vpop.f32.mrf.mxu0
    %v4500 = vadd.f32 0.0, %v4499
    %4501 = vdwg.mxu0
    %4502 = vmatpush.msra.mxu0 0.0
    %4503 = vmatpush.msra.mxu0 0.0
    %4504 = vmatpush.msra.mxu0 0.0
    %4505 = vmatpush.msra.mxu0 0.0
    %4506 = vmatpush.msra.mxu0 0.0
    %4507 = vmatpush.msra.mxu0 0.0
    %4508 = vmatpush.msra.mxu0 0.0
    %4509 = vmatpush.msra.mxu0 0.0
    %4510 = vmatpush.msra.mxu0 0.0
    %4511 = vmatpush.msra.mxu0 0.0
    %4512 = vmatpush.msra.mxu0 0.0
    %4513 = vmatpush.msra.mxu0 0.0
    %4514 = vmatpush.msra.mxu0 0.0
    %4515 = vmatpush.msra.mxu0 0.0
    %4516 = vmatpush.msra.mxu0 0.0
    %4517 = vmatpush.msra.mxu0 %v4396
    %4518 = vmatmul.f32.gmra.mxu0 %v4400
    %v4519 = vpop.f32.mrf.mxu0
    %v4520 = vadd.f32 0.0, %v4519
    %4521 = vdwg.mxu0
    %4522 = vmatpush.msra.mxu0 0.0
    %4523 = vmatpush.msra.mxu0 0.0
    %4524 = vmatpush.msra.mxu0 0.0
    %4525 = vmatpush.msra.mxu0 0.0
    %4526 = vmatpush.msra.mxu0 0.0
    %4527 = vmatpush.msra.mxu0 0.0
    %4528 = vmatpush.msra.mxu0 0.0
    %4529 = vmatpush.msra.mxu0 0.0
    %4530 = vmatpush.msra.mxu0 0.0
    %4531 = vmatpush.msra.mxu0 0.0
    %4532 = vmatpush.msra.mxu0 0.0
    %4533 = vmatpush.msra.mxu0 0.0
    %4534 = vmatpush.msra.mxu0 0.0
    %4535 = vmatpush.msra.mxu0 0.0
    %4536 = vmatpush.msra.mxu0 0.0
    %4537 = vmatpush.msra.mxu0 %v4397
    %4538 = vmatmul.f32.gmra.mxu0 %v4400
    %v4539 = vpop.f32.mrf.mxu0
    %v4540 = vadd.f32 0.0, %v4539
    %4541 = vdwg.mxu0
    %4542 = vmatpush.msra.mxu0 0.0
    %4543 = vmatpush.msra.mxu0 0.0
    %4544 = vmatpush.msra.mxu0 0.0
    %4545 = vmatpush.msra.mxu0 0.0
    %4546 = vmatpush.msra.mxu0 0.0
    %4547 = vmatpush.msra.mxu0 0.0
    %4548 = vmatpush.msra.mxu0 0.0
    %4549 = vmatpush.msra.mxu0 0.0
    %4550 = vmatpush.msra.mxu0 0.0
    %4551 = vmatpush.msra.mxu0 0.0
    %4552 = vmatpush.msra.mxu0 0.0
    %4553 = vmatpush.msra.mxu0 0.0
    %4554 = vmatpush.msra.mxu0 0.0
    %4555 = vmatpush.msra.mxu0 0.0
    %4556 = vmatpush.msra.mxu0 0.0
    %4557 = vmatpush.msra.mxu0 %v4398
    %4558 = vmatmul.f32.gmra.mxu0 %v4400
    %v4559 = vpop.f32.mrf.mxu0
    %v4560 = vadd.f32 0.0, %v4559
    %4561 = vdwg.mxu0
    %v4562 = vsel %vm4399, %v1651, 0
    %4564 = vmatpush.msra.mxu0 0.0
    %4565 = vmatpush.msra.mxu0 0.0
    %4566 = vmatpush.msra.mxu0 0.0
    %4567 = vmatpush.msra.mxu0 0.0
    %4568 = vmatpush.msra.mxu0 0.0
    %4569 = vmatpush.msra.mxu0 0.0
    %4570 = vmatpush.msra.mxu0 0.0
    %4571 = vmatpush.msra.mxu0 0.0
    %4572 = vmatpush.msra.mxu0 0.0
    %4573 = vmatpush.msra.mxu0 0.0
    %4574 = vmatpush.msra.mxu0 0.0
    %4575 = vmatpush.msra.mxu0 0.0
    %4576 = vmatpush.msra.mxu0 0.0
    %4577 = vmatpush.msra.mxu0 0.0
    %4578 = vmatpush.msra.mxu0 0.0
    %4579 = vmatpush.msra.mxu0 %v4391
    %4580 = vmatmul.f32.gmra.mxu0 %v4562
    %v4581 = vpop.f32.mrf.mxu0
    %v4582 = vadd.f32 0.0, %v4581
    %4583 = vdwg.mxu0
    %4584 = vmatpush.msra.mxu0 0.0
    %4585 = vmatpush.msra.mxu0 0.0
    %4586 = vmatpush.msra.mxu0 0.0
    %4587 = vmatpush.msra.mxu0 0.0
    %4588 = vmatpush.msra.mxu0 0.0
    %4589 = vmatpush.msra.mxu0 0.0
    %4590 = vmatpush.msra.mxu0 0.0
    %4591 = vmatpush.msra.mxu0 0.0
    %4592 = vmatpush.msra.mxu0 0.0
    %4593 = vmatpush.msra.mxu0 0.0
    %4594 = vmatpush.msra.mxu0 0.0
    %4595 = vmatpush.msra.mxu0 0.0
    %4596 = vmatpush.msra.mxu0 0.0
    %4597 = vmatpush.msra.mxu0 0.0
    %4598 = vmatpush.msra.mxu0 0.0
    %4599 = vmatpush.msra.mxu0 %v4392
    %4600 = vmatmul.f32.gmra.mxu0 %v4562
    %v4601 = vpop.f32.mrf.mxu0
    %v4602 = vadd.f32 0.0, %v4601
    %4603 = vdwg.mxu0
    %4604 = vmatpush.msra.mxu0 0.0
    %4605 = vmatpush.msra.mxu0 0.0
    %4606 = vmatpush.msra.mxu0 0.0
    %4607 = vmatpush.msra.mxu0 0.0
    %4608 = vmatpush.msra.mxu0 0.0
    %4609 = vmatpush.msra.mxu0 0.0
    %4610 = vmatpush.msra.mxu0 0.0
    %4611 = vmatpush.msra.mxu0 0.0
    %4612 = vmatpush.msra.mxu0 0.0
    %4613 = vmatpush.msra.mxu0 0.0
    %4614 = vmatpush.msra.mxu0 0.0
    %4615 = vmatpush.msra.mxu0 0.0
    %4616 = vmatpush.msra.mxu0 0.0
    %4617 = vmatpush.msra.mxu0 0.0
    %4618 = vmatpush.msra.mxu0 0.0
    %4619 = vmatpush.msra.mxu0 %v4393
    %4620 = vmatmul.f32.gmra.mxu0 %v4562
    %v4621 = vpop.f32.mrf.mxu0
    %v4622 = vadd.f32 0.0, %v4621
    %4623 = vdwg.mxu0
    %4624 = vmatpush.msra.mxu0 0.0
    %4625 = vmatpush.msra.mxu0 0.0
    %4626 = vmatpush.msra.mxu0 0.0
    %4627 = vmatpush.msra.mxu0 0.0
    %4628 = vmatpush.msra.mxu0 0.0
    %4629 = vmatpush.msra.mxu0 0.0
    %4630 = vmatpush.msra.mxu0 0.0
    %4631 = vmatpush.msra.mxu0 0.0
    %4632 = vmatpush.msra.mxu0 0.0
    %4633 = vmatpush.msra.mxu0 0.0
    %4634 = vmatpush.msra.mxu0 0.0
    %4635 = vmatpush.msra.mxu0 0.0
    %4636 = vmatpush.msra.mxu0 0.0
    %4637 = vmatpush.msra.mxu0 0.0
    %4638 = vmatpush.msra.mxu0 0.0
    %4639 = vmatpush.msra.mxu0 %v4394
    %4640 = vmatmul.f32.gmra.mxu0 %v4562
    %v4641 = vpop.f32.mrf.mxu0
    %v4642 = vadd.f32 0.0, %v4641
    %4643 = vdwg.mxu0
    %4644 = vmatpush.msra.mxu0 0.0
    %4645 = vmatpush.msra.mxu0 0.0
    %4646 = vmatpush.msra.mxu0 0.0
    %4647 = vmatpush.msra.mxu0 0.0
    %4648 = vmatpush.msra.mxu0 0.0
    %4649 = vmatpush.msra.mxu0 0.0
    %4650 = vmatpush.msra.mxu0 0.0
    %4651 = vmatpush.msra.mxu0 0.0
    %4652 = vmatpush.msra.mxu0 0.0
    %4653 = vmatpush.msra.mxu0 0.0
    %4654 = vmatpush.msra.mxu0 0.0
    %4655 = vmatpush.msra.mxu0 0.0
    %4656 = vmatpush.msra.mxu0 0.0
    %4657 = vmatpush.msra.mxu0 0.0
    %4658 = vmatpush.msra.mxu0 0.0
    %4659 = vmatpush.msra.mxu0 %v4395
    %4660 = vmatmul.f32.gmra.mxu0 %v4562
    %v4661 = vpop.f32.mrf.mxu0
    %v4662 = vadd.f32 0.0, %v4661
    %4663 = vdwg.mxu0
    %4664 = vmatpush.msra.mxu0 0.0
    %4665 = vmatpush.msra.mxu0 0.0
    %4666 = vmatpush.msra.mxu0 0.0
    %4667 = vmatpush.msra.mxu0 0.0
    %4668 = vmatpush.msra.mxu0 0.0
    %4669 = vmatpush.msra.mxu0 0.0
    %4670 = vmatpush.msra.mxu0 0.0
    %4671 = vmatpush.msra.mxu0 0.0
    %4672 = vmatpush.msra.mxu0 0.0
    %4673 = vmatpush.msra.mxu0 0.0
    %4674 = vmatpush.msra.mxu0 0.0
    %4675 = vmatpush.msra.mxu0 0.0
    %4676 = vmatpush.msra.mxu0 0.0
    %4677 = vmatpush.msra.mxu0 0.0
    %4678 = vmatpush.msra.mxu0 0.0
    %4679 = vmatpush.msra.mxu0 %v4396
    %4680 = vmatmul.f32.gmra.mxu0 %v4562
    %v4681 = vpop.f32.mrf.mxu0
    %v4682 = vadd.f32 0.0, %v4681
    %4683 = vdwg.mxu0
    %4684 = vmatpush.msra.mxu0 0.0
    %4685 = vmatpush.msra.mxu0 0.0
    %4686 = vmatpush.msra.mxu0 0.0
    %4687 = vmatpush.msra.mxu0 0.0
    %4688 = vmatpush.msra.mxu0 0.0
    %4689 = vmatpush.msra.mxu0 0.0
    %4690 = vmatpush.msra.mxu0 0.0
    %4691 = vmatpush.msra.mxu0 0.0
    %4692 = vmatpush.msra.mxu0 0.0
    %4693 = vmatpush.msra.mxu0 0.0
    %4694 = vmatpush.msra.mxu0 0.0
    %4695 = vmatpush.msra.mxu0 0.0
    %4696 = vmatpush.msra.mxu0 0.0
    %4697 = vmatpush.msra.mxu0 0.0
    %4698 = vmatpush.msra.mxu0 0.0
    %4699 = vmatpush.msra.mxu0 %v4397
    %4700 = vmatmul.f32.gmra.mxu0 %v4562
    %v4701 = vpop.f32.mrf.mxu0
    %v4702 = vadd.f32 0.0, %v4701
    %4703 = vdwg.mxu0
    %4704 = vmatpush.msra.mxu0 0.0
    %4705 = vmatpush.msra.mxu0 0.0
    %4706 = vmatpush.msra.mxu0 0.0
    %4707 = vmatpush.msra.mxu0 0.0
    %4708 = vmatpush.msra.mxu0 0.0
    %4709 = vmatpush.msra.mxu0 0.0
    %4710 = vmatpush.msra.mxu0 0.0
    %4711 = vmatpush.msra.mxu0 0.0
    %4712 = vmatpush.msra.mxu0 0.0
    %4713 = vmatpush.msra.mxu0 0.0
    %4714 = vmatpush.msra.mxu0 0.0
    %4715 = vmatpush.msra.mxu0 0.0
    %4716 = vmatpush.msra.mxu0 0.0
    %4717 = vmatpush.msra.mxu0 0.0
    %4718 = vmatpush.msra.mxu0 0.0
    %4719 = vmatpush.msra.mxu0 %v4398
    %4720 = vmatmul.f32.gmra.mxu0 %v4562
    %v4721 = vpop.f32.mrf.mxu0
    %v4722 = vadd.f32 0.0, %v4721
    %4723 = vdwg.mxu0
    %v4724 = vmax.f32 %v4420, %v4582
    %v4725 = vmax.f32 %v4440, %v4602
    %v4726 = vmax.f32 %v4460, %v4622
    %v4727 = vmax.f32 %v4480, %v4642
    %v4728 = vmax.f32 %v4500, %v4662
    %v4729 = vmax.f32 %v4520, %v4682
    %v4730 = vmax.f32 %v4540, %v4702
    %v4731 = vmax.f32 %v4560, %v4722
    %v4740 = vrot.slane %v4725, 4
    %v4741 = vrot.slane %v4727, 4
    %v4742 = vrot.slane %v4729, 4
    %v4743 = vrot.slane %v4731, 4
    %vm4744 = vcmask 1043456
    %v4745 = vsel %vm4744, %v4724, %v4740
    %v4746 = vsel %vm4744, %v4726, %v4741
    %v4747 = vsel %vm4744, %v4728, %v4742
    %v4748 = vsel %vm4744, %v4730, %v4743
    %4753 = vst [vmem:[#allocation6] sm:$0xff] %v4745
    %4754 = vst [vmem:[#allocation6 + $0x8] sm:$0xff] %v4746
    %4755 = vst [vmem:[#allocation6 + $0x10] sm:$0xff] %v4747
    %4756 = vst [vmem:[#allocation6 + $0x18] sm:$0xff] %v4748
    %v4757 = vld [vmem:[%s18] sm:$0x1]
    %v4759 = vperm.slane %v4757, 0
    %v4761 = vadd.f32 %v4759, 0.0
    %v4762 = vld [vmem:[#allocation6] ss:$4 sm:$0x3]
    %s4763 = scalar_lea.vmem [#allocation6], 8
    %v4764 = vld [vmem:[%s4763] ss:$4 sm:$0x3]
    %s4765 = scalar_lea.vmem [#allocation6], 16
    %v4766 = vld [vmem:[%s4765] ss:$4 sm:$0x3]
    %s4767 = scalar_lea.vmem [#allocation6], 24
    %v4768 = vld [vmem:[%s4767] ss:$4 sm:$0x3]
    %v4773 = vperm.slane %v4762, 0
    %v4774 = vperm.slane %v4762, 1
    %v4775 = vperm.slane %v4764, 0
    %v4776 = vperm.slane %v4764, 1
    %v4777 = vperm.slane %v4766, 0
    %v4778 = vperm.slane %v4766, 1
    %v4779 = vperm.slane %v4768, 0
    %v4780 = vperm.slane %v4768, 1
    %v4789 = vpack.c.bf16 %v4773, %v4773
    %v4790 = vpack.c.bf16 %v4774, %v4774
    %v4791 = vpack.c.bf16 %v4775, %v4775
    %v4792 = vpack.c.bf16 %v4776, %v4776
    %v4793 = vpack.c.bf16 %v4777, %v4777
    %v4794 = vpack.c.bf16 %v4778, %v4778
    %v4795 = vpack.c.bf16 %v4779, %v4779
    %v4796 = vpack.c.bf16 %v4780, %v4780
    %v4797 = vld [vmem:[#allocation12] sm:$0xf]
    %v4798 = vld [vmem:[#allocation12 + $0x4] sm:$0xf]
    %v4799 = vld [vmem:[#allocation12 + $0x8] sm:$0xf]
    %v4800 = vld [vmem:[#allocation12 + $0xc] sm:$0xf]
    %v4801 = vld [vmem:[#allocation12 + $0x10] sm:$0xf]
    %v4802 = vld [vmem:[#allocation12 + $0x14] sm:$0xf]
    %v4803 = vld [vmem:[#allocation12 + $0x18] sm:$0xf]
    %v4804 = vld [vmem:[#allocation12 + $0x1c] sm:$0xf]
    %v4805 = vld [vmem:[#allocation12 + $0x20] sm:$0xf]
    %v4806 = vld [vmem:[#allocation12 + $0x24] sm:$0xf]
    %v4807 = vld [vmem:[#allocation12 + $0x28] sm:$0xf]
    %v4808 = vld [vmem:[#allocation12 + $0x2c] sm:$0xf]
    %v4809 = vld [vmem:[#allocation12 + $0x30] sm:$0xf]
    %v4810 = vld [vmem:[#allocation12 + $0x34] sm:$0xf]
    %v4811 = vld [vmem:[#allocation12 + $0x38] sm:$0xf]
    %v4812 = vld [vmem:[#allocation12 + $0x3c] sm:$0xf]
    %v4813 = vld [vmem:[#allocation12 + $0x40] sm:$0xf]
    %v4814 = vld [vmem:[#allocation12 + $0x44] sm:$0xf]
    %v4815 = vld [vmem:[#allocation12 + $0x48] sm:$0xf]
    %v4816 = vld [vmem:[#allocation12 + $0x4c] sm:$0xf]
    %v4817 = vld [vmem:[#allocation12 + $0x50] sm:$0xf]
    %v4818 = vld [vmem:[#allocation12 + $0x54] sm:$0xf]
    %v4819 = vld [vmem:[#allocation12 + $0x58] sm:$0xf]
    %v4820 = vld [vmem:[#allocation12 + $0x5c] sm:$0xf]
    %v4821 = vld [vmem:[#allocation12 + $0x60] sm:$0xf]
    %v4822 = vld [vmem:[#allocation12 + $0x64] sm:$0xf]
    %v4823 = vld [vmem:[#allocation12 + $0x68] sm:$0xf]
    %v4824 = vld [vmem:[#allocation12 + $0x6c] sm:$0xf]
    %v4825 = vld [vmem:[#allocation12 + $0x70] sm:$0xf]
    %v4826 = vld [vmem:[#allocation12 + $0x74] sm:$0xf]
    %v4827 = vld [vmem:[#allocation12 + $0x78] sm:$0xf]
    %v4828 = vld [vmem:[#allocation12 + $0x7c] sm:$0xf]
    %v4837 = vunpack.c.l.b16 %v4789
    %v4838 = vunpack.c.l.b16 %v4790
    %v4839 = vunpack.c.l.b16 %v4791
    %v4840 = vunpack.c.l.b16 %v4792
    %v4841 = vunpack.c.l.b16 %v4793
    %v4842 = vunpack.c.l.b16 %v4794
    %v4843 = vunpack.c.l.b16 %v4795
    %v4844 = vunpack.c.l.b16 %v4796
    %v4845 = vrot.slane %v4839, 7
    %vm4846 = vcmask 1041409
    %v4847 = vsel %vm4846, %v4845, %v4837
    %v4848 = vrot.slane %v4841, 6
    %vm4849 = vcmask 1042434
    %v4850 = vsel %vm4849, %v4848, %v4847
    %v4851 = vrot.slane %v4843, 5
    %vm4852 = vcmask 1043459
    %v4853 = vsel %vm4852, %v4851, %v4850
    %v4854 = vrot.slane %v4840, 7
    %v4855 = vsel %vm4846, %v4854, %v4838
    %v4856 = vrot.slane %v4842, 6
    %v4857 = vsel %vm4849, %v4856, %v4855
    %v4858 = vrot.slane %v4844, 5
    %v4859 = vsel %vm4852, %v4858, %v4857
    %v4860 = vpack.c.b16 %v4853, %v4853
    %v4861 = vpack.c.b16 %v4859, %v4859
    %v4896 = vunpack.c.l.b16 %v4797
    %v4897 = vunpack.c.l.b16 %v4798
    %v4898 = vunpack.c.l.b16 %v4799
    %v4899 = vunpack.c.l.b16 %v4800
    %v4900 = vunpack.c.l.b16 %v4801
    %v4901 = vunpack.c.l.b16 %v4802
    %v4902 = vunpack.c.l.b16 %v4803
    %v4903 = vunpack.c.l.b16 %v4804
    %v4904 = vunpack.c.l.b16 %v4805
    %v4905 = vunpack.c.l.b16 %v4806
    %v4906 = vunpack.c.l.b16 %v4807
    %v4907 = vunpack.c.l.b16 %v4808
    %v4908 = vunpack.c.l.b16 %v4809
    %v4909 = vunpack.c.l.b16 %v4810
    %v4910 = vunpack.c.l.b16 %v4811
    %v4911 = vunpack.c.l.b16 %v4812
    %v4912 = vunpack.c.l.b16 %v4813
    %v4913 = vunpack.c.l.b16 %v4814
    %v4914 = vunpack.c.l.b16 %v4815
    %v4915 = vunpack.c.l.b16 %v4816
    %v4916 = vunpack.c.l.b16 %v4817
    %v4917 = vunpack.c.l.b16 %v4818
    %v4918 = vunpack.c.l.b16 %v4819
    %v4919 = vunpack.c.l.b16 %v4820
    %v4920 = vunpack.c.l.b16 %v4821
    %v4921 = vunpack.c.l.b16 %v4822
    %v4922 = vunpack.c.l.b16 %v4823
    %v4923 = vunpack.c.l.b16 %v4824
    %v4924 = vunpack.c.l.b16 %v4825
    %v4925 = vunpack.c.l.b16 %v4826
    %v4926 = vunpack.c.l.b16 %v4827
    %v4927 = vunpack.c.l.b16 %v4828
    %v4928 = vpack.c.b16 %v4897, %v4896
    %v4929 = vpack.c.b16 %v4899, %v4898
    %v4930 = vpack.c.b16 %v4901, %v4900
    %v4931 = vpack.c.b16 %v4903, %v4902
    %v4932 = vpack.c.b16 %v4905, %v4904
    %v4933 = vpack.c.b16 %v4907, %v4906
    %v4934 = vpack.c.b16 %v4909, %v4908
    %v4935 = vpack.c.b16 %v4911, %v4910
    %v4936 = vpack.c.b16 %v4913, %v4912
    %v4937 = vpack.c.b16 %v4915, %v4914
    %v4938 = vpack.c.b16 %v4917, %v4916
    %v4939 = vpack.c.b16 %v4919, %v4918
    %v4940 = vpack.c.b16 %v4921, %v4920
    %v4941 = vpack.c.b16 %v4923, %v4922
    %v4942 = vpack.c.b16 %v4925, %v4924
    %v4943 = vpack.c.b16 %v4927, %v4926
    %4960 = vmatpush.bf16.msra.mxu0 %v4935
    %4961 = vmatpush.bf16.msra.mxu0 %v4934
    %4962 = vmatpush.bf16.msra.mxu0 %v4933
    %4963 = vmatpush.bf16.msra.mxu0 %v4932
    %4964 = vmatpush.bf16.msra.mxu0 %v4931
    %4965 = vmatpush.bf16.msra.mxu0 %v4930
    %4966 = vmatpush.bf16.msra.mxu0 %v4929
    %4967 = vmatpush.bf16.msra.mxu0 %v4928
    %4968 = vmatmul.bf16.gmra.mxu0 %v4860
    %v4969 = vpop.f32.mrf.mxu0
    %v4970 = vadd.f32 0.0, %v4969
    %v4971 = vpop.f32.mrf.mxu0
    %4972 = vdwg.mxu0
    %4973 = vmatpush.bf16.msra.mxu0 %v4943
    %4974 = vmatpush.bf16.msra.mxu0 %v4942
    %4975 = vmatpush.bf16.msra.mxu0 %v4941
    %4976 = vmatpush.bf16.msra.mxu0 %v4940
    %4977 = vmatpush.bf16.msra.mxu0 %v4939
    %4978 = vmatpush.bf16.msra.mxu0 %v4938
    %4979 = vmatpush.bf16.msra.mxu0 %v4937
    %4980 = vmatpush.bf16.msra.mxu0 %v4936
    %4981 = vmatmul.bf16.gmra.mxu0 %v4861
    %v4982 = vpop.f32.mrf.mxu0
    %v4983 = vadd.f32 %v4970, %v4982
    %v4984 = vpop.f32.mrf.mxu0
    %4985 = vdwg.mxu0
    %v4986 = vadd.f32 %v4761, %v4983
    %s4987 = scalar_lea.vmem [#allocation6], 1
    %v4988 = vld [vmem:[%s4987] ss:$4 sm:$0x3]
    %s4989 = scalar_lea.vmem [#allocation6], 9
    %v4990 = vld [vmem:[%s4989] ss:$4 sm:$0x3]
    %s4991 = scalar_lea.vmem [#allocation6], 17
    %v4992 = vld [vmem:[%s4991] ss:$4 sm:$0x3]
    %s4993 = scalar_lea.vmem [#allocation6], 25
    %v4994 = vld [vmem:[%s4993] ss:$4 sm:$0x3]
    %v4999 = vperm.slane %v4988, 0
    %v5000 = vperm.slane %v4988, 1
    %v5001 = vperm.slane %v4990, 0
    %v5002 = vperm.slane %v4990, 1
    %v5003 = vperm.slane %v4992, 0
    %v5004 = vperm.slane %v4992, 1
    %v5005 = vperm.slane %v4994, 0
    %v5006 = vperm.slane %v4994, 1
    %v5015 = vpack.c.bf16 %v4999, %v4999
    %v5016 = vpack.c.bf16 %v5000, %v5000
    %v5017 = vpack.c.bf16 %v5001, %v5001
    %v5018 = vpack.c.bf16 %v5002, %v5002
    %v5019 = vpack.c.bf16 %v5003, %v5003
    %v5020 = vpack.c.bf16 %v5004, %v5004
    %v5021 = vpack.c.bf16 %v5005, %v5005
    %v5022 = vpack.c.bf16 %v5006, %v5006
    %s5023 = scalar_lea.vmem [#allocation12], 128
    %v5024 = vld [vmem:[%s5023] sm:$0xf]
    %v5025 = vld [vmem:[%s5023 + $0x4] sm:$0xf]
    %v5026 = vld [vmem:[%s5023 + $0x8] sm:$0xf]
    %v5027 = vld [vmem:[%s5023 + $0xc] sm:$0xf]
    %v5028 = vld [vmem:[%s5023 + $0x10] sm:$0xf]
    %v5029 = vld [vmem:[%s5023 + $0x14] sm:$0xf]
    %v5030 = vld [vmem:[%s5023 + $0x18] sm:$0xf]
    %v5031 = vld [vmem:[%s5023 + $0x1c] sm:$0xf]
    %v5032 = vld [vmem:[%s5023 + $0x20] sm:$0xf]
    %v5033 = vld [vmem:[%s5023 + $0x24] sm:$0xf]
    %v5034 = vld [vmem:[%s5023 + $0x28] sm:$0xf]
    %v5035 = vld [vmem:[%s5023 + $0x2c] sm:$0xf]
    %v5036 = vld [vmem:[%s5023 + $0x30] sm:$0xf]
    %v5037 = vld [vmem:[%s5023 + $0x34] sm:$0xf]
    %v5038 = vld [vmem:[%s5023 + $0x38] sm:$0xf]
    %v5039 = vld [vmem:[%s5023 + $0x3c] sm:$0xf]
    %v5040 = vld [vmem:[%s5023 + $0x40] sm:$0xf]
    %v5041 = vld [vmem:[%s5023 + $0x44] sm:$0xf]
    %v5042 = vld [vmem:[%s5023 + $0x48] sm:$0xf]
    %v5043 = vld [vmem:[%s5023 + $0x4c] sm:$0xf]
    %v5044 = vld [vmem:[%s5023 + $0x50] sm:$0xf]
    %v5045 = vld [vmem:[%s5023 + $0x54] sm:$0xf]
    %v5046 = vld [vmem:[%s5023 + $0x58] sm:$0xf]
    %v5047 = vld [vmem:[%s5023 + $0x5c] sm:$0xf]
    %v5048 = vld [vmem:[%s5023 + $0x60] sm:$0xf]
    %v5049 = vld [vmem:[%s5023 + $0x64] sm:$0xf]
    %v5050 = vld [vmem:[%s5023 + $0x68] sm:$0xf]
    %v5051 = vld [vmem:[%s5023 + $0x6c] sm:$0xf]
    %v5052 = vld [vmem:[%s5023 + $0x70] sm:$0xf]
    %v5053 = vld [vmem:[%s5023 + $0x74] sm:$0xf]
    %v5054 = vld [vmem:[%s5023 + $0x78] sm:$0xf]
    %v5055 = vld [vmem:[%s5023 + $0x7c] sm:$0xf]
    %v5064 = vunpack.c.l.b16 %v5015
    %v5065 = vunpack.c.l.b16 %v5016
    %v5066 = vunpack.c.l.b16 %v5017
    %v5067 = vunpack.c.l.b16 %v5018
    %v5068 = vunpack.c.l.b16 %v5019
    %v5069 = vunpack.c.l.b16 %v5020
    %v5070 = vunpack.c.l.b16 %v5021
    %v5071 = vunpack.c.l.b16 %v5022
    %v5072 = vrot.slane %v5066, 7
    %v5073 = vsel %vm4846, %v5072, %v5064
    %v5074 = vrot.slane %v5068, 6
    %v5075 = vsel %vm4849, %v5074, %v5073
    %v5076 = vrot.slane %v5070, 5
    %v5077 = vsel %vm4852, %v5076, %v5075
    %v5078 = vrot.slane %v5067, 7
    %v5079 = vsel %vm4846, %v5078, %v5065
    %v5080 = vrot.slane %v5069, 6
    %v5081 = vsel %vm4849, %v5080, %v5079
    %v5082 = vrot.slane %v5071, 5
    %v5083 = vsel %vm4852, %v5082, %v5081
    %v5084 = vpack.c.b16 %v5077, %v5077
    %v5085 = vpack.c.b16 %v5083, %v5083
    %v5120 = vunpack.c.l.b16 %v5024
    %v5121 = vunpack.c.l.b16 %v5025
    %v5122 = vunpack.c.l.b16 %v5026
    %v5123 = vunpack.c.l.b16 %v5027
    %v5124 = vunpack.c.l.b16 %v5028
    %v5125 = vunpack.c.l.b16 %v5029
    %v5126 = vunpack.c.l.b16 %v5030
    %v5127 = vunpack.c.l.b16 %v5031
    %v5128 = vunpack.c.l.b16 %v5032
    %v5129 = vunpack.c.l.b16 %v5033
    %v5130 = vunpack.c.l.b16 %v5034
    %v5131 = vunpack.c.l.b16 %v5035
    %v5132 = vunpack.c.l.b16 %v5036
    %v5133 = vunpack.c.l.b16 %v5037
    %v5134 = vunpack.c.l.b16 %v5038
    %v5135 = vunpack.c.l.b16 %v5039
    %v5136 = vunpack.c.l.b16 %v5040
    %v5137 = vunpack.c.l.b16 %v5041
    %v5138 = vunpack.c.l.b16 %v5042
    %v5139 = vunpack.c.l.b16 %v5043
    %v5140 = vunpack.c.l.b16 %v5044
    %v5141 = vunpack.c.l.b16 %v5045
    %v5142 = vunpack.c.l.b16 %v5046
    %v5143 = vunpack.c.l.b16 %v5047
    %v5144 = vunpack.c.l.b16 %v5048
    %v5145 = vunpack.c.l.b16 %v5049
    %v5146 = vunpack.c.l.b16 %v5050
    %v5147 = vunpack.c.l.b16 %v5051
    %v5148 = vunpack.c.l.b16 %v5052
    %v5149 = vunpack.c.l.b16 %v5053
    %v5150 = vunpack.c.l.b16 %v5054
    %v5151 = vunpack.c.l.b16 %v5055
    %v5152 = vpack.c.b16 %v5121, %v5120
    %v5153 = vpack.c.b16 %v5123, %v5122
    %v5154 = vpack.c.b16 %v5125, %v5124
    %v5155 = vpack.c.b16 %v5127, %v5126
    %v5156 = vpack.c.b16 %v5129, %v5128
    %v5157 = vpack.c.b16 %v5131, %v5130
    %v5158 = vpack.c.b16 %v5133, %v5132
    %v5159 = vpack.c.b16 %v5135, %v5134
    %v5160 = vpack.c.b16 %v5137, %v5136
    %v5161 = vpack.c.b16 %v5139, %v5138
    %v5162 = vpack.c.b16 %v5141, %v5140
    %v5163 = vpack.c.b16 %v5143, %v5142
    %v5164 = vpack.c.b16 %v5145, %v5144
    %v5165 = vpack.c.b16 %v5147, %v5146
    %v5166 = vpack.c.b16 %v5149, %v5148
    %v5167 = vpack.c.b16 %v5151, %v5150
    %5184 = vmatpush.bf16.msra.mxu0 %v5159
    %5185 = vmatpush.bf16.msra.mxu0 %v5158
    %5186 = vmatpush.bf16.msra.mxu0 %v5157
    %5187 = vmatpush.bf16.msra.mxu0 %v5156
    %5188 = vmatpush.bf16.msra.mxu0 %v5155
    %5189 = vmatpush.bf16.msra.mxu0 %v5154
    %5190 = vmatpush.bf16.msra.mxu0 %v5153
    %5191 = vmatpush.bf16.msra.mxu0 %v5152
    %5192 = vmatmul.bf16.gmra.mxu0 %v5084
    %v5193 = vpop.f32.mrf.mxu0
    %v5194 = vadd.f32 0.0, %v5193
    %v5195 = vpop.f32.mrf.mxu0
    %5196 = vdwg.mxu0
    %5197 = vmatpush.bf16.msra.mxu0 %v5167
    %5198 = vmatpush.bf16.msra.mxu0 %v5166
    %5199 = vmatpush.bf16.msra.mxu0 %v5165
    %5200 = vmatpush.bf16.msra.mxu0 %v5164
    %5201 = vmatpush.bf16.msra.mxu0 %v5163
    %5202 = vmatpush.bf16.msra.mxu0 %v5162
    %5203 = vmatpush.bf16.msra.mxu0 %v5161
    %5204 = vmatpush.bf16.msra.mxu0 %v5160
    %5205 = vmatmul.bf16.gmra.mxu0 %v5085
    %v5206 = vpop.f32.mrf.mxu0
    %v5207 = vadd.f32 %v5194, %v5206
    %v5208 = vpop.f32.mrf.mxu0
    %5209 = vdwg.mxu0
    %v5210 = vadd.f32 %v4986, %v5207
    %s5211 = scalar_lea.vmem [#allocation6], 2
    %v5212 = vld [vmem:[%s5211] ss:$4 sm:$0x3]
    %s5213 = scalar_lea.vmem [#allocation6], 10
    %v5214 = vld [vmem:[%s5213] ss:$4 sm:$0x3]
    %s5215 = scalar_lea.vmem [#allocation6], 18
    %v5216 = vld [vmem:[%s5215] ss:$4 sm:$0x3]
    %s5217 = scalar_lea.vmem [#allocation6], 26
    %v5218 = vld [vmem:[%s5217] ss:$4 sm:$0x3]
    %v5223 = vperm.slane %v5212, 0
    %v5224 = vperm.slane %v5212, 1
    %v5225 = vperm.slane %v5214, 0
    %v5226 = vperm.slane %v5214, 1
    %v5227 = vperm.slane %v5216, 0
    %v5228 = vperm.slane %v5216, 1
    %v5229 = vperm.slane %v5218, 0
    %v5230 = vperm.slane %v5218, 1
    %v5239 = vpack.c.bf16 %v5223, %v5223
    %v5240 = vpack.c.bf16 %v5224, %v5224
    %v5241 = vpack.c.bf16 %v5225, %v5225
    %v5242 = vpack.c.bf16 %v5226, %v5226
    %v5243 = vpack.c.bf16 %v5227, %v5227
    %v5244 = vpack.c.bf16 %v5228, %v5228
    %v5245 = vpack.c.bf16 %v5229, %v5229
    %v5246 = vpack.c.bf16 %v5230, %v5230
    %s5247 = scalar_lea.vmem [#allocation12], 256
    %v5248 = vld [vmem:[%s5247] sm:$0xf]
    %v5249 = vld [vmem:[%s5247 + $0x4] sm:$0xf]
    %v5250 = vld [vmem:[%s5247 + $0x8] sm:$0xf]
    %v5251 = vld [vmem:[%s5247 + $0xc] sm:$0xf]
    %v5252 = vld [vmem:[%s5247 + $0x10] sm:$0xf]
    %v5253 = vld [vmem:[%s5247 + $0x14] sm:$0xf]
    %v5254 = vld [vmem:[%s5247 + $0x18] sm:$0xf]
    %v5255 = vld [vmem:[%s5247 + $0x1c] sm:$0xf]
    %v5256 = vld [vmem:[%s5247 + $0x20] sm:$0xf]
    %v5257 = vld [vmem:[%s5247 + $0x24] sm:$0xf]
    %v5258 = vld [vmem:[%s5247 + $0x28] sm:$0xf]
    %v5259 = vld [vmem:[%s5247 + $0x2c] sm:$0xf]
    %v5260 = vld [vmem:[%s5247 + $0x30] sm:$0xf]
    %v5261 = vld [vmem:[%s5247 + $0x34] sm:$0xf]
    %v5262 = vld [vmem:[%s5247 + $0x38] sm:$0xf]
    %v5263 = vld [vmem:[%s5247 + $0x3c] sm:$0xf]
    %v5264 = vld [vmem:[%s5247 + $0x40] sm:$0xf]
    %v5265 = vld [vmem:[%s5247 + $0x44] sm:$0xf]
    %v5266 = vld [vmem:[%s5247 + $0x48] sm:$0xf]
    %v5267 = vld [vmem:[%s5247 + $0x4c] sm:$0xf]
    %v5268 = vld [vmem:[%s5247 + $0x50] sm:$0xf]
    %v5269 = vld [vmem:[%s5247 + $0x54] sm:$0xf]
    %v5270 = vld [vmem:[%s5247 + $0x58] sm:$0xf]
    %v5271 = vld [vmem:[%s5247 + $0x5c] sm:$0xf]
    %v5272 = vld [vmem:[%s5247 + $0x60] sm:$0xf]
    %v5273 = vld [vmem:[%s5247 + $0x64] sm:$0xf]
    %v5274 = vld [vmem:[%s5247 + $0x68] sm:$0xf]
    %v5275 = vld [vmem:[%s5247 + $0x6c] sm:$0xf]
    %v5276 = vld [vmem:[%s5247 + $0x70] sm:$0xf]
    %v5277 = vld [vmem:[%s5247 + $0x74] sm:$0xf]
    %v5278 = vld [vmem:[%s5247 + $0x78] sm:$0xf]
    %v5279 = vld [vmem:[%s5247 + $0x7c] sm:$0xf]
    %v5288 = vunpack.c.l.b16 %v5239
    %v5289 = vunpack.c.l.b16 %v5240
    %v5290 = vunpack.c.l.b16 %v5241
    %v5291 = vunpack.c.l.b16 %v5242
    %v5292 = vunpack.c.l.b16 %v5243
    %v5293 = vunpack.c.l.b16 %v5244
    %v5294 = vunpack.c.l.b16 %v5245
    %v5295 = vunpack.c.l.b16 %v5246
    %v5296 = vrot.slane %v5290, 7
    %v5297 = vsel %vm4846, %v5296, %v5288
    %v5298 = vrot.slane %v5292, 6
    %v5299 = vsel %vm4849, %v5298, %v5297
    %v5300 = vrot.slane %v5294, 5
    %v5301 = vsel %vm4852, %v5300, %v5299
    %v5302 = vrot.slane %v5291, 7
    %v5303 = vsel %vm4846, %v5302, %v5289
    %v5304 = vrot.slane %v5293, 6
    %v5305 = vsel %vm4849, %v5304, %v5303
    %v5306 = vrot.slane %v5295, 5
    %v5307 = vsel %vm4852, %v5306, %v5305
    %v5308 = vpack.c.b16 %v5301, %v5301
    %v5309 = vpack.c.b16 %v5307, %v5307
    %v5344 = vunpack.c.l.b16 %v5248
    %v5345 = vunpack.c.l.b16 %v5249
    %v5346 = vunpack.c.l.b16 %v5250
    %v5347 = vunpack.c.l.b16 %v5251
    %v5348 = vunpack.c.l.b16 %v5252
    %v5349 = vunpack.c.l.b16 %v5253
    %v5350 = vunpack.c.l.b16 %v5254
    %v5351 = vunpack.c.l.b16 %v5255
    %v5352 = vunpack.c.l.b16 %v5256
    %v5353 = vunpack.c.l.b16 %v5257
    %v5354 = vunpack.c.l.b16 %v5258
    %v5355 = vunpack.c.l.b16 %v5259
    %v5356 = vunpack.c.l.b16 %v5260
    %v5357 = vunpack.c.l.b16 %v5261
    %v5358 = vunpack.c.l.b16 %v5262
    %v5359 = vunpack.c.l.b16 %v5263
    %v5360 = vunpack.c.l.b16 %v5264
    %v5361 = vunpack.c.l.b16 %v5265
    %v5362 = vunpack.c.l.b16 %v5266
    %v5363 = vunpack.c.l.b16 %v5267
    %v5364 = vunpack.c.l.b16 %v5268
    %v5365 = vunpack.c.l.b16 %v5269
    %v5366 = vunpack.c.l.b16 %v5270
    %v5367 = vunpack.c.l.b16 %v5271
    %v5368 = vunpack.c.l.b16 %v5272
    %v5369 = vunpack.c.l.b16 %v5273
    %v5370 = vunpack.c.l.b16 %v5274
    %v5371 = vunpack.c.l.b16 %v5275
    %v5372 = vunpack.c.l.b16 %v5276
    %v5373 = vunpack.c.l.b16 %v5277
    %v5374 = vunpack.c.l.b16 %v5278
    %v5375 = vunpack.c.l.b16 %v5279
    %v5376 = vpack.c.b16 %v5345, %v5344
    %v5377 = vpack.c.b16 %v5347, %v5346
    %v5378 = vpack.c.b16 %v5349, %v5348
    %v5379 = vpack.c.b16 %v5351, %v5350
    %v5380 = vpack.c.b16 %v5353, %v5352
    %v5381 = vpack.c.b16 %v5355, %v5354
    %v5382 = vpack.c.b16 %v5357, %v5356
    %v5383 = vpack.c.b16 %v5359, %v5358
    %v5384 = vpack.c.b16 %v5361, %v5360
    %v5385 = vpack.c.b16 %v5363, %v5362
    %v5386 = vpack.c.b16 %v5365, %v5364
    %v5387 = vpack.c.b16 %v5367, %v5366
    %v5388 = vpack.c.b16 %v5369, %v5368
    %v5389 = vpack.c.b16 %v5371, %v5370
    %v5390 = vpack.c.b16 %v5373, %v5372
    %v5391 = vpack.c.b16 %v5375, %v5374
    %5408 = vmatpush.bf16.msra.mxu0 %v5383
    %5409 = vmatpush.bf16.msra.mxu0 %v5382
    %5410 = vmatpush.bf16.msra.mxu0 %v5381
    %5411 = vmatpush.bf16.msra.mxu0 %v5380
    %5412 = vmatpush.bf16.msra.mxu0 %v5379
    %5413 = vmatpush.bf16.msra.mxu0 %v5378
    %5414 = vmatpush.bf16.msra.mxu0 %v5377
    %5415 = vmatpush.bf16.msra.mxu0 %v5376
    %5416 = vmatmul.bf16.gmra.mxu0 %v5308
    %v5417 = vpop.f32.mrf.mxu0
    %v5418 = vadd.f32 0.0, %v5417
    %v5419 = vpop.f32.mrf.mxu0
    %5420 = vdwg.mxu0
    %5421 = vmatpush.bf16.msra.mxu0 %v5391
    %5422 = vmatpush.bf16.msra.mxu0 %v5390
    %5423 = vmatpush.bf16.msra.mxu0 %v5389
    %5424 = vmatpush.bf16.msra.mxu0 %v5388
    %5425 = vmatpush.bf16.msra.mxu0 %v5387
    %5426 = vmatpush.bf16.msra.mxu0 %v5386
    %5427 = vmatpush.bf16.msra.mxu0 %v5385
    %5428 = vmatpush.bf16.msra.mxu0 %v5384
    %5429 = vmatmul.bf16.gmra.mxu0 %v5309
    %v5430 = vpop.f32.mrf.mxu0
    %v5431 = vadd.f32 %v5418, %v5430
    %v5432 = vpop.f32.mrf.mxu0
    %5433 = vdwg.mxu0
    %v5434 = vadd.f32 %v5210, %v5431
    %s5435 = scalar_lea.vmem [#allocation6], 3
    %v5436 = vld [vmem:[%s5435] ss:$4 sm:$0x3]
    %s5437 = scalar_lea.vmem [#allocation6], 11
    %v5438 = vld [vmem:[%s5437] ss:$4 sm:$0x3]
    %s5439 = scalar_lea.vmem [#allocation6], 19
    %v5440 = vld [vmem:[%s5439] ss:$4 sm:$0x3]
    %s5441 = scalar_lea.vmem [#allocation6], 27
    %v5442 = vld [vmem:[%s5441] ss:$4 sm:$0x3]
    %v5447 = vperm.slane %v5436, 0
    %v5448 = vperm.slane %v5436, 1
    %v5449 = vperm.slane %v5438, 0
    %v5450 = vperm.slane %v5438, 1
    %v5451 = vperm.slane %v5440, 0
    %v5452 = vperm.slane %v5440, 1
    %v5453 = vperm.slane %v5442, 0
    %v5454 = vperm.slane %v5442, 1
    %v5463 = vpack.c.bf16 %v5447, %v5447
    %v5464 = vpack.c.bf16 %v5448, %v5448
    %v5465 = vpack.c.bf16 %v5449, %v5449
    %v5466 = vpack.c.bf16 %v5450, %v5450
    %v5467 = vpack.c.bf16 %v5451, %v5451
    %v5468 = vpack.c.bf16 %v5452, %v5452
    %v5469 = vpack.c.bf16 %v5453, %v5453
    %v5470 = vpack.c.bf16 %v5454, %v5454
    %s5471 = scalar_lea.vmem [#allocation12], 384
    %v5472 = vld [vmem:[%s5471] sm:$0xf]
    %v5473 = vld [vmem:[%s5471 + $0x4] sm:$0xf]
    %v5474 = vld [vmem:[%s5471 + $0x8] sm:$0xf]
    %v5475 = vld [vmem:[%s5471 + $0xc] sm:$0xf]
    %v5476 = vld [vmem:[%s5471 + $0x10] sm:$0xf]
    %v5477 = vld [vmem:[%s5471 + $0x14] sm:$0xf]
    %v5478 = vld [vmem:[%s5471 + $0x18] sm:$0xf]
    %v5479 = vld [vmem:[%s5471 + $0x1c] sm:$0xf]
    %v5480 = vld [vmem:[%s5471 + $0x20] sm:$0xf]
    %v5481 = vld [vmem:[%s5471 + $0x24] sm:$0xf]
    %v5482 = vld [vmem:[%s5471 + $0x28] sm:$0xf]
    %v5483 = vld [vmem:[%s5471 + $0x2c] sm:$0xf]
    %v5484 = vld [vmem:[%s5471 + $0x30] sm:$0xf]
    %v5485 = vld [vmem:[%s5471 + $0x34] sm:$0xf]
    %v5486 = vld [vmem:[%s5471 + $0x38] sm:$0xf]
    %v5487 = vld [vmem:[%s5471 + $0x3c] sm:$0xf]
    %v5488 = vld [vmem:[%s5471 + $0x40] sm:$0xf]
    %v5489 = vld [vmem:[%s5471 + $0x44] sm:$0xf]
    %v5490 = vld [vmem:[%s5471 + $0x48] sm:$0xf]
    %v5491 = vld [vmem:[%s5471 + $0x4c] sm:$0xf]
    %v5492 = vld [vmem:[%s5471 + $0x50] sm:$0xf]
    %v5493 = vld [vmem:[%s5471 + $0x54] sm:$0xf]
    %v5494 = vld [vmem:[%s5471 + $0x58] sm:$0xf]
    %v5495 = vld [vmem:[%s5471 + $0x5c] sm:$0xf]
    %v5496 = vld [vmem:[%s5471 + $0x60] sm:$0xf]
    %v5497 = vld [vmem:[%s5471 + $0x64] sm:$0xf]
    %v5498 = vld [vmem:[%s5471 + $0x68] sm:$0xf]
    %v5499 = vld [vmem:[%s5471 + $0x6c] sm:$0xf]
    %v5500 = vld [vmem:[%s5471 + $0x70] sm:$0xf]
    %v5501 = vld [vmem:[%s5471 + $0x74] sm:$0xf]
    %v5502 = vld [vmem:[%s5471 + $0x78] sm:$0xf]
    %v5503 = vld [vmem:[%s5471 + $0x7c] sm:$0xf]
    %v5512 = vunpack.c.l.b16 %v5463
    %v5513 = vunpack.c.l.b16 %v5464
    %v5514 = vunpack.c.l.b16 %v5465
    %v5515 = vunpack.c.l.b16 %v5466
    %v5516 = vunpack.c.l.b16 %v5467
    %v5517 = vunpack.c.l.b16 %v5468
    %v5518 = vunpack.c.l.b16 %v5469
    %v5519 = vunpack.c.l.b16 %v5470
    %v5520 = vrot.slane %v5514, 7
    %v5521 = vsel %vm4846, %v5520, %v5512
    %v5522 = vrot.slane %v5516, 6
    %v5523 = vsel %vm4849, %v5522, %v5521
    %v5524 = vrot.slane %v5518, 5
    %v5525 = vsel %vm4852, %v5524, %v5523
    %v5526 = vrot.slane %v5515, 7
    %v5527 = vsel %vm4846, %v5526, %v5513
    %v5528 = vrot.slane %v5517, 6
    %v5529 = vsel %vm4849, %v5528, %v5527
    %v5530 = vrot.slane %v5519, 5
    %v5531 = vsel %vm4852, %v5530, %v5529
    %v5532 = vpack.c.b16 %v5525, %v5525
    %v5533 = vpack.c.b16 %v5531, %v5531
    %v5568 = vunpack.c.l.b16 %v5472
    %v5569 = vunpack.c.l.b16 %v5473
    %v5570 = vunpack.c.l.b16 %v5474
    %v5571 = vunpack.c.l.b16 %v5475
    %v5572 = vunpack.c.l.b16 %v5476
    %v5573 = vunpack.c.l.b16 %v5477
    %v5574 = vunpack.c.l.b16 %v5478
    %v5575 = vunpack.c.l.b16 %v5479
    %v5576 = vunpack.c.l.b16 %v5480
    %v5577 = vunpack.c.l.b16 %v5481
    %v5578 = vunpack.c.l.b16 %v5482
    %v5579 = vunpack.c.l.b16 %v5483
    %v5580 = vunpack.c.l.b16 %v5484
    %v5581 = vunpack.c.l.b16 %v5485
    %v5582 = vunpack.c.l.b16 %v5486
    %v5583 = vunpack.c.l.b16 %v5487
    %v5584 = vunpack.c.l.b16 %v5488
    %v5585 = vunpack.c.l.b16 %v5489
    %v5586 = vunpack.c.l.b16 %v5490
    %v5587 = vunpack.c.l.b16 %v5491
    %v5588 = vunpack.c.l.b16 %v5492
    %v5589 = vunpack.c.l.b16 %v5493
    %v5590 = vunpack.c.l.b16 %v5494
    %v5591 = vunpack.c.l.b16 %v5495
    %v5592 = vunpack.c.l.b16 %v5496
    %v5593 = vunpack.c.l.b16 %v5497
    %v5594 = vunpack.c.l.b16 %v5498
    %v5595 = vunpack.c.l.b16 %v5499
    %v5596 = vunpack.c.l.b16 %v5500
    %v5597 = vunpack.c.l.b16 %v5501
    %v5598 = vunpack.c.l.b16 %v5502
    %v5599 = vunpack.c.l.b16 %v5503
    %v5600 = vpack.c.b16 %v5569, %v5568
    %v5601 = vpack.c.b16 %v5571, %v5570
    %v5602 = vpack.c.b16 %v5573, %v5572
    %v5603 = vpack.c.b16 %v5575, %v5574
    %v5604 = vpack.c.b16 %v5577, %v5576
    %v5605 = vpack.c.b16 %v5579, %v5578
    %v5606 = vpack.c.b16 %v5581, %v5580
    %v5607 = vpack.c.b16 %v5583, %v5582
    %v5608 = vpack.c.b16 %v5585, %v5584
    %v5609 = vpack.c.b16 %v5587, %v5586
    %v5610 = vpack.c.b16 %v5589, %v5588
    %v5611 = vpack.c.b16 %v5591, %v5590
    %v5612 = vpack.c.b16 %v5593, %v5592
    %v5613 = vpack.c.b16 %v5595, %v5594
    %v5614 = vpack.c.b16 %v5597, %v5596
    %v5615 = vpack.c.b16 %v5599, %v5598
    %5632 = vmatpush.bf16.msra.mxu0 %v5607
    %5633 = vmatpush.bf16.msra.mxu0 %v5606
    %5634 = vmatpush.bf16.msra.mxu0 %v5605
    %5635 = vmatpush.bf16.msra.mxu0 %v5604
    %5636 = vmatpush.bf16.msra.mxu0 %v5603
    %5637 = vmatpush.bf16.msra.mxu0 %v5602
    %5638 = vmatpush.bf16.msra.mxu0 %v5601
    %5639 = vmatpush.bf16.msra.mxu0 %v5600
    %5640 = vmatmul.bf16.gmra.mxu0 %v5532
    %v5641 = vpop.f32.mrf.mxu0
    %v5642 = vadd.f32 0.0, %v5641
    %v5643 = vpop.f32.mrf.mxu0
    %5644 = vdwg.mxu0
    %5645 = vmatpush.bf16.msra.mxu0 %v5615
    %5646 = vmatpush.bf16.msra.mxu0 %v5614
    %5647 = vmatpush.bf16.msra.mxu0 %v5613
    %5648 = vmatpush.bf16.msra.mxu0 %v5612
    %5649 = vmatpush.bf16.msra.mxu0 %v5611
    %5650 = vmatpush.bf16.msra.mxu0 %v5610
    %5651 = vmatpush.bf16.msra.mxu0 %v5609
    %5652 = vmatpush.bf16.msra.mxu0 %v5608
    %5653 = vmatmul.bf16.gmra.mxu0 %v5533
    %v5654 = vpop.f32.mrf.mxu0
    %v5655 = vadd.f32 %v5642, %v5654
    %v5656 = vpop.f32.mrf.mxu0
    %5657 = vdwg.mxu0
    %v5658 = vadd.f32 %v5434, %v5655
    %5659 = vst [vmem:[#allocation13] sm:$0xf] %v5658
    // Predicated region
    $region90: #{tpu_custom_call.1} parent=1 // pred_check
      _
    $region91: #{tpu_custom_call.1} parent=1 // pred_check_branch
      %5661 = sbr.rel (0) target = $region93
    $region92: #{tpu_custom_call.1} parent=1 // pred_region
      %5663 = vsyncadd [#allocation9], 0
      %s5665 = sshll.u32 [#allocation13], 4
      %s5666 = int_to_ptr.vmem [resolvable:$true] %s5665
      %s5667 = sshll.u32 %s19, 4
      %s5668 = int_to_ptr.hbm [resolvable:$true] %s5667
      %5670 = dma.vmem_to_hbm [thread:$0]  %s5666, 64, %s5668, [#allocation9]
    $region93: #{tpu_custom_call.1} parent=1 // pred_fallthru
      _
    // Predicated region
    $region94: #{tpu_custom_call.1} parent=1 // pred_check
      _
    $region95: #{tpu_custom_call.1} parent=1 // pred_check_branch
      %5672 = sbr.rel (0) target = $region97
    $region96: #{tpu_custom_call.1} parent=1 // pred_region
      %5674 = dma.done [#allocation9], 64
    $region97: #{tpu_custom_call.1} parent=1 // pred_fallthru
      _
    %5675 = vsyncpa [#allocation8], 1
    %5676 = vsyncpa [#allocation11], 1
    %5677 = vsyncpa [#allocation9], 1

</llo_original>
